<compile_context>
chip_gen: v7x
topology: tpu7x:2x2x1
jax: 0.10.0
libtpu: 0.0.40
codegen_flags: <defaults>
</compile_context>

<pallas_src>
import functools

import jax
import jax.numpy as jnp
from jax import lax
from jax.experimental import pallas as pl
from jax.experimental.pallas import tpu as pltpu

TAKE_LOG_OF_INPUT = True


# ---------------------------------------------------------------------------
# Fused Pallas kernel: one grid step == one batch element's full forward pass
# ---------------------------------------------------------------------------
def _dap_fused_kernel(n_layers, lens_ref, txt_ref, spk_ref, xin_ref,
                      bott_w_ref, bott_b_ref, *rest):
    """Per-batch-element DAP forward.

    Blocks / refs:
      lens_ref : (B,) int32 in SMEM (scalar prefetch)
      txt_ref  : (1, T, in_dim)      channels-last text encoding
      spk_ref  : (1, 1, n_spk)       speaker embedding
      xin_ref  : (1, out_dim, T)     attribute to normalize (NCL)
      bott_w   : (3*in_dim, reduced) im2col-flattened conv weight
      bott_b   : (1, reduced)
      rest     : conv_w[n_layers] (3*Cin, C), conv_b[n_layers] (1, C),
                 wih (C, 8H)  [fwd | rev]  gate order (i, f, o, g) per dir,
                 whh (H, 8H), bias (1, 8H),
                 dense_w (2H, out_dim), dense_b (1, out_dim),
                 xhat_ref (1, T, out_dim), xnorm_ref (1, out_dim, T),
                 xp_sc VMEM (T, 8H), out_sc VMEM (T, 2H).
    """
    conv_w_refs = rest[:n_layers]
    conv_b_refs = rest[n_layers:2 * n_layers]
    (wih_ref, whh_ref, bias_ref, dense_w_ref, dense_b_ref,
     xhat_ref, xnorm_ref, xp_sc, out_sc) = rest[2 * n_layers:]

    b = pl.program_id(0)
    L = lens_ref[b]                                   # valid length (scalar, SMEM)
    x = txt_ref[0]                                    # (T, in_dim)
    T = x.shape[0]
    H = whh_ref.shape[0]

    # AttributeProcessing.normalize: log(x + 1)
    xnorm_ref[0] = jnp.log(xin_ref[0] + 1.0)

    def conv3_relu(inp, w_ref, b_ref, mask):
        """Same-padded Conv1d(k=3) + bias + ReLU as one im2col matmul."""
        Tt, cin = inp.shape
        if mask is not None:
            inp = inp * mask
        zrow = jnp.zeros((1, cin), jnp.float32)
        xpad = jnp.concatenate([zrow, inp, zrow], axis=0)           # (T+2, Cin)
        x3 = jnp.concatenate(
            [xpad[0:Tt], xpad[1:Tt + 1], xpad[2:Tt + 2]], axis=-1)  # (T, 3Cin)
        y = jnp.dot(x3, w_ref[...], preferred_element_type=jnp.float32)
        y = jnp.maximum(y + b_ref[...], 0.0)
        if mask is not None:
            y = y * mask
        return y

    # BottleneckLayerLayer (no length masking) + ReLU
    h0 = conv3_relu(x, bott_w_ref, bott_b_ref, None)                # (T, reduced)

    # speaker embedding broadcast over time, concatenated on channels (VMEM)
    n_spk = spk_ref.shape[-1]
    spk = jnp.broadcast_to(spk_ref[0], (T, n_spk))                  # (T, n_spk)
    ctx = jnp.concatenate([h0, spk], axis=-1)                       # (T, C0)

    # time mask from lens
    t_iota = lax.broadcasted_iota(jnp.int32, (T, 1), 0)
    mask = (t_iota < L).astype(jnp.float32)                         # (T, 1)

    # ConvLSTMLinear conv stack (dropout == identity at inference)
    for w_ref, b_ref in zip(conv_w_refs, conv_b_refs):
        ctx = conv3_relu(ctx, w_ref, b_ref, mask)                   # (T, C)

    # ------------------ fused bidirectional LSTM ------------------
    # One input projection for BOTH directions (cols [0:4H]=fwd, [4H:8H]=rev),
    # gate order (i, f, o, g) per direction; biases folded in.
    xp_sc[...] = jnp.dot(ctx, wih_ref[...],
                         preferred_element_type=jnp.float32) + bias_ref[...]

    whh = whh_ref[...]                                              # (H, 8H)
    is_fwd = lax.broadcasted_iota(jnp.int32, (2, 1), 0) == 0        # row0 = fwd

    def step(i, carry):
        h_st, c_st = carry                                          # (2,H), (2,H)
        t_f = i
        t_r = T - 1 - i

        xp_f = xp_sc[pl.ds(t_f, 1), pl.ds(0, 4 * H)]                # (1, 4H)
        xp_r = xp_sc[pl.ds(t_r, 1), pl.ds(4 * H, 4 * H)]            # (1, 4H)
        xp_t = jnp.concatenate([xp_f, xp_r], axis=0)                # (2, 4H)

        gate_all = jnp.dot(h_st, whh,
                           preferred_element_type=jnp.float32)      # (2, 8H)
        rec = jnp.where(is_fwd, gate_all[:, 0:4 * H], gate_all[:, 4 * H:8 * H])
        gates = xp_t + rec                                          # (2, 4H)

        sig = jax.nn.sigmoid(gates[:, 0:3 * H])                     # i | f | o
        g_g = jnp.tanh(gates[:, 3 * H:4 * H])
        i_g = sig[:, 0:H]
        f_g = sig[:, H:2 * H]
        o_g = sig[:, 2 * H:3 * H]

        c_new = f_g * c_st + i_g * g_g
        h_new = o_g * jnp.tanh(c_new)

        # packed-sequence masking (zero state & output beyond lens)
        t_cur = jnp.where(is_fwd, t_f, t_r)                         # (2, 1)
        valid = (t_cur < L).astype(jnp.float32)
        h_new = h_new * valid
        c_new = c_new * valid

        # direct stores into the BiLSTM output scratch (no (T,·,H) carry)
        out_sc[pl.ds(t_f, 1), pl.ds(0, H)] = h_new[0:1, :]
        out_sc[pl.ds(t_r, 1), pl.ds(H, H)] = h_new[1:2, :]
        return h_new, c_new

    lax.fori_loop(0, T, step,
                  (jnp.zeros((2, H), jnp.float32),
                   jnp.zeros((2, H), jnp.float32)),
                  unroll=True)

    # dense epilogue (fused in the same kernel)
    y = jnp.dot(out_sc[...], dense_w_ref[...],
                preferred_element_type=jnp.float32) + dense_b_ref[...]
    xhat_ref[0] = y                                                 # (T, out_dim)


# ---------------------------------------------------------------------------
# Wrapper: offline weight packing + single pallas_call
# ---------------------------------------------------------------------------
def dap_forward(params, txt_enc, spk_emb, x, lens):
    """txt_enc: (B, in_dim, T), spk_emb: (B, n_spk), x: (B, out_dim, T) or None,
    lens: (B,).  Returns {'x_hat': (B, out_dim, T), 'x': normalized x}."""
    B, in_dim, T = txt_enc.shape
    H = params['whh_f'].shape[0]
    out_dim = params['dense_w'].shape[-1]
    n_layers = len(params['convs'])
    n_spk = spk_emb.shape[-1]

    # ---- one-time weight packing (offline w.r.t. the kernel) ----
    def reorder_gates(m):  # last axis (i, f, g, o) -> (i, f, o, g)
        return jnp.concatenate(
            [m[..., :2 * H], m[..., 3 * H:4 * H], m[..., 2 * H:3 * H]], axis=-1)

    wih_cat = jnp.concatenate(
        [reorder_gates(params['wih_f']), reorder_gates(params['wih_r'])], axis=-1)
    whh_cat = jnp.concatenate(
        [reorder_gates(params['whh_f']), reorder_gates(params['whh_r'])], axis=-1)
    bias_cat = jnp.concatenate(
        [reorder_gates(params['b_f']), reorder_gates(params['b_r'])], axis=-1)

    bott_w = params['bottleneck_w'].reshape(-1, params['bottleneck_w'].shape[-1])
    conv_ws = [w.reshape(-1, w.shape[-1]) for w, _ in params['convs']]
    conv_bs = [cb for _, cb in params['convs']]
    weights = [bott_w, params['bottleneck_b'], *conv_ws, *conv_bs,
               wih_cat, whh_cat, bias_cat, params['dense_w'], params['dense_b']]

    # activations (single small boundary layout transform for the raw input)
    txt_tc = jnp.transpose(txt_enc, (0, 2, 1))        # (B, T, in_dim)
    spk3 = spk_emb[:, None, :]                        # (B, 1, n_spk)
    x_in = x if x is not None else jnp.zeros((B, out_dim, T), jnp.float32)
    lens_i32 = lens.astype(jnp.int32)

    def _wspec(a):  # whole (2-D) weight array in VMEM, same block every step
        return pl.BlockSpec(a.shape, lambda b, lens: (0, 0))

    in_specs = [
        pl.BlockSpec((1, T, in_dim), lambda b, lens: (b, 0, 0)),
        pl.BlockSpec((1, 1, n_spk), lambda b, lens: (b, 0, 0)),
        pl.BlockSpec((1, out_dim, T), lambda b, lens: (b, 0, 0)),
    ] + [_wspec(w) for w in weights]

    out_specs = [
        pl.BlockSpec((1, T, out_dim), lambda b, lens: (b, 0, 0)),
        pl.BlockSpec((1, out_dim, T), lambda b, lens: (b, 0, 0)),
    ]

    grid_spec = pltpu.PrefetchScalarGridSpec(
        num_scalar_prefetch=1,                        # lens -> SMEM
        grid=(B,),
        in_specs=in_specs,
        out_specs=out_specs,
        scratch_shapes=[pltpu.VMEM((T, 8 * H), jnp.float32),   # xp (both dirs)
                        pltpu.VMEM((T, 2 * H), jnp.float32)],  # BiLSTM out
    )

    xhat_btd, x_norm = pl.pallas_call(
        functools.partial(_dap_fused_kernel, n_layers),
        out_shape=(jax.ShapeDtypeStruct((B, T, out_dim), jnp.float32),
                   jax.ShapeDtypeStruct((B, out_dim, T), jnp.float32)),
        grid_spec=grid_spec,
        compiler_params=pltpu.CompilerParams(
            dimension_semantics=("parallel",)),
    )(lens_i32, txt_tc, spk3, x_in, *weights)

    x_hat = jnp.transpose(xhat_btd, (0, 2, 1))        # (B, out_dim, T); tiny
    x_out = (x_norm if TAKE_LOG_OF_INPUT else x) if x is not None else None
    return {'x_hat': x_hat, 'x': x_out}


# ---------------------------------------------------------------------------
# Deterministic synthetic parameters (PyTorch layout / gate order)
# ---------------------------------------------------------------------------
def init_dap_params(key, *, in_dim, reduction_factor, n_speaker_dim,
                    n_layers, n_channels, out_dim, scale=0.1):
    reduced = in_dim // reduction_factor
    conv_in = reduced + n_speaker_dim
    H = n_channels // 2
    keys = iter(jax.random.split(key, 4 + 2 * n_layers + 10))
    nrm = lambda shape: scale * jax.random.normal(next(keys), shape, jnp.float32)

    params = {
        'bottleneck_w': nrm((3, in_dim, reduced)),
        'bottleneck_b': nrm((1, reduced)),
        'wih_f': nrm((n_channels, 4 * H)), 'whh_f': nrm((H, 4 * H)), 'b_f': nrm((1, 4 * H)),
        'wih_r': nrm((n_channels, 4 * H)), 'whh_r': nrm((H, 4 * H)), 'b_r': nrm((1, 4 * H)),
        'dense_w': nrm((n_channels, out_dim)), 'dense_b': nrm((1, out_dim)),
        'convs': [],
    }
    for i in range(n_layers):
        cin = conv_in if i == 0 else n_channels
        params['convs'].append((nrm((3, cin, n_channels)), nrm((1, n_channels))))
    return params


# ---------------------------------------------------------------------------
# Pure-JAX reference (same math, original weight layout / gate order)
# ---------------------------------------------------------------------------
def _ref_conv(x_btc, w, b, lens_b1):
    B, T, _ = x_btc.shape
    mask = (jnp.arange(T)[None, :] < lens_b1).astype(x_btc.dtype)[..., None]
    xm = x_btc * mask
    xpad = jnp.pad(xm, ((0, 0), (1, 1), (0, 0)))
    y = sum(jnp.einsum('btc,cd->btd', xpad[:, k:k + T], w[k]) for k in range(3))
    y = y + b[None]
    return jnp.maximum(y, 0.0) * mask


def _ref_bilstm(x_btc, lens, wih_f, whh_f, b_f, wih_r, whh_r, b_r):
    B, T, _ = x_btc.shape
    H = whh_f.shape[0]

    def run(wih, whh, b, reverse):
        xp = jnp.einsum('btc,cg->btg', x_btc, wih) + b

        def step(carry, t):
            h, c = carry
            gates = xp[:, t] + h @ whh
            i_g = jax.nn.sigmoid(gates[:, :H]); f_g = jax.nn.sigmoid(gates[:, H:2 * H])
            g_g = jnp.tanh(gates[:, 2 * H:3 * H]); o_g = jax.nn.sigmoid(gates[:, 3 * H:])
            c_new = f_g * c + i_g * g_g
            h_new = o_g * jnp.tanh(c_new)
            valid = (t < lens)[:, None].astype(x_btc.dtype)
            return (h_new * valid, c_new * valid), h_new * valid

        ts = jnp.arange(T - 1, -1, -1) if reverse else jnp.arange(T)
        _, hs = lax.scan(step, (jnp.zeros((B, H)), jnp.zeros((B, H))), ts)
        if reverse:
            hs = hs[::-1]
        return jnp.transpose(hs, (1, 0, 2))

    return jnp.concatenate([run(wih_f, whh_f, b_f, False),
                            run(wih_r, whh_r, b_r, True)], axis=-1)


def dap_forward_ref(params, txt_enc, spk_emb, x, lens):
    B, _, T = txt_enc.shape
    x_norm = jnp.log(x + 1.0)
    lens_b1 = lens.astype(jnp.int32).reshape(B, 1)
    full_b1 = jnp.full((B, 1), T, jnp.int32)
    h = _ref_conv(jnp.transpose(txt_enc, (0, 2, 1)),
                  params['bottleneck_w'], params['bottleneck_b'], full_b1)
    spk = jnp.broadcast_to(spk_emb[:, None, :], (B, T, spk_emb.shape[-1]))
    ctx = jnp.concatenate([h, spk], axis=-1)
    for kw, kb in params['convs']:
        ctx = _ref_conv(ctx, kw, kb, lens_b1)
    ctx = _ref_bilstm(ctx, lens, params['wih_f'], params['whh_f'], params['b_f'],
                      params['wih_r'], params['whh_r'], params['b_r'])
    y = jnp.einsum('btc,cd->btd', ctx, params['dense_w']) + params['dense_b'][None]
    return {'x_hat': jnp.transpose(y, (0, 2, 1)), 'x': x_norm}


# ---------------------------------------------------------------------------
if __name__ == "__main__":
    B, T = 2, 16
    IN_DIM, REDUCTION = 64, 4          # bottleneck: 64 -> 16
    N_SPK = 16
    N_LAYERS, N_CHANNELS = 2, 32       # ConvLSTMLinear
    OUT_DIM = 1

    root = jax.random.PRNGKey(0)
    kp, k1, k2, k3 = jax.random.split(root, 4)

    params = init_dap_params(kp, in_dim=IN_DIM, reduction_factor=REDUCTION,
                             n_speaker_dim=N_SPK, n_layers=N_LAYERS,
                             n_channels=N_CHANNELS, out_dim=OUT_DIM)

    txt_enc = jax.random.normal(k1, (B, IN_DIM, T), jnp.float32)   # (B, C, T)
    spk_emb = jax.random.normal(k2, (B, N_SPK), jnp.float32)
    x = jnp.abs(jax.random.normal(k3, (B, OUT_DIM, T), jnp.float32))
    lens = jnp.array([T, 12], jnp.int32)

    out = jax.jit(dap_forward)(params, txt_enc, spk_emb, x, lens)
    out = jax.block_until_ready(out)

    assert out['x_hat'].shape == (B, OUT_DIM, T)
    assert out['x'].shape == (B, OUT_DIM, T)

    with jax.default_matmul_precision("highest"):
        ref = dap_forward_ref(params, txt_enc, spk_emb, x, lens)

    err = float(jnp.max(jnp.abs(out['x_hat'] - ref['x_hat'])))
    assert jnp.allclose(out['x_hat'], ref['x_hat'], atol=1e-3, rtol=1e-3), (
        f"mismatch vs pure-JAX reference: max abs diff = {err}")
    assert jnp.allclose(out['x'], ref['x'], atol=1e-5)

    print("KERNEL_OK")
</pallas_src>

<mosaic_0001>
module attributes {stable_mosaic.version = 11 : i64} {
  func.func @_dap_fused_kernel(%arg0: i32, %arg1: memref<2xi32, #tpu.memory_space<smem>>, %arg2: memref<1x16x64xf32, #tpu.memory_space<vmem>>, %arg3: memref<1x1x16xf32, #tpu.memory_space<vmem>>, %arg4: memref<1x1x16xf32, #tpu.memory_space<vmem>>, %arg5: memref<192x16xf32, #tpu.memory_space<vmem>>, %arg6: memref<1x16xf32, #tpu.memory_space<vmem>>, %arg7: memref<96x32xf32, #tpu.memory_space<vmem>>, %arg8: memref<96x32xf32, #tpu.memory_space<vmem>>, %arg9: memref<1x32xf32, #tpu.memory_space<vmem>>, %arg10: memref<1x32xf32, #tpu.memory_space<vmem>>, %arg11: memref<32x128xf32, #tpu.memory_space<vmem>>, %arg12: memref<16x128xf32, #tpu.memory_space<vmem>>, %arg13: memref<1x128xf32, #tpu.memory_space<vmem>>, %arg14: memref<32x1xf32, #tpu.memory_space<vmem>>, %arg15: memref<1x1xf32, #tpu.memory_space<vmem>>, %arg16: memref<1x16x1xf32, #tpu.memory_space<vmem>>, %arg17: memref<1x1x16xf32, #tpu.memory_space<vmem>>, %arg18: memref<16x128xf32, #tpu.memory_space<vmem>>, %arg19: memref<16x32xf32, #tpu.memory_space<vmem>>) attributes {dimension_semantics = [#tpu.dimension_semantics<parallel>], iteration_bounds = array<i64: 2>, scalar_prefetch = 1 : i64, scratch_operands = 2 : i64, tpu.core_type = #tpu.core_type<tc>, window_params = [{transform_indices = @transform_0, window_bounds = array<i64: 1, 16, 64>}, {transform_indices = @transform_1, window_bounds = array<i64: 1, 1, 16>}, {transform_indices = @transform_2, window_bounds = array<i64: 1, 1, 16>}, {pipeline_mode = #tpu.pipeline_mode<synchronous>, transform_indices = @transform_3, window_bounds = array<i64: 192, 16>}, {pipeline_mode = #tpu.pipeline_mode<synchronous>, transform_indices = @transform_4, window_bounds = array<i64: 1, 16>}, {pipeline_mode = #tpu.pipeline_mode<synchronous>, transform_indices = @transform_5, window_bounds = array<i64: 96, 32>}, {pipeline_mode = #tpu.pipeline_mode<synchronous>, transform_indices = @transform_6, window_bounds = array<i64: 96, 32>}, {pipeline_mode = #tpu.pipeline_mode<synchronous>, transform_indices = @transform_7, window_bounds = array<i64: 1, 32>}, {pipeline_mode = #tpu.pipeline_mode<synchronous>, transform_indices = @transform_8, window_bounds = array<i64: 1, 32>}, {pipeline_mode = #tpu.pipeline_mode<synchronous>, transform_indices = @transform_9, window_bounds = array<i64: 32, 128>}, {pipeline_mode = #tpu.pipeline_mode<synchronous>, transform_indices = @transform_10, window_bounds = array<i64: 16, 128>}, {pipeline_mode = #tpu.pipeline_mode<synchronous>, transform_indices = @transform_11, window_bounds = array<i64: 1, 128>}, {pipeline_mode = #tpu.pipeline_mode<synchronous>, transform_indices = @transform_12, window_bounds = array<i64: 32, 1>}, {pipeline_mode = #tpu.pipeline_mode<synchronous>, transform_indices = @transform_13, window_bounds = array<i64: 1, 1>}, {transform_indices = @transform_14, window_bounds = array<i64: 1, 16, 1>}, {transform_indices = @transform_15, window_bounds = array<i64: 1, 1, 16>}]} {
    %0 = arith.index_cast %arg0 : i32 to index
    %1 = memref.load %arg1[%0] : memref<2xi32, #tpu.memory_space<smem>>
    %c0 = arith.constant 0 : index
    %c0_0 = arith.constant 0 : index
    %c0_1 = arith.constant 0 : index
    %2 = vector.load %arg2[%c0, %c0_0, %c0_1] : memref<1x16x64xf32, #tpu.memory_space<vmem>>, vector<1x16x64xf32>
    %3 = vector.shape_cast %2 : vector<1x16x64xf32> to vector<16x64xf32>
    %c0_2 = arith.constant 0 : index
    %c0_3 = arith.constant 0 : index
    %c0_4 = arith.constant 0 : index
    %4 = vector.load %arg4[%c0_2, %c0_3, %c0_4] : memref<1x1x16xf32, #tpu.memory_space<vmem>>, vector<1x1x16xf32>
    %5 = vector.shape_cast %4 : vector<1x1x16xf32> to vector<1x16xf32>
    %cst = arith.constant 1.000000e+00 : f32
    %6 = vector.broadcast %cst : f32 to vector<1x16xf32>
    %7 = arith.addf %5, %6 : vector<1x16xf32>
    %8 = math.log %7 : vector<1x16xf32>
    %c0_5 = arith.constant 0 : index
    %c0_6 = arith.constant 0 : index
    %c0_7 = arith.constant 0 : index
    %9 = vector.load %arg17[%c0_5, %c0_6, %c0_7] : memref<1x1x16xf32, #tpu.memory_space<vmem>>, vector<1x1x16xf32>
    %10 = vector.shape_cast %9 : vector<1x1x16xf32> to vector<1x16xf32>
    %11 = vector.shape_cast %8 : vector<1x16xf32> to vector<1x1x16xf32>
    tpu.vector_store %arg17[%c0_5, %c0_6, %c0_7], %11 {strides = array<i32>} : memref<1x1x16xf32, #tpu.memory_space<vmem>>, vector<1x1x16xf32>,
    %cst_8 = arith.constant 0.000000e+00 : f32
    %12 = vector.broadcast %cst_8 : f32 to vector<1x64xf32>
    %13 = tpu.concatenate %12, %3, %12 in 0 : vector<1x64xf32>, vector<16x64xf32>, vector<1x64xf32> -> vector<18x64xf32>
    %14 = vector.extract_strided_slice %13 {offsets = [0, 0], sizes = [16, 64], strides = [1, 1]} : vector<18x64xf32> to vector<16x64xf32>
    %15 = vector.extract_strided_slice %13 {offsets = [1, 0], sizes = [16, 64], strides = [1, 1]} : vector<18x64xf32> to vector<16x64xf32>
    %16 = vector.extract_strided_slice %13 {offsets = [2, 0], sizes = [16, 64], strides = [1, 1]} : vector<18x64xf32> to vector<16x64xf32>
    %17 = tpu.concatenate %14, %15, %16 in 1 : vector<16x64xf32>, vector<16x64xf32>, vector<16x64xf32> -> vector<16x192xf32>
    %c0_9 = arith.constant 0 : index
    %c0_10 = arith.constant 0 : index
    %18 = vector.load %arg5[%c0_9, %c0_10] : memref<192x16xf32, #tpu.memory_space<vmem>>, vector<192x16xf32>
    %cst_11 = arith.constant dense<0.000000e+00> : vector<16x16xf32>
    %19 = tpu.matmul %17, %18, %cst_11 {dimension_numbers = #tpu.dot_dimension_numbers<[1], [0], [0], [1], [0, 0, 1, 1], [], []>} : vector<16x192xf32>, vector<192x16xf32>, vector<16x16xf32> -> vector<16x16xf32>
    %c0_12 = arith.constant 0 : index
    %c0_13 = arith.constant 0 : index
    %20 = vector.load %arg6[%c0_12, %c0_13] : memref<1x16xf32, #tpu.memory_space<vmem>>, vector<1x16xf32>
    %21 = vector.broadcast %20 : vector<1x16xf32> to vector<16x16xf32>
    %22 = arith.addf %19, %21 : vector<16x16xf32>
    %cst_14 = arith.constant 0.000000e+00 : f32
    %23 = vector.broadcast %cst_14 : f32 to vector<16x16xf32>
    %24 = arith.maximumf %22, %23 : vector<16x16xf32>
    %c0_15 = arith.constant 0 : index
    %c0_16 = arith.constant 0 : index
    %c0_17 = arith.constant 0 : index
    %25 = vector.load %arg3[%c0_15, %c0_16, %c0_17] : memref<1x1x16xf32, #tpu.memory_space<vmem>>, vector<1x1x16xf32>
    %26 = vector.shape_cast %25 : vector<1x1x16xf32> to vector<1x16xf32>
    %27 = vector.shape_cast %26 : vector<1x16xf32> to vector<1x16xf32>
    %28 = vector.broadcast %27 : vector<1x16xf32> to vector<16x16xf32>
    %29 = tpu.concatenate %24, %28 in 1 : vector<16x16xf32>, vector<16x16xf32> -> vector<16x32xf32>
    %30 = tpu.iota {dimensions = array<i32: 0>} : vector<16x1xi32>
    %31 = vector.broadcast %1 : i32 to vector<16x1xi32>
    %32 = arith.cmpi slt, %30, %31 : vector<16x1xi32>
    %33 = arith.extui %32 : vector<16x1xi1> to vector<16x1xi32>
    %34 = arith.sitofp %33 : vector<16x1xi32> to vector<16x1xf32>
    %35 = vector.broadcast %34 : vector<16x1xf32> to vector<16x32xf32>
    %36 = arith.mulf %29, %35 : vector<16x32xf32>
    %cst_18 = arith.constant 0.000000e+00 : f32
    %37 = vector.broadcast %cst_18 : f32 to vector<1x32xf32>
    %38 = tpu.concatenate %37, %36, %37 in 0 : vector<1x32xf32>, vector<16x32xf32>, vector<1x32xf32> -> vector<18x32xf32>
    %39 = vector.extract_strided_slice %38 {offsets = [0, 0], sizes = [16, 32], strides = [1, 1]} : vector<18x32xf32> to vector<16x32xf32>
    %40 = vector.extract_strided_slice %38 {offsets = [1, 0], sizes = [16, 32], strides = [1, 1]} : vector<18x32xf32> to vector<16x32xf32>
    %41 = vector.extract_strided_slice %38 {offsets = [2, 0], sizes = [16, 32], strides = [1, 1]} : vector<18x32xf32> to vector<16x32xf32>
    %42 = tpu.concatenate %39, %40, %41 in 1 : vector<16x32xf32>, vector<16x32xf32>, vector<16x32xf32> -> vector<16x96xf32>
    %c0_19 = arith.constant 0 : index
    %c0_20 = arith.constant 0 : index
    %43 = vector.load %arg7[%c0_19, %c0_20] : memref<96x32xf32, #tpu.memory_space<vmem>>, vector<96x32xf32>
    %cst_21 = arith.constant dense<0.000000e+00> : vector<16x32xf32>
    %44 = tpu.matmul %42, %43, %cst_21 {dimension_numbers = #tpu.dot_dimension_numbers<[1], [0], [0], [1], [0, 0, 1, 1], [], []>} : vector<16x96xf32>, vector<96x32xf32>, vector<16x32xf32> -> vector<16x32xf32>
    %c0_22 = arith.constant 0 : index
    %c0_23 = arith.constant 0 : index
    %45 = vector.load %arg9[%c0_22, %c0_23] : memref<1x32xf32, #tpu.memory_space<vmem>>, vector<1x32xf32>
    %46 = vector.broadcast %45 : vector<1x32xf32> to vector<16x32xf32>
    %47 = arith.addf %44, %46 : vector<16x32xf32>
    %cst_24 = arith.constant 0.000000e+00 : f32
    %48 = vector.broadcast %cst_24 : f32 to vector<16x32xf32>
    %49 = arith.maximumf %47, %48 : vector<16x32xf32>
    %50 = vector.broadcast %34 : vector<16x1xf32> to vector<16x32xf32>
    %51 = arith.mulf %49, %50 : vector<16x32xf32>
    %52 = vector.broadcast %34 : vector<16x1xf32> to vector<16x32xf32>
    %53 = arith.mulf %51, %52 : vector<16x32xf32>
    %cst_25 = arith.constant 0.000000e+00 : f32
    %54 = vector.broadcast %cst_25 : f32 to vector<1x32xf32>
    %55 = tpu.concatenate %54, %53, %54 in 0 : vector<1x32xf32>, vector<16x32xf32>, vector<1x32xf32> -> vector<18x32xf32>
    %56 = vector.extract_strided_slice %55 {offsets = [0, 0], sizes = [16, 32], strides = [1, 1]} : vector<18x32xf32> to vector<16x32xf32>
    %57 = vector.extract_strided_slice %55 {offsets = [1, 0], sizes = [16, 32], strides = [1, 1]} : vector<18x32xf32> to vector<16x32xf32>
    %58 = vector.extract_strided_slice %55 {offsets = [2, 0], sizes = [16, 32], strides = [1, 1]} : vector<18x32xf32> to vector<16x32xf32>
    %59 = tpu.concatenate %56, %57, %58 in 1 : vector<16x32xf32>, vector<16x32xf32>, vector<16x32xf32> -> vector<16x96xf32>
    %c0_26 = arith.constant 0 : index
    %c0_27 = arith.constant 0 : index
    %60 = vector.load %arg8[%c0_26, %c0_27] : memref<96x32xf32, #tpu.memory_space<vmem>>, vector<96x32xf32>
    %cst_28 = arith.constant dense<0.000000e+00> : vector<16x32xf32>
    %61 = tpu.matmul %59, %60, %cst_28 {dimension_numbers = #tpu.dot_dimension_numbers<[1], [0], [0], [1], [0, 0, 1, 1], [], []>} : vector<16x96xf32>, vector<96x32xf32>, vector<16x32xf32> -> vector<16x32xf32>
    %c0_29 = arith.constant 0 : index
    %c0_30 = arith.constant 0 : index
    %62 = vector.load %arg10[%c0_29, %c0_30] : memref<1x32xf32, #tpu.memory_space<vmem>>, vector<1x32xf32>
    %63 = vector.broadcast %62 : vector<1x32xf32> to vector<16x32xf32>
    %64 = arith.addf %61, %63 : vector<16x32xf32>
    %cst_31 = arith.constant 0.000000e+00 : f32
    %65 = vector.broadcast %cst_31 : f32 to vector<16x32xf32>
    %66 = arith.maximumf %64, %65 : vector<16x32xf32>
    %67 = vector.broadcast %34 : vector<16x1xf32> to vector<16x32xf32>
    %68 = arith.mulf %66, %67 : vector<16x32xf32>
    %c0_32 = arith.constant 0 : index
    %c0_33 = arith.constant 0 : index
    %69 = vector.load %arg11[%c0_32, %c0_33] : memref<32x128xf32, #tpu.memory_space<vmem>>, vector<32x128xf32>
    %cst_34 = arith.constant dense<0.000000e+00> : vector<16x128xf32>
    %70 = tpu.matmul %68, %69, %cst_34 {dimension_numbers = #tpu.dot_dimension_numbers<[1], [0], [0], [1], [0, 0, 1, 1], [], []>} : vector<16x32xf32>, vector<32x128xf32>, vector<16x128xf32> -> vector<16x128xf32>
    %c0_35 = arith.constant 0 : index
    %c0_36 = arith.constant 0 : index
    %71 = vector.load %arg13[%c0_35, %c0_36] : memref<1x128xf32, #tpu.memory_space<vmem>>, vector<1x128xf32>
    %72 = vector.broadcast %71 : vector<1x128xf32> to vector<16x128xf32>
    %73 = arith.addf %70, %72 : vector<16x128xf32>
    %c0_37 = arith.constant 0 : index
    %c0_38 = arith.constant 0 : index
    %74 = vector.load %arg18[%c0_37, %c0_38] : memref<16x128xf32, #tpu.memory_space<vmem>>, vector<16x128xf32>
    tpu.vector_store %arg18[%c0_37, %c0_38], %73 {strides = array<i32>} : memref<16x128xf32, #tpu.memory_space<vmem>>, vector<16x128xf32>,
    %c0_39 = arith.constant 0 : index
    %c0_40 = arith.constant 0 : index
    %75 = vector.load %arg12[%c0_39, %c0_40] : memref<16x128xf32, #tpu.memory_space<vmem>>, vector<16x128xf32>
    %76 = tpu.iota {dimensions = array<i32: 0>} : vector<2x1xi32>
    %c0_i32 = arith.constant 0 : i32
    %77 = vector.broadcast %c0_i32 : i32 to vector<2x1xi32>
    %78 = arith.cmpi eq, %76, %77 : vector<2x1xi32>
    %cst_41 = arith.constant 0.000000e+00 : f32
    %79 = vector.broadcast %cst_41 : f32 to vector<2x16xf32>
    %cst_42 = arith.constant 0.000000e+00 : f32
    %80 = vector.broadcast %cst_42 : f32 to vector<2x16xf32>
    %c0_i32_43 = arith.constant 0 : i32
    %c15_i32 = arith.constant 15 : i32
    %81 = arith.subi %c15_i32, %c0_i32_43 : i32
    %82 = arith.index_cast %c0_i32_43 : i32 to index
    %c0_44 = arith.constant 0 : index
    %83 = vector.load %arg18[%82, %c0_44] : memref<16x128xf32, #tpu.memory_space<vmem>>, vector<1x64xf32>
    %84 = arith.index_cast %81 : i32 to index
    %c64 = arith.constant 64 : index
    %85 = vector.load %arg18[%84, %c64] : memref<16x128xf32, #tpu.memory_space<vmem>>, vector<1x64xf32>
    %86 = tpu.concatenate %83, %85 in 0 : vector<1x64xf32>, vector<1x64xf32> -> vector<2x64xf32>
    %cst_45 = arith.constant dense<0.000000e+00> : vector<2x128xf32>
    %87 = tpu.matmul %79, %75, %cst_45 {dimension_numbers = #tpu.dot_dimension_numbers<[1], [0], [0], [1], [0, 0, 1, 1], [], []>} : vector<2x16xf32>, vector<16x128xf32>, vector<2x128xf32> -> vector<2x128xf32>
    %88 = vector.extract_strided_slice %87 {offsets = [0, 0], sizes = [2, 64], strides = [1, 1]} : vector<2x128xf32> to vector<2x64xf32>
    %89 = vector.extract_strided_slice %87 {offsets = [0, 64], sizes = [2, 64], strides = [1, 1]} : vector<2x128xf32> to vector<2x64xf32>
    %90 = vector.shape_cast %78 : vector<2x1xi1> to vector<2x1xi1>
    %91 = vector.broadcast %90 : vector<2x1xi1> to vector<2x64xi1>
    %92 = arith.select %91, %88, %89 : vector<2x64xi1>, vector<2x64xf32>
    %93 = arith.addf %86, %92 : vector<2x64xf32>
    %94 = vector.extract_strided_slice %93 {offsets = [0, 0], sizes = [2, 48], strides = [1, 1]} : vector<2x64xf32> to vector<2x48xf32>
    %95 = arith.negf %94 : vector<2x48xf32>
    %96 = math.exp %95 : vector<2x48xf32>
    %cst_46 = arith.constant 1.000000e+00 : f32
    %97 = vector.broadcast %cst_46 : f32 to vector<2x48xf32>
    %98 = arith.addf %97, %96 : vector<2x48xf32>
    %99 = arith.divf %97, %98 : vector<2x48xf32>
    %100 = vector.extract_strided_slice %93 {offsets = [0, 48], sizes = [2, 16], strides = [1, 1]} : vector<2x64xf32> to vector<2x16xf32>
    %101 = math.tanh %100 : vector<2x16xf32>
    %102 = vector.extract_strided_slice %99 {offsets = [0, 0], sizes = [2, 16], strides = [1, 1]} : vector<2x48xf32> to vector<2x16xf32>
    %103 = vector.extract_strided_slice %99 {offsets = [0, 16], sizes = [2, 16], strides = [1, 1]} : vector<2x48xf32> to vector<2x16xf32>
    %104 = vector.extract_strided_slice %99 {offsets = [0, 32], sizes = [2, 16], strides = [1, 1]} : vector<2x48xf32> to vector<2x16xf32>
    %105 = arith.mulf %103, %80 : vector<2x16xf32>
    %106 = arith.mulf %102, %101 : vector<2x16xf32>
    %107 = arith.addf %105, %106 : vector<2x16xf32>
    %108 = math.tanh %107 : vector<2x16xf32>
    %109 = arith.mulf %104, %108 : vector<2x16xf32>
    %110 = vector.broadcast %c0_i32_43 : i32 to vector<2x1xi32>
    %111 = vector.broadcast %81 : i32 to vector<2x1xi32>
    %112 = arith.select %78, %110, %111 : vector<2x1xi1>, vector<2x1xi32>
    %113 = vector.broadcast %1 : i32 to vector<2x1xi32>
    %114 = arith.cmpi slt, %112, %113 : vector<2x1xi32>
    %115 = arith.extui %114 : vector<2x1xi1> to vector<2x1xi32>
    %116 = arith.sitofp %115 : vector<2x1xi32> to vector<2x1xf32>
    %117 = vector.broadcast %116 : vector<2x1xf32> to vector<2x16xf32>
    %118 = arith.mulf %109, %117 : vector<2x16xf32>
    %119 = vector.broadcast %116 : vector<2x1xf32> to vector<2x16xf32>
    %120 = arith.mulf %107, %119 : vector<2x16xf32>
    %121 = vector.extract_strided_slice %118 {offsets = [0, 0], sizes = [1, 16], strides = [1, 1]} : vector<2x16xf32> to vector<1x16xf32>
    %122 = arith.index_cast %c0_i32_43 : i32 to index
    %c0_47 = arith.constant 0 : index
    %123 = vector.load %arg19[%122, %c0_47] : memref<16x32xf32, #tpu.memory_space<vmem>>, vector<1x16xf32>
    tpu.vector_store %arg19[%122, %c0_47], %121 {strides = array<i32>} : memref<16x32xf32, #tpu.memory_space<vmem>>, vector<1x16xf32>,
    %124 = vector.extract_strided_slice %118 {offsets = [1, 0], sizes = [1, 16], strides = [1, 1]} : vector<2x16xf32> to vector<1x16xf32>
    %125 = arith.index_cast %81 : i32 to index
    %c16 = arith.constant 16 : index
    %126 = vector.load %arg19[%125, %c16] : memref<16x32xf32, #tpu.memory_space<vmem>>, vector<1x16xf32>
    tpu.vector_store %arg19[%125, %c16], %124 {strides = array<i32>} : memref<16x32xf32, #tpu.memory_space<vmem>>, vector<1x16xf32>,
    %c1_i32 = arith.constant 1 : i32
    %c15_i32_48 = arith.constant 15 : i32
    %127 = arith.subi %c15_i32_48, %c1_i32 : i32
    %128 = arith.index_cast %c1_i32 : i32 to index
    %c0_49 = arith.constant 0 : index
    %129 = vector.load %arg18[%128, %c0_49] : memref<16x128xf32, #tpu.memory_space<vmem>>, vector<1x64xf32>
    %130 = arith.index_cast %127 : i32 to index
    %c64_50 = arith.constant 64 : index
    %131 = vector.load %arg18[%130, %c64_50] : memref<16x128xf32, #tpu.memory_space<vmem>>, vector<1x64xf32>
    %132 = tpu.concatenate %129, %131 in 0 : vector<1x64xf32>, vector<1x64xf32> -> vector<2x64xf32>
    %cst_51 = arith.constant dense<0.000000e+00> : vector<2x128xf32>
    %133 = tpu.matmul %118, %75, %cst_51 {dimension_numbers = #tpu.dot_dimension_numbers<[1], [0], [0], [1], [0, 0, 1, 1], [], []>} : vector<2x16xf32>, vector<16x128xf32>, vector<2x128xf32> -> vector<2x128xf32>
    %134 = vector.extract_strided_slice %133 {offsets = [0, 0], sizes = [2, 64], strides = [1, 1]} : vector<2x128xf32> to vector<2x64xf32>
    %135 = vector.extract_strided_slice %133 {offsets = [0, 64], sizes = [2, 64], strides = [1, 1]} : vector<2x128xf32> to vector<2x64xf32>
    %136 = vector.shape_cast %78 : vector<2x1xi1> to vector<2x1xi1>
    %137 = vector.broadcast %136 : vector<2x1xi1> to vector<2x64xi1>
    %138 = arith.select %137, %134, %135 : vector<2x64xi1>, vector<2x64xf32>
    %139 = arith.addf %132, %138 : vector<2x64xf32>
    %140 = vector.extract_strided_slice %139 {offsets = [0, 0], sizes = [2, 48], strides = [1, 1]} : vector<2x64xf32> to vector<2x48xf32>
    %141 = arith.negf %140 : vector<2x48xf32>
    %142 = math.exp %141 : vector<2x48xf32>
    %cst_52 = arith.constant 1.000000e+00 : f32
    %143 = vector.broadcast %cst_52 : f32 to vector<2x48xf32>
    %144 = arith.addf %143, %142 : vector<2x48xf32>
    %145 = arith.divf %143, %144 : vector<2x48xf32>
    %146 = vector.extract_strided_slice %139 {offsets = [0, 48], sizes = [2, 16], strides = [1, 1]} : vector<2x64xf32> to vector<2x16xf32>
    %147 = math.tanh %146 : vector<2x16xf32>
    %148 = vector.extract_strided_slice %145 {offsets = [0, 0], sizes = [2, 16], strides = [1, 1]} : vector<2x48xf32> to vector<2x16xf32>
    %149 = vector.extract_strided_slice %145 {offsets = [0, 16], sizes = [2, 16], strides = [1, 1]} : vector<2x48xf32> to vector<2x16xf32>
    %150 = vector.extract_strided_slice %145 {offsets = [0, 32], sizes = [2, 16], strides = [1, 1]} : vector<2x48xf32> to vector<2x16xf32>
    %151 = arith.mulf %149, %120 : vector<2x16xf32>
    %152 = arith.mulf %148, %147 : vector<2x16xf32>
    %153 = arith.addf %151, %152 : vector<2x16xf32>
    %154 = math.tanh %153 : vector<2x16xf32>
    %155 = arith.mulf %150, %154 : vector<2x16xf32>
    %156 = vector.broadcast %c1_i32 : i32 to vector<2x1xi32>
    %157 = vector.broadcast %127 : i32 to vector<2x1xi32>
    %158 = arith.select %78, %156, %157 : vector<2x1xi1>, vector<2x1xi32>
    %159 = vector.broadcast %1 : i32 to vector<2x1xi32>
    %160 = arith.cmpi slt, %158, %159 : vector<2x1xi32>
    %161 = arith.extui %160 : vector<2x1xi1> to vector<2x1xi32>
    %162 = arith.sitofp %161 : vector<2x1xi32> to vector<2x1xf32>
    %163 = vector.broadcast %162 : vector<2x1xf32> to vector<2x16xf32>
    %164 = arith.mulf %155, %163 : vector<2x16xf32>
    %165 = vector.broadcast %162 : vector<2x1xf32> to vector<2x16xf32>
    %166 = arith.mulf %153, %165 : vector<2x16xf32>
    %167 = vector.extract_strided_slice %164 {offsets = [0, 0], sizes = [1, 16], strides = [1, 1]} : vector<2x16xf32> to vector<1x16xf32>
    %168 = arith.index_cast %c1_i32 : i32 to index
    %c0_53 = arith.constant 0 : index
    %169 = vector.load %arg19[%168, %c0_53] : memref<16x32xf32, #tpu.memory_space<vmem>>, vector<1x16xf32>
    tpu.vector_store %arg19[%168, %c0_53], %167 {strides = array<i32>} : memref<16x32xf32, #tpu.memory_space<vmem>>, vector<1x16xf32>,
    %170 = vector.extract_strided_slice %164 {offsets = [1, 0], sizes = [1, 16], strides = [1, 1]} : vector<2x16xf32> to vector<1x16xf32>
    %171 = arith.index_cast %127 : i32 to index
    %c16_54 = arith.constant 16 : index
    %172 = vector.load %arg19[%171, %c16_54] : memref<16x32xf32, #tpu.memory_space<vmem>>, vector<1x16xf32>
    tpu.vector_store %arg19[%171, %c16_54], %170 {strides = array<i32>} : memref<16x32xf32, #tpu.memory_space<vmem>>, vector<1x16xf32>,
    %c2_i32 = arith.constant 2 : i32
    %c15_i32_55 = arith.constant 15 : i32
    %173 = arith.subi %c15_i32_55, %c2_i32 : i32
    %174 = arith.index_cast %c2_i32 : i32 to index
    %c0_56 = arith.constant 0 : index
    %175 = vector.load %arg18[%174, %c0_56] : memref<16x128xf32, #tpu.memory_space<vmem>>, vector<1x64xf32>
    %176 = arith.index_cast %173 : i32 to index
    %c64_57 = arith.constant 64 : index
    %177 = vector.load %arg18[%176, %c64_57] : memref<16x128xf32, #tpu.memory_space<vmem>>, vector<1x64xf32>
    %178 = tpu.concatenate %175, %177 in 0 : vector<1x64xf32>, vector<1x64xf32> -> vector<2x64xf32>
    %cst_58 = arith.constant dense<0.000000e+00> : vector<2x128xf32>
    %179 = tpu.matmul %164, %75, %cst_58 {dimension_numbers = #tpu.dot_dimension_numbers<[1], [0], [0], [1], [0, 0, 1, 1], [], []>} : vector<2x16xf32>, vector<16x128xf32>, vector<2x128xf32> -> vector<2x128xf32>
    %180 = vector.extract_strided_slice %179 {offsets = [0, 0], sizes = [2, 64], strides = [1, 1]} : vector<2x128xf32> to vector<2x64xf32>
    %181 = vector.extract_strided_slice %179 {offsets = [0, 64], sizes = [2, 64], strides = [1, 1]} : vector<2x128xf32> to vector<2x64xf32>
    %182 = vector.shape_cast %78 : vector<2x1xi1> to vector<2x1xi1>
    %183 = vector.broadcast %182 : vector<2x1xi1> to vector<2x64xi1>
    %184 = arith.select %183, %180, %181 : vector<2x64xi1>, vector<2x64xf32>
    %185 = arith.addf %178, %184 : vector<2x64xf32>
    %186 = vector.extract_strided_slice %185 {offsets = [0, 0], sizes = [2, 48], strides = [1, 1]} : vector<2x64xf32> to vector<2x48xf32>
    %187 = arith.negf %186 : vector<2x48xf32>
    %188 = math.exp %187 : vector<2x48xf32>
    %cst_59 = arith.constant 1.000000e+00 : f32
    %189 = vector.broadcast %cst_59 : f32 to vector<2x48xf32>
    %190 = arith.addf %189, %188 : vector<2x48xf32>
    %191 = arith.divf %189, %190 : vector<2x48xf32>
    %192 = vector.extract_strided_slice %185 {offsets = [0, 48], sizes = [2, 16], strides = [1, 1]} : vector<2x64xf32> to vector<2x16xf32>
    %193 = math.tanh %192 : vector<2x16xf32>
    %194 = vector.extract_strided_slice %191 {offsets = [0, 0], sizes = [2, 16], strides = [1, 1]} : vector<2x48xf32> to vector<2x16xf32>
    %195 = vector.extract_strided_slice %191 {offsets = [0, 16], sizes = [2, 16], strides = [1, 1]} : vector<2x48xf32> to vector<2x16xf32>
    %196 = vector.extract_strided_slice %191 {offsets = [0, 32], sizes = [2, 16], strides = [1, 1]} : vector<2x48xf32> to vector<2x16xf32>
    %197 = arith.mulf %195, %166 : vector<2x16xf32>
    %198 = arith.mulf %194, %193 : vector<2x16xf32>
    %199 = arith.addf %197, %198 : vector<2x16xf32>
    %200 = math.tanh %199 : vector<2x16xf32>
    %201 = arith.mulf %196, %200 : vector<2x16xf32>
    %202 = vector.broadcast %c2_i32 : i32 to vector<2x1xi32>
    %203 = vector.broadcast %173 : i32 to vector<2x1xi32>
    %204 = arith.select %78, %202, %203 : vector<2x1xi1>, vector<2x1xi32>
    %205 = vector.broadcast %1 : i32 to vector<2x1xi32>
    %206 = arith.cmpi slt, %204, %205 : vector<2x1xi32>
    %207 = arith.extui %206 : vector<2x1xi1> to vector<2x1xi32>
    %208 = arith.sitofp %207 : vector<2x1xi32> to vector<2x1xf32>
    %209 = vector.broadcast %208 : vector<2x1xf32> to vector<2x16xf32>
    %210 = arith.mulf %201, %209 : vector<2x16xf32>
    %211 = vector.broadcast %208 : vector<2x1xf32> to vector<2x16xf32>
    %212 = arith.mulf %199, %211 : vector<2x16xf32>
    %213 = vector.extract_strided_slice %210 {offsets = [0, 0], sizes = [1, 16], strides = [1, 1]} : vector<2x16xf32> to vector<1x16xf32>
    %214 = arith.index_cast %c2_i32 : i32 to index
    %c0_60 = arith.constant 0 : index
    %215 = vector.load %arg19[%214, %c0_60] : memref<16x32xf32, #tpu.memory_space<vmem>>, vector<1x16xf32>
    tpu.vector_store %arg19[%214, %c0_60], %213 {strides = array<i32>} : memref<16x32xf32, #tpu.memory_space<vmem>>, vector<1x16xf32>,
    %216 = vector.extract_strided_slice %210 {offsets = [1, 0], sizes = [1, 16], strides = [1, 1]} : vector<2x16xf32> to vector<1x16xf32>
    %217 = arith.index_cast %173 : i32 to index
    %c16_61 = arith.constant 16 : index
    %218 = vector.load %arg19[%217, %c16_61] : memref<16x32xf32, #tpu.memory_space<vmem>>, vector<1x16xf32>
    tpu.vector_store %arg19[%217, %c16_61], %216 {strides = array<i32>} : memref<16x32xf32, #tpu.memory_space<vmem>>, vector<1x16xf32>,
    %c3_i32 = arith.constant 3 : i32
    %c15_i32_62 = arith.constant 15 : i32
    %219 = arith.subi %c15_i32_62, %c3_i32 : i32
    %220 = arith.index_cast %c3_i32 : i32 to index
    %c0_63 = arith.constant 0 : index
    %221 = vector.load %arg18[%220, %c0_63] : memref<16x128xf32, #tpu.memory_space<vmem>>, vector<1x64xf32>
    %222 = arith.index_cast %219 : i32 to index
    %c64_64 = arith.constant 64 : index
    %223 = vector.load %arg18[%222, %c64_64] : memref<16x128xf32, #tpu.memory_space<vmem>>, vector<1x64xf32>
    %224 = tpu.concatenate %221, %223 in 0 : vector<1x64xf32>, vector<1x64xf32> -> vector<2x64xf32>
    %cst_65 = arith.constant dense<0.000000e+00> : vector<2x128xf32>
    %225 = tpu.matmul %210, %75, %cst_65 {dimension_numbers = #tpu.dot_dimension_numbers<[1], [0], [0], [1], [0, 0, 1, 1], [], []>} : vector<2x16xf32>, vector<16x128xf32>, vector<2x128xf32> -> vector<2x128xf32>
    %226 = vector.extract_strided_slice %225 {offsets = [0, 0], sizes = [2, 64], strides = [1, 1]} : vector<2x128xf32> to vector<2x64xf32>
    %227 = vector.extract_strided_slice %225 {offsets = [0, 64], sizes = [2, 64], strides = [1, 1]} : vector<2x128xf32> to vector<2x64xf32>
    %228 = vector.shape_cast %78 : vector<2x1xi1> to vector<2x1xi1>
    %229 = vector.broadcast %228 : vector<2x1xi1> to vector<2x64xi1>
    %230 = arith.select %229, %226, %227 : vector<2x64xi1>, vector<2x64xf32>
    %231 = arith.addf %224, %230 : vector<2x64xf32>
    %232 = vector.extract_strided_slice %231 {offsets = [0, 0], sizes = [2, 48], strides = [1, 1]} : vector<2x64xf32> to vector<2x48xf32>
    %233 = arith.negf %232 : vector<2x48xf32>
    %234 = math.exp %233 : vector<2x48xf32>
    %cst_66 = arith.constant 1.000000e+00 : f32
    %235 = vector.broadcast %cst_66 : f32 to vector<2x48xf32>
    %236 = arith.addf %235, %234 : vector<2x48xf32>
    %237 = arith.divf %235, %236 : vector<2x48xf32>
    %238 = vector.extract_strided_slice %231 {offsets = [0, 48], sizes = [2, 16], strides = [1, 1]} : vector<2x64xf32> to vector<2x16xf32>
    %239 = math.tanh %238 : vector<2x16xf32>
    %240 = vector.extract_strided_slice %237 {offsets = [0, 0], sizes = [2, 16], strides = [1, 1]} : vector<2x48xf32> to vector<2x16xf32>
    %241 = vector.extract_strided_slice %237 {offsets = [0, 16], sizes = [2, 16], strides = [1, 1]} : vector<2x48xf32> to vector<2x16xf32>
    %242 = vector.extract_strided_slice %237 {offsets = [0, 32], sizes = [2, 16], strides = [1, 1]} : vector<2x48xf32> to vector<2x16xf32>
    %243 = arith.mulf %241, %212 : vector<2x16xf32>
    %244 = arith.mulf %240, %239 : vector<2x16xf32>
    %245 = arith.addf %243, %244 : vector<2x16xf32>
    %246 = math.tanh %245 : vector<2x16xf32>
    %247 = arith.mulf %242, %246 : vector<2x16xf32>
    %248 = vector.broadcast %c3_i32 : i32 to vector<2x1xi32>
    %249 = vector.broadcast %219 : i32 to vector<2x1xi32>
    %250 = arith.select %78, %248, %249 : vector<2x1xi1>, vector<2x1xi32>
    %251 = vector.broadcast %1 : i32 to vector<2x1xi32>
    %252 = arith.cmpi slt, %250, %251 : vector<2x1xi32>
    %253 = arith.extui %252 : vector<2x1xi1> to vector<2x1xi32>
    %254 = arith.sitofp %253 : vector<2x1xi32> to vector<2x1xf32>
    %255 = vector.broadcast %254 : vector<2x1xf32> to vector<2x16xf32>
    %256 = arith.mulf %247, %255 : vector<2x16xf32>
    %257 = vector.broadcast %254 : vector<2x1xf32> to vector<2x16xf32>
    %258 = arith.mulf %245, %257 : vector<2x16xf32>
    %259 = vector.extract_strided_slice %256 {offsets = [0, 0], sizes = [1, 16], strides = [1, 1]} : vector<2x16xf32> to vector<1x16xf32>
    %260 = arith.index_cast %c3_i32 : i32 to index
    %c0_67 = arith.constant 0 : index
    %261 = vector.load %arg19[%260, %c0_67] : memref<16x32xf32, #tpu.memory_space<vmem>>, vector<1x16xf32>
    tpu.vector_store %arg19[%260, %c0_67], %259 {strides = array<i32>} : memref<16x32xf32, #tpu.memory_space<vmem>>, vector<1x16xf32>,
    %262 = vector.extract_strided_slice %256 {offsets = [1, 0], sizes = [1, 16], strides = [1, 1]} : vector<2x16xf32> to vector<1x16xf32>
    %263 = arith.index_cast %219 : i32 to index
    %c16_68 = arith.constant 16 : index
    %264 = vector.load %arg19[%263, %c16_68] : memref<16x32xf32, #tpu.memory_space<vmem>>, vector<1x16xf32>
    tpu.vector_store %arg19[%263, %c16_68], %262 {strides = array<i32>} : memref<16x32xf32, #tpu.memory_space<vmem>>, vector<1x16xf32>,
    %c4_i32 = arith.constant 4 : i32
    %c15_i32_69 = arith.constant 15 : i32
    %265 = arith.subi %c15_i32_69, %c4_i32 : i32
    %266 = arith.index_cast %c4_i32 : i32 to index
    %c0_70 = arith.constant 0 : index
    %267 = vector.load %arg18[%266, %c0_70] : memref<16x128xf32, #tpu.memory_space<vmem>>, vector<1x64xf32>
    %268 = arith.index_cast %265 : i32 to index
    %c64_71 = arith.constant 64 : index
    %269 = vector.load %arg18[%268, %c64_71] : memref<16x128xf32, #tpu.memory_space<vmem>>, vector<1x64xf32>
    %270 = tpu.concatenate %267, %269 in 0 : vector<1x64xf32>, vector<1x64xf32> -> vector<2x64xf32>
    %cst_72 = arith.constant dense<0.000000e+00> : vector<2x128xf32>
    %271 = tpu.matmul %256, %75, %cst_72 {dimension_numbers = #tpu.dot_dimension_numbers<[1], [0], [0], [1], [0, 0, 1, 1], [], []>} : vector<2x16xf32>, vector<16x128xf32>, vector<2x128xf32> -> vector<2x128xf32>
    %272 = vector.extract_strided_slice %271 {offsets = [0, 0], sizes = [2, 64], strides = [1, 1]} : vector<2x128xf32> to vector<2x64xf32>
    %273 = vector.extract_strided_slice %271 {offsets = [0, 64], sizes = [2, 64], strides = [1, 1]} : vector<2x128xf32> to vector<2x64xf32>
    %274 = vector.shape_cast %78 : vector<2x1xi1> to vector<2x1xi1>
    %275 = vector.broadcast %274 : vector<2x1xi1> to vector<2x64xi1>
    %276 = arith.select %275, %272, %273 : vector<2x64xi1>, vector<2x64xf32>
    %277 = arith.addf %270, %276 : vector<2x64xf32>
    %278 = vector.extract_strided_slice %277 {offsets = [0, 0], sizes = [2, 48], strides = [1, 1]} : vector<2x64xf32> to vector<2x48xf32>
    %279 = arith.negf %278 : vector<2x48xf32>
    %280 = math.exp %279 : vector<2x48xf32>
    %cst_73 = arith.constant 1.000000e+00 : f32
    %281 = vector.broadcast %cst_73 : f32 to vector<2x48xf32>
    %282 = arith.addf %281, %280 : vector<2x48xf32>
    %283 = arith.divf %281, %282 : vector<2x48xf32>
    %284 = vector.extract_strided_slice %277 {offsets = [0, 48], sizes = [2, 16], strides = [1, 1]} : vector<2x64xf32> to vector<2x16xf32>
    %285 = math.tanh %284 : vector<2x16xf32>
    %286 = vector.extract_strided_slice %283 {offsets = [0, 0], sizes = [2, 16], strides = [1, 1]} : vector<2x48xf32> to vector<2x16xf32>
    %287 = vector.extract_strided_slice %283 {offsets = [0, 16], sizes = [2, 16], strides = [1, 1]} : vector<2x48xf32> to vector<2x16xf32>
    %288 = vector.extract_strided_slice %283 {offsets = [0, 32], sizes = [2, 16], strides = [1, 1]} : vector<2x48xf32> to vector<2x16xf32>
    %289 = arith.mulf %287, %258 : vector<2x16xf32>
    %290 = arith.mulf %286, %285 : vector<2x16xf32>
    %291 = arith.addf %289, %290 : vector<2x16xf32>
    %292 = math.tanh %291 : vector<2x16xf32>
    %293 = arith.mulf %288, %292 : vector<2x16xf32>
    %294 = vector.broadcast %c4_i32 : i32 to vector<2x1xi32>
    %295 = vector.broadcast %265 : i32 to vector<2x1xi32>
    %296 = arith.select %78, %294, %295 : vector<2x1xi1>, vector<2x1xi32>
    %297 = vector.broadcast %1 : i32 to vector<2x1xi32>
    %298 = arith.cmpi slt, %296, %297 : vector<2x1xi32>
    %299 = arith.extui %298 : vector<2x1xi1> to vector<2x1xi32>
    %300 = arith.sitofp %299 : vector<2x1xi32> to vector<2x1xf32>
    %301 = vector.broadcast %300 : vector<2x1xf32> to vector<2x16xf32>
    %302 = arith.mulf %293, %301 : vector<2x16xf32>
    %303 = vector.broadcast %300 : vector<2x1xf32> to vector<2x16xf32>
    %304 = arith.mulf %291, %303 : vector<2x16xf32>
    %305 = vector.extract_strided_slice %302 {offsets = [0, 0], sizes = [1, 16], strides = [1, 1]} : vector<2x16xf32> to vector<1x16xf32>
    %306 = arith.index_cast %c4_i32 : i32 to index
    %c0_74 = arith.constant 0 : index
    %307 = vector.load %arg19[%306, %c0_74] : memref<16x32xf32, #tpu.memory_space<vmem>>, vector<1x16xf32>
    tpu.vector_store %arg19[%306, %c0_74], %305 {strides = array<i32>} : memref<16x32xf32, #tpu.memory_space<vmem>>, vector<1x16xf32>,
    %308 = vector.extract_strided_slice %302 {offsets = [1, 0], sizes = [1, 16], strides = [1, 1]} : vector<2x16xf32> to vector<1x16xf32>
    %309 = arith.index_cast %265 : i32 to index
    %c16_75 = arith.constant 16 : index
    %310 = vector.load %arg19[%309, %c16_75] : memref<16x32xf32, #tpu.memory_space<vmem>>, vector<1x16xf32>
    tpu.vector_store %arg19[%309, %c16_75], %308 {strides = array<i32>} : memref<16x32xf32, #tpu.memory_space<vmem>>, vector<1x16xf32>,
    %c5_i32 = arith.constant 5 : i32
    %c15_i32_76 = arith.constant 15 : i32
    %311 = arith.subi %c15_i32_76, %c5_i32 : i32
    %312 = arith.index_cast %c5_i32 : i32 to index
    %c0_77 = arith.constant 0 : index
    %313 = vector.load %arg18[%312, %c0_77] : memref<16x128xf32, #tpu.memory_space<vmem>>, vector<1x64xf32>
    %314 = arith.index_cast %311 : i32 to index
    %c64_78 = arith.constant 64 : index
    %315 = vector.load %arg18[%314, %c64_78] : memref<16x128xf32, #tpu.memory_space<vmem>>, vector<1x64xf32>
    %316 = tpu.concatenate %313, %315 in 0 : vector<1x64xf32>, vector<1x64xf32> -> vector<2x64xf32>
    %cst_79 = arith.constant dense<0.000000e+00> : vector<2x128xf32>
    %317 = tpu.matmul %302, %75, %cst_79 {dimension_numbers = #tpu.dot_dimension_numbers<[1], [0], [0], [1], [0, 0, 1, 1], [], []>} : vector<2x16xf32>, vector<16x128xf32>, vector<2x128xf32> -> vector<2x128xf32>
    %318 = vector.extract_strided_slice %317 {offsets = [0, 0], sizes = [2, 64], strides = [1, 1]} : vector<2x128xf32> to vector<2x64xf32>
    %319 = vector.extract_strided_slice %317 {offsets = [0, 64], sizes = [2, 64], strides = [1, 1]} : vector<2x128xf32> to vector<2x64xf32>
    %320 = vector.shape_cast %78 : vector<2x1xi1> to vector<2x1xi1>
    %321 = vector.broadcast %320 : vector<2x1xi1> to vector<2x64xi1>
    %322 = arith.select %321, %318, %319 : vector<2x64xi1>, vector<2x64xf32>
    %323 = arith.addf %316, %322 : vector<2x64xf32>
    %324 = vector.extract_strided_slice %323 {offsets = [0, 0], sizes = [2, 48], strides = [1, 1]} : vector<2x64xf32> to vector<2x48xf32>
    %325 = arith.negf %324 : vector<2x48xf32>
    %326 = math.exp %325 : vector<2x48xf32>
    %cst_80 = arith.constant 1.000000e+00 : f32
    %327 = vector.broadcast %cst_80 : f32 to vector<2x48xf32>
    %328 = arith.addf %327, %326 : vector<2x48xf32>
    %329 = arith.divf %327, %328 : vector<2x48xf32>
    %330 = vector.extract_strided_slice %323 {offsets = [0, 48], sizes = [2, 16], strides = [1, 1]} : vector<2x64xf32> to vector<2x16xf32>
    %331 = math.tanh %330 : vector<2x16xf32>
    %332 = vector.extract_strided_slice %329 {offsets = [0, 0], sizes = [2, 16], strides = [1, 1]} : vector<2x48xf32> to vector<2x16xf32>
    %333 = vector.extract_strided_slice %329 {offsets = [0, 16], sizes = [2, 16], strides = [1, 1]} : vector<2x48xf32> to vector<2x16xf32>
    %334 = vector.extract_strided_slice %329 {offsets = [0, 32], sizes = [2, 16], strides = [1, 1]} : vector<2x48xf32> to vector<2x16xf32>
    %335 = arith.mulf %333, %304 : vector<2x16xf32>
    %336 = arith.mulf %332, %331 : vector<2x16xf32>
    %337 = arith.addf %335, %336 : vector<2x16xf32>
    %338 = math.tanh %337 : vector<2x16xf32>
    %339 = arith.mulf %334, %338 : vector<2x16xf32>
    %340 = vector.broadcast %c5_i32 : i32 to vector<2x1xi32>
    %341 = vector.broadcast %311 : i32 to vector<2x1xi32>
    %342 = arith.select %78, %340, %341 : vector<2x1xi1>, vector<2x1xi32>
    %343 = vector.broadcast %1 : i32 to vector<2x1xi32>
    %344 = arith.cmpi slt, %342, %343 : vector<2x1xi32>
    %345 = arith.extui %344 : vector<2x1xi1> to vector<2x1xi32>
    %346 = arith.sitofp %345 : vector<2x1xi32> to vector<2x1xf32>
    %347 = vector.broadcast %346 : vector<2x1xf32> to vector<2x16xf32>
    %348 = arith.mulf %339, %347 : vector<2x16xf32>
    %349 = vector.broadcast %346 : vector<2x1xf32> to vector<2x16xf32>
    %350 = arith.mulf %337, %349 : vector<2x16xf32>
    %351 = vector.extract_strided_slice %348 {offsets = [0, 0], sizes = [1, 16], strides = [1, 1]} : vector<2x16xf32> to vector<1x16xf32>
    %352 = arith.index_cast %c5_i32 : i32 to index
    %c0_81 = arith.constant 0 : index
    %353 = vector.load %arg19[%352, %c0_81] : memref<16x32xf32, #tpu.memory_space<vmem>>, vector<1x16xf32>
    tpu.vector_store %arg19[%352, %c0_81], %351 {strides = array<i32>} : memref<16x32xf32, #tpu.memory_space<vmem>>, vector<1x16xf32>,
    %354 = vector.extract_strided_slice %348 {offsets = [1, 0], sizes = [1, 16], strides = [1, 1]} : vector<2x16xf32> to vector<1x16xf32>
    %355 = arith.index_cast %311 : i32 to index
    %c16_82 = arith.constant 16 : index
    %356 = vector.load %arg19[%355, %c16_82] : memref<16x32xf32, #tpu.memory_space<vmem>>, vector<1x16xf32>
    tpu.vector_store %arg19[%355, %c16_82], %354 {strides = array<i32>} : memref<16x32xf32, #tpu.memory_space<vmem>>, vector<1x16xf32>,
    %c6_i32 = arith.constant 6 : i32
    %c15_i32_83 = arith.constant 15 : i32
    %357 = arith.subi %c15_i32_83, %c6_i32 : i32
    %358 = arith.index_cast %c6_i32 : i32 to index
    %c0_84 = arith.constant 0 : index
    %359 = vector.load %arg18[%358, %c0_84] : memref<16x128xf32, #tpu.memory_space<vmem>>, vector<1x64xf32>
    %360 = arith.index_cast %357 : i32 to index
    %c64_85 = arith.constant 64 : index
    %361 = vector.load %arg18[%360, %c64_85] : memref<16x128xf32, #tpu.memory_space<vmem>>, vector<1x64xf32>
    %362 = tpu.concatenate %359, %361 in 0 : vector<1x64xf32>, vector<1x64xf32> -> vector<2x64xf32>
    %cst_86 = arith.constant dense<0.000000e+00> : vector<2x128xf32>
    %363 = tpu.matmul %348, %75, %cst_86 {dimension_numbers = #tpu.dot_dimension_numbers<[1], [0], [0], [1], [0, 0, 1, 1], [], []>} : vector<2x16xf32>, vector<16x128xf32>, vector<2x128xf32> -> vector<2x128xf32>
    %364 = vector.extract_strided_slice %363 {offsets = [0, 0], sizes = [2, 64], strides = [1, 1]} : vector<2x128xf32> to vector<2x64xf32>
    %365 = vector.extract_strided_slice %363 {offsets = [0, 64], sizes = [2, 64], strides = [1, 1]} : vector<2x128xf32> to vector<2x64xf32>
    %366 = vector.shape_cast %78 : vector<2x1xi1> to vector<2x1xi1>
    %367 = vector.broadcast %366 : vector<2x1xi1> to vector<2x64xi1>
    %368 = arith.select %367, %364, %365 : vector<2x64xi1>, vector<2x64xf32>
    %369 = arith.addf %362, %368 : vector<2x64xf32>
    %370 = vector.extract_strided_slice %369 {offsets = [0, 0], sizes = [2, 48], strides = [1, 1]} : vector<2x64xf32> to vector<2x48xf32>
    %371 = arith.negf %370 : vector<2x48xf32>
    %372 = math.exp %371 : vector<2x48xf32>
    %cst_87 = arith.constant 1.000000e+00 : f32
    %373 = vector.broadcast %cst_87 : f32 to vector<2x48xf32>
    %374 = arith.addf %373, %372 : vector<2x48xf32>
    %375 = arith.divf %373, %374 : vector<2x48xf32>
    %376 = vector.extract_strided_slice %369 {offsets = [0, 48], sizes = [2, 16], strides = [1, 1]} : vector<2x64xf32> to vector<2x16xf32>
    %377 = math.tanh %376 : vector<2x16xf32>
    %378 = vector.extract_strided_slice %375 {offsets = [0, 0], sizes = [2, 16], strides = [1, 1]} : vector<2x48xf32> to vector<2x16xf32>
    %379 = vector.extract_strided_slice %375 {offsets = [0, 16], sizes = [2, 16], strides = [1, 1]} : vector<2x48xf32> to vector<2x16xf32>
    %380 = vector.extract_strided_slice %375 {offsets = [0, 32], sizes = [2, 16], strides = [1, 1]} : vector<2x48xf32> to vector<2x16xf32>
    %381 = arith.mulf %379, %350 : vector<2x16xf32>
    %382 = arith.mulf %378, %377 : vector<2x16xf32>
    %383 = arith.addf %381, %382 : vector<2x16xf32>
    %384 = math.tanh %383 : vector<2x16xf32>
    %385 = arith.mulf %380, %384 : vector<2x16xf32>
    %386 = vector.broadcast %c6_i32 : i32 to vector<2x1xi32>
    %387 = vector.broadcast %357 : i32 to vector<2x1xi32>
    %388 = arith.select %78, %386, %387 : vector<2x1xi1>, vector<2x1xi32>
    %389 = vector.broadcast %1 : i32 to vector<2x1xi32>
    %390 = arith.cmpi slt, %388, %389 : vector<2x1xi32>
    %391 = arith.extui %390 : vector<2x1xi1> to vector<2x1xi32>
    %392 = arith.sitofp %391 : vector<2x1xi32> to vector<2x1xf32>
    %393 = vector.broadcast %392 : vector<2x1xf32> to vector<2x16xf32>
    %394 = arith.mulf %385, %393 : vector<2x16xf32>
    %395 = vector.broadcast %392 : vector<2x1xf32> to vector<2x16xf32>
    %396 = arith.mulf %383, %395 : vector<2x16xf32>
    %397 = vector.extract_strided_slice %394 {offsets = [0, 0], sizes = [1, 16], strides = [1, 1]} : vector<2x16xf32> to vector<1x16xf32>
    %398 = arith.index_cast %c6_i32 : i32 to index
    %c0_88 = arith.constant 0 : index
    %399 = vector.load %arg19[%398, %c0_88] : memref<16x32xf32, #tpu.memory_space<vmem>>, vector<1x16xf32>
    tpu.vector_store %arg19[%398, %c0_88], %397 {strides = array<i32>} : memref<16x32xf32, #tpu.memory_space<vmem>>, vector<1x16xf32>,
    %400 = vector.extract_strided_slice %394 {offsets = [1, 0], sizes = [1, 16], strides = [1, 1]} : vector<2x16xf32> to vector<1x16xf32>
    %401 = arith.index_cast %357 : i32 to index
    %c16_89 = arith.constant 16 : index
    %402 = vector.load %arg19[%401, %c16_89] : memref<16x32xf32, #tpu.memory_space<vmem>>, vector<1x16xf32>
    tpu.vector_store %arg19[%401, %c16_89], %400 {strides = array<i32>} : memref<16x32xf32, #tpu.memory_space<vmem>>, vector<1x16xf32>,
    %c7_i32 = arith.constant 7 : i32
    %c15_i32_90 = arith.constant 15 : i32
    %403 = arith.subi %c15_i32_90, %c7_i32 : i32
    %404 = arith.index_cast %c7_i32 : i32 to index
    %c0_91 = arith.constant 0 : index
    %405 = vector.load %arg18[%404, %c0_91] : memref<16x128xf32, #tpu.memory_space<vmem>>, vector<1x64xf32>
    %406 = arith.index_cast %403 : i32 to index
    %c64_92 = arith.constant 64 : index
    %407 = vector.load %arg18[%406, %c64_92] : memref<16x128xf32, #tpu.memory_space<vmem>>, vector<1x64xf32>
    %408 = tpu.concatenate %405, %407 in 0 : vector<1x64xf32>, vector<1x64xf32> -> vector<2x64xf32>
    %cst_93 = arith.constant dense<0.000000e+00> : vector<2x128xf32>
    %409 = tpu.matmul %394, %75, %cst_93 {dimension_numbers = #tpu.dot_dimension_numbers<[1], [0], [0], [1], [0, 0, 1, 1], [], []>} : vector<2x16xf32>, vector<16x128xf32>, vector<2x128xf32> -> vector<2x128xf32>
    %410 = vector.extract_strided_slice %409 {offsets = [0, 0], sizes = [2, 64], strides = [1, 1]} : vector<2x128xf32> to vector<2x64xf32>
    %411 = vector.extract_strided_slice %409 {offsets = [0, 64], sizes = [2, 64], strides = [1, 1]} : vector<2x128xf32> to vector<2x64xf32>
    %412 = vector.shape_cast %78 : vector<2x1xi1> to vector<2x1xi1>
    %413 = vector.broadcast %412 : vector<2x1xi1> to vector<2x64xi1>
    %414 = arith.select %413, %410, %411 : vector<2x64xi1>, vector<2x64xf32>
    %415 = arith.addf %408, %414 : vector<2x64xf32>
    %416 = vector.extract_strided_slice %415 {offsets = [0, 0], sizes = [2, 48], strides = [1, 1]} : vector<2x64xf32> to vector<2x48xf32>
    %417 = arith.negf %416 : vector<2x48xf32>
    %418 = math.exp %417 : vector<2x48xf32>
    %cst_94 = arith.constant 1.000000e+00 : f32
    %419 = vector.broadcast %cst_94 : f32 to vector<2x48xf32>
    %420 = arith.addf %419, %418 : vector<2x48xf32>
    %421 = arith.divf %419, %420 : vector<2x48xf32>
    %422 = vector.extract_strided_slice %415 {offsets = [0, 48], sizes = [2, 16], strides = [1, 1]} : vector<2x64xf32> to vector<2x16xf32>
    %423 = math.tanh %422 : vector<2x16xf32>
    %424 = vector.extract_strided_slice %421 {offsets = [0, 0], sizes = [2, 16], strides = [1, 1]} : vector<2x48xf32> to vector<2x16xf32>
    %425 = vector.extract_strided_slice %421 {offsets = [0, 16], sizes = [2, 16], strides = [1, 1]} : vector<2x48xf32> to vector<2x16xf32>
    %426 = vector.extract_strided_slice %421 {offsets = [0, 32], sizes = [2, 16], strides = [1, 1]} : vector<2x48xf32> to vector<2x16xf32>
    %427 = arith.mulf %425, %396 : vector<2x16xf32>
    %428 = arith.mulf %424, %423 : vector<2x16xf32>
    %429 = arith.addf %427, %428 : vector<2x16xf32>
    %430 = math.tanh %429 : vector<2x16xf32>
    %431 = arith.mulf %426, %430 : vector<2x16xf32>
    %432 = vector.broadcast %c7_i32 : i32 to vector<2x1xi32>
    %433 = vector.broadcast %403 : i32 to vector<2x1xi32>
    %434 = arith.select %78, %432, %433 : vector<2x1xi1>, vector<2x1xi32>
    %435 = vector.broadcast %1 : i32 to vector<2x1xi32>
    %436 = arith.cmpi slt, %434, %435 : vector<2x1xi32>
    %437 = arith.extui %436 : vector<2x1xi1> to vector<2x1xi32>
    %438 = arith.sitofp %437 : vector<2x1xi32> to vector<2x1xf32>
    %439 = vector.broadcast %438 : vector<2x1xf32> to vector<2x16xf32>
    %440 = arith.mulf %431, %439 : vector<2x16xf32>
    %441 = vector.broadcast %438 : vector<2x1xf32> to vector<2x16xf32>
    %442 = arith.mulf %429, %441 : vector<2x16xf32>
    %443 = vector.extract_strided_slice %440 {offsets = [0, 0], sizes = [1, 16], strides = [1, 1]} : vector<2x16xf32> to vector<1x16xf32>
    %444 = arith.index_cast %c7_i32 : i32 to index
    %c0_95 = arith.constant 0 : index
    %445 = vector.load %arg19[%444, %c0_95] : memref<16x32xf32, #tpu.memory_space<vmem>>, vector<1x16xf32>
    tpu.vector_store %arg19[%444, %c0_95], %443 {strides = array<i32>} : memref<16x32xf32, #tpu.memory_space<vmem>>, vector<1x16xf32>,
    %446 = vector.extract_strided_slice %440 {offsets = [1, 0], sizes = [1, 16], strides = [1, 1]} : vector<2x16xf32> to vector<1x16xf32>
    %447 = arith.index_cast %403 : i32 to index
    %c16_96 = arith.constant 16 : index
    %448 = vector.load %arg19[%447, %c16_96] : memref<16x32xf32, #tpu.memory_space<vmem>>, vector<1x16xf32>
    tpu.vector_store %arg19[%447, %c16_96], %446 {strides = array<i32>} : memref<16x32xf32, #tpu.memory_space<vmem>>, vector<1x16xf32>,
    %c8_i32 = arith.constant 8 : i32
    %c15_i32_97 = arith.constant 15 : i32
    %449 = arith.subi %c15_i32_97, %c8_i32 : i32
    %450 = arith.index_cast %c8_i32 : i32 to index
    %c0_98 = arith.constant 0 : index
    %451 = vector.load %arg18[%450, %c0_98] : memref<16x128xf32, #tpu.memory_space<vmem>>, vector<1x64xf32>
    %452 = arith.index_cast %449 : i32 to index
    %c64_99 = arith.constant 64 : index
    %453 = vector.load %arg18[%452, %c64_99] : memref<16x128xf32, #tpu.memory_space<vmem>>, vector<1x64xf32>
    %454 = tpu.concatenate %451, %453 in 0 : vector<1x64xf32>, vector<1x64xf32> -> vector<2x64xf32>
    %cst_100 = arith.constant dense<0.000000e+00> : vector<2x128xf32>
    %455 = tpu.matmul %440, %75, %cst_100 {dimension_numbers = #tpu.dot_dimension_numbers<[1], [0], [0], [1], [0, 0, 1, 1], [], []>} : vector<2x16xf32>, vector<16x128xf32>, vector<2x128xf32> -> vector<2x128xf32>
    %456 = vector.extract_strided_slice %455 {offsets = [0, 0], sizes = [2, 64], strides = [1, 1]} : vector<2x128xf32> to vector<2x64xf32>
    %457 = vector.extract_strided_slice %455 {offsets = [0, 64], sizes = [2, 64], strides = [1, 1]} : vector<2x128xf32> to vector<2x64xf32>
    %458 = vector.shape_cast %78 : vector<2x1xi1> to vector<2x1xi1>
    %459 = vector.broadcast %458 : vector<2x1xi1> to vector<2x64xi1>
    %460 = arith.select %459, %456, %457 : vector<2x64xi1>, vector<2x64xf32>
    %461 = arith.addf %454, %460 : vector<2x64xf32>
    %462 = vector.extract_strided_slice %461 {offsets = [0, 0], sizes = [2, 48], strides = [1, 1]} : vector<2x64xf32> to vector<2x48xf32>
    %463 = arith.negf %462 : vector<2x48xf32>
    %464 = math.exp %463 : vector<2x48xf32>
    %cst_101 = arith.constant 1.000000e+00 : f32
    %465 = vector.broadcast %cst_101 : f32 to vector<2x48xf32>
    %466 = arith.addf %465, %464 : vector<2x48xf32>
    %467 = arith.divf %465, %466 : vector<2x48xf32>
    %468 = vector.extract_strided_slice %461 {offsets = [0, 48], sizes = [2, 16], strides = [1, 1]} : vector<2x64xf32> to vector<2x16xf32>
    %469 = math.tanh %468 : vector<2x16xf32>
    %470 = vector.extract_strided_slice %467 {offsets = [0, 0], sizes = [2, 16], strides = [1, 1]} : vector<2x48xf32> to vector<2x16xf32>
    %471 = vector.extract_strided_slice %467 {offsets = [0, 16], sizes = [2, 16], strides = [1, 1]} : vector<2x48xf32> to vector<2x16xf32>
    %472 = vector.extract_strided_slice %467 {offsets = [0, 32], sizes = [2, 16], strides = [1, 1]} : vector<2x48xf32> to vector<2x16xf32>
    %473 = arith.mulf %471, %442 : vector<2x16xf32>
    %474 = arith.mulf %470, %469 : vector<2x16xf32>
    %475 = arith.addf %473, %474 : vector<2x16xf32>
    %476 = math.tanh %475 : vector<2x16xf32>
    %477 = arith.mulf %472, %476 : vector<2x16xf32>
    %478 = vector.broadcast %c8_i32 : i32 to vector<2x1xi32>
    %479 = vector.broadcast %449 : i32 to vector<2x1xi32>
    %480 = arith.select %78, %478, %479 : vector<2x1xi1>, vector<2x1xi32>
    %481 = vector.broadcast %1 : i32 to vector<2x1xi32>
    %482 = arith.cmpi slt, %480, %481 : vector<2x1xi32>
    %483 = arith.extui %482 : vector<2x1xi1> to vector<2x1xi32>
    %484 = arith.sitofp %483 : vector<2x1xi32> to vector<2x1xf32>
    %485 = vector.broadcast %484 : vector<2x1xf32> to vector<2x16xf32>
    %486 = arith.mulf %477, %485 : vector<2x16xf32>
    %487 = vector.broadcast %484 : vector<2x1xf32> to vector<2x16xf32>
    %488 = arith.mulf %475, %487 : vector<2x16xf32>
    %489 = vector.extract_strided_slice %486 {offsets = [0, 0], sizes = [1, 16], strides = [1, 1]} : vector<2x16xf32> to vector<1x16xf32>
    %490 = arith.index_cast %c8_i32 : i32 to index
    %c0_102 = arith.constant 0 : index
    %491 = vector.load %arg19[%490, %c0_102] : memref<16x32xf32, #tpu.memory_space<vmem>>, vector<1x16xf32>
    tpu.vector_store %arg19[%490, %c0_102], %489 {strides = array<i32>} : memref<16x32xf32, #tpu.memory_space<vmem>>, vector<1x16xf32>,
    %492 = vector.extract_strided_slice %486 {offsets = [1, 0], sizes = [1, 16], strides = [1, 1]} : vector<2x16xf32> to vector<1x16xf32>
    %493 = arith.index_cast %449 : i32 to index
    %c16_103 = arith.constant 16 : index
    %494 = vector.load %arg19[%493, %c16_103] : memref<16x32xf32, #tpu.memory_space<vmem>>, vector<1x16xf32>
    tpu.vector_store %arg19[%493, %c16_103], %492 {strides = array<i32>} : memref<16x32xf32, #tpu.memory_space<vmem>>, vector<1x16xf32>,
    %c9_i32 = arith.constant 9 : i32
    %c15_i32_104 = arith.constant 15 : i32
    %495 = arith.subi %c15_i32_104, %c9_i32 : i32
    %496 = arith.index_cast %c9_i32 : i32 to index
    %c0_105 = arith.constant 0 : index
    %497 = vector.load %arg18[%496, %c0_105] : memref<16x128xf32, #tpu.memory_space<vmem>>, vector<1x64xf32>
    %498 = arith.index_cast %495 : i32 to index
    %c64_106 = arith.constant 64 : index
    %499 = vector.load %arg18[%498, %c64_106] : memref<16x128xf32, #tpu.memory_space<vmem>>, vector<1x64xf32>
    %500 = tpu.concatenate %497, %499 in 0 : vector<1x64xf32>, vector<1x64xf32> -> vector<2x64xf32>
    %cst_107 = arith.constant dense<0.000000e+00> : vector<2x128xf32>
    %501 = tpu.matmul %486, %75, %cst_107 {dimension_numbers = #tpu.dot_dimension_numbers<[1], [0], [0], [1], [0, 0, 1, 1], [], []>} : vector<2x16xf32>, vector<16x128xf32>, vector<2x128xf32> -> vector<2x128xf32>
    %502 = vector.extract_strided_slice %501 {offsets = [0, 0], sizes = [2, 64], strides = [1, 1]} : vector<2x128xf32> to vector<2x64xf32>
    %503 = vector.extract_strided_slice %501 {offsets = [0, 64], sizes = [2, 64], strides = [1, 1]} : vector<2x128xf32> to vector<2x64xf32>
    %504 = vector.shape_cast %78 : vector<2x1xi1> to vector<2x1xi1>
    %505 = vector.broadcast %504 : vector<2x1xi1> to vector<2x64xi1>
    %506 = arith.select %505, %502, %503 : vector<2x64xi1>, vector<2x64xf32>
    %507 = arith.addf %500, %506 : vector<2x64xf32>
    %508 = vector.extract_strided_slice %507 {offsets = [0, 0], sizes = [2, 48], strides = [1, 1]} : vector<2x64xf32> to vector<2x48xf32>
    %509 = arith.negf %508 : vector<2x48xf32>
    %510 = math.exp %509 : vector<2x48xf32>
    %cst_108 = arith.constant 1.000000e+00 : f32
    %511 = vector.broadcast %cst_108 : f32 to vector<2x48xf32>
    %512 = arith.addf %511, %510 : vector<2x48xf32>
    %513 = arith.divf %511, %512 : vector<2x48xf32>
    %514 = vector.extract_strided_slice %507 {offsets = [0, 48], sizes = [2, 16], strides = [1, 1]} : vector<2x64xf32> to vector<2x16xf32>
    %515 = math.tanh %514 : vector<2x16xf32>
    %516 = vector.extract_strided_slice %513 {offsets = [0, 0], sizes = [2, 16], strides = [1, 1]} : vector<2x48xf32> to vector<2x16xf32>
    %517 = vector.extract_strided_slice %513 {offsets = [0, 16], sizes = [2, 16], strides = [1, 1]} : vector<2x48xf32> to vector<2x16xf32>
    %518 = vector.extract_strided_slice %513 {offsets = [0, 32], sizes = [2, 16], strides = [1, 1]} : vector<2x48xf32> to vector<2x16xf32>
    %519 = arith.mulf %517, %488 : vector<2x16xf32>
    %520 = arith.mulf %516, %515 : vector<2x16xf32>
    %521 = arith.addf %519, %520 : vector<2x16xf32>
    %522 = math.tanh %521 : vector<2x16xf32>
    %523 = arith.mulf %518, %522 : vector<2x16xf32>
    %524 = vector.broadcast %c9_i32 : i32 to vector<2x1xi32>
    %525 = vector.broadcast %495 : i32 to vector<2x1xi32>
    %526 = arith.select %78, %524, %525 : vector<2x1xi1>, vector<2x1xi32>
    %527 = vector.broadcast %1 : i32 to vector<2x1xi32>
    %528 = arith.cmpi slt, %526, %527 : vector<2x1xi32>
    %529 = arith.extui %528 : vector<2x1xi1> to vector<2x1xi32>
    %530 = arith.sitofp %529 : vector<2x1xi32> to vector<2x1xf32>
    %531 = vector.broadcast %530 : vector<2x1xf32> to vector<2x16xf32>
    %532 = arith.mulf %523, %531 : vector<2x16xf32>
    %533 = vector.broadcast %530 : vector<2x1xf32> to vector<2x16xf32>
    %534 = arith.mulf %521, %533 : vector<2x16xf32>
    %535 = vector.extract_strided_slice %532 {offsets = [0, 0], sizes = [1, 16], strides = [1, 1]} : vector<2x16xf32> to vector<1x16xf32>
    %536 = arith.index_cast %c9_i32 : i32 to index
    %c0_109 = arith.constant 0 : index
    %537 = vector.load %arg19[%536, %c0_109] : memref<16x32xf32, #tpu.memory_space<vmem>>, vector<1x16xf32>
    tpu.vector_store %arg19[%536, %c0_109], %535 {strides = array<i32>} : memref<16x32xf32, #tpu.memory_space<vmem>>, vector<1x16xf32>,
    %538 = vector.extract_strided_slice %532 {offsets = [1, 0], sizes = [1, 16], strides = [1, 1]} : vector<2x16xf32> to vector<1x16xf32>
    %539 = arith.index_cast %495 : i32 to index
    %c16_110 = arith.constant 16 : index
    %540 = vector.load %arg19[%539, %c16_110] : memref<16x32xf32, #tpu.memory_space<vmem>>, vector<1x16xf32>
    tpu.vector_store %arg19[%539, %c16_110], %538 {strides = array<i32>} : memref<16x32xf32, #tpu.memory_space<vmem>>, vector<1x16xf32>,
    %c10_i32 = arith.constant 10 : i32
    %c15_i32_111 = arith.constant 15 : i32
    %541 = arith.subi %c15_i32_111, %c10_i32 : i32
    %542 = arith.index_cast %c10_i32 : i32 to index
    %c0_112 = arith.constant 0 : index
    %543 = vector.load %arg18[%542, %c0_112] : memref<16x128xf32, #tpu.memory_space<vmem>>, vector<1x64xf32>
    %544 = arith.index_cast %541 : i32 to index
    %c64_113 = arith.constant 64 : index
    %545 = vector.load %arg18[%544, %c64_113] : memref<16x128xf32, #tpu.memory_space<vmem>>, vector<1x64xf32>
    %546 = tpu.concatenate %543, %545 in 0 : vector<1x64xf32>, vector<1x64xf32> -> vector<2x64xf32>
    %cst_114 = arith.constant dense<0.000000e+00> : vector<2x128xf32>
    %547 = tpu.matmul %532, %75, %cst_114 {dimension_numbers = #tpu.dot_dimension_numbers<[1], [0], [0], [1], [0, 0, 1, 1], [], []>} : vector<2x16xf32>, vector<16x128xf32>, vector<2x128xf32> -> vector<2x128xf32>
    %548 = vector.extract_strided_slice %547 {offsets = [0, 0], sizes = [2, 64], strides = [1, 1]} : vector<2x128xf32> to vector<2x64xf32>
    %549 = vector.extract_strided_slice %547 {offsets = [0, 64], sizes = [2, 64], strides = [1, 1]} : vector<2x128xf32> to vector<2x64xf32>
    %550 = vector.shape_cast %78 : vector<2x1xi1> to vector<2x1xi1>
    %551 = vector.broadcast %550 : vector<2x1xi1> to vector<2x64xi1>
    %552 = arith.select %551, %548, %549 : vector<2x64xi1>, vector<2x64xf32>
    %553 = arith.addf %546, %552 : vector<2x64xf32>
    %554 = vector.extract_strided_slice %553 {offsets = [0, 0], sizes = [2, 48], strides = [1, 1]} : vector<2x64xf32> to vector<2x48xf32>
    %555 = arith.negf %554 : vector<2x48xf32>
    %556 = math.exp %555 : vector<2x48xf32>
    %cst_115 = arith.constant 1.000000e+00 : f32
    %557 = vector.broadcast %cst_115 : f32 to vector<2x48xf32>
    %558 = arith.addf %557, %556 : vector<2x48xf32>
    %559 = arith.divf %557, %558 : vector<2x48xf32>
    %560 = vector.extract_strided_slice %553 {offsets = [0, 48], sizes = [2, 16], strides = [1, 1]} : vector<2x64xf32> to vector<2x16xf32>
    %561 = math.tanh %560 : vector<2x16xf32>
    %562 = vector.extract_strided_slice %559 {offsets = [0, 0], sizes = [2, 16], strides = [1, 1]} : vector<2x48xf32> to vector<2x16xf32>
    %563 = vector.extract_strided_slice %559 {offsets = [0, 16], sizes = [2, 16], strides = [1, 1]} : vector<2x48xf32> to vector<2x16xf32>
    %564 = vector.extract_strided_slice %559 {offsets = [0, 32], sizes = [2, 16], strides = [1, 1]} : vector<2x48xf32> to vector<2x16xf32>
    %565 = arith.mulf %563, %534 : vector<2x16xf32>
    %566 = arith.mulf %562, %561 : vector<2x16xf32>
    %567 = arith.addf %565, %566 : vector<2x16xf32>
    %568 = math.tanh %567 : vector<2x16xf32>
    %569 = arith.mulf %564, %568 : vector<2x16xf32>
    %570 = vector.broadcast %c10_i32 : i32 to vector<2x1xi32>
    %571 = vector.broadcast %541 : i32 to vector<2x1xi32>
    %572 = arith.select %78, %570, %571 : vector<2x1xi1>, vector<2x1xi32>
    %573 = vector.broadcast %1 : i32 to vector<2x1xi32>
    %574 = arith.cmpi slt, %572, %573 : vector<2x1xi32>
    %575 = arith.extui %574 : vector<2x1xi1> to vector<2x1xi32>
    %576 = arith.sitofp %575 : vector<2x1xi32> to vector<2x1xf32>
    %577 = vector.broadcast %576 : vector<2x1xf32> to vector<2x16xf32>
    %578 = arith.mulf %569, %577 : vector<2x16xf32>
    %579 = vector.broadcast %576 : vector<2x1xf32> to vector<2x16xf32>
    %580 = arith.mulf %567, %579 : vector<2x16xf32>
    %581 = vector.extract_strided_slice %578 {offsets = [0, 0], sizes = [1, 16], strides = [1, 1]} : vector<2x16xf32> to vector<1x16xf32>
    %582 = arith.index_cast %c10_i32 : i32 to index
    %c0_116 = arith.constant 0 : index
    %583 = vector.load %arg19[%582, %c0_116] : memref<16x32xf32, #tpu.memory_space<vmem>>, vector<1x16xf32>
    tpu.vector_store %arg19[%582, %c0_116], %581 {strides = array<i32>} : memref<16x32xf32, #tpu.memory_space<vmem>>, vector<1x16xf32>,
    %584 = vector.extract_strided_slice %578 {offsets = [1, 0], sizes = [1, 16], strides = [1, 1]} : vector<2x16xf32> to vector<1x16xf32>
    %585 = arith.index_cast %541 : i32 to index
    %c16_117 = arith.constant 16 : index
    %586 = vector.load %arg19[%585, %c16_117] : memref<16x32xf32, #tpu.memory_space<vmem>>, vector<1x16xf32>
    tpu.vector_store %arg19[%585, %c16_117], %584 {strides = array<i32>} : memref<16x32xf32, #tpu.memory_space<vmem>>, vector<1x16xf32>,
    %c11_i32 = arith.constant 11 : i32
    %c15_i32_118 = arith.constant 15 : i32
    %587 = arith.subi %c15_i32_118, %c11_i32 : i32
    %588 = arith.index_cast %c11_i32 : i32 to index
    %c0_119 = arith.constant 0 : index
    %589 = vector.load %arg18[%588, %c0_119] : memref<16x128xf32, #tpu.memory_space<vmem>>, vector<1x64xf32>
    %590 = arith.index_cast %587 : i32 to index
    %c64_120 = arith.constant 64 : index
    %591 = vector.load %arg18[%590, %c64_120] : memref<16x128xf32, #tpu.memory_space<vmem>>, vector<1x64xf32>
    %592 = tpu.concatenate %589, %591 in 0 : vector<1x64xf32>, vector<1x64xf32> -> vector<2x64xf32>
    %cst_121 = arith.constant dense<0.000000e+00> : vector<2x128xf32>
    %593 = tpu.matmul %578, %75, %cst_121 {dimension_numbers = #tpu.dot_dimension_numbers<[1], [0], [0], [1], [0, 0, 1, 1], [], []>} : vector<2x16xf32>, vector<16x128xf32>, vector<2x128xf32> -> vector<2x128xf32>
    %594 = vector.extract_strided_slice %593 {offsets = [0, 0], sizes = [2, 64], strides = [1, 1]} : vector<2x128xf32> to vector<2x64xf32>
    %595 = vector.extract_strided_slice %593 {offsets = [0, 64], sizes = [2, 64], strides = [1, 1]} : vector<2x128xf32> to vector<2x64xf32>
    %596 = vector.shape_cast %78 : vector<2x1xi1> to vector<2x1xi1>
    %597 = vector.broadcast %596 : vector<2x1xi1> to vector<2x64xi1>
    %598 = arith.select %597, %594, %595 : vector<2x64xi1>, vector<2x64xf32>
    %599 = arith.addf %592, %598 : vector<2x64xf32>
    %600 = vector.extract_strided_slice %599 {offsets = [0, 0], sizes = [2, 48], strides = [1, 1]} : vector<2x64xf32> to vector<2x48xf32>
    %601 = arith.negf %600 : vector<2x48xf32>
    %602 = math.exp %601 : vector<2x48xf32>
    %cst_122 = arith.constant 1.000000e+00 : f32
    %603 = vector.broadcast %cst_122 : f32 to vector<2x48xf32>
    %604 = arith.addf %603, %602 : vector<2x48xf32>
    %605 = arith.divf %603, %604 : vector<2x48xf32>
    %606 = vector.extract_strided_slice %599 {offsets = [0, 48], sizes = [2, 16], strides = [1, 1]} : vector<2x64xf32> to vector<2x16xf32>
    %607 = math.tanh %606 : vector<2x16xf32>
    %608 = vector.extract_strided_slice %605 {offsets = [0, 0], sizes = [2, 16], strides = [1, 1]} : vector<2x48xf32> to vector<2x16xf32>
    %609 = vector.extract_strided_slice %605 {offsets = [0, 16], sizes = [2, 16], strides = [1, 1]} : vector<2x48xf32> to vector<2x16xf32>
    %610 = vector.extract_strided_slice %605 {offsets = [0, 32], sizes = [2, 16], strides = [1, 1]} : vector<2x48xf32> to vector<2x16xf32>
    %611 = arith.mulf %609, %580 : vector<2x16xf32>
    %612 = arith.mulf %608, %607 : vector<2x16xf32>
    %613 = arith.addf %611, %612 : vector<2x16xf32>
    %614 = math.tanh %613 : vector<2x16xf32>
    %615 = arith.mulf %610, %614 : vector<2x16xf32>
    %616 = vector.broadcast %c11_i32 : i32 to vector<2x1xi32>
    %617 = vector.broadcast %587 : i32 to vector<2x1xi32>
    %618 = arith.select %78, %616, %617 : vector<2x1xi1>, vector<2x1xi32>
    %619 = vector.broadcast %1 : i32 to vector<2x1xi32>
    %620 = arith.cmpi slt, %618, %619 : vector<2x1xi32>
    %621 = arith.extui %620 : vector<2x1xi1> to vector<2x1xi32>
    %622 = arith.sitofp %621 : vector<2x1xi32> to vector<2x1xf32>
    %623 = vector.broadcast %622 : vector<2x1xf32> to vector<2x16xf32>
    %624 = arith.mulf %615, %623 : vector<2x16xf32>
    %625 = vector.broadcast %622 : vector<2x1xf32> to vector<2x16xf32>
    %626 = arith.mulf %613, %625 : vector<2x16xf32>
    %627 = vector.extract_strided_slice %624 {offsets = [0, 0], sizes = [1, 16], strides = [1, 1]} : vector<2x16xf32> to vector<1x16xf32>
    %628 = arith.index_cast %c11_i32 : i32 to index
    %c0_123 = arith.constant 0 : index
    %629 = vector.load %arg19[%628, %c0_123] : memref<16x32xf32, #tpu.memory_space<vmem>>, vector<1x16xf32>
    tpu.vector_store %arg19[%628, %c0_123], %627 {strides = array<i32>} : memref<16x32xf32, #tpu.memory_space<vmem>>, vector<1x16xf32>,
    %630 = vector.extract_strided_slice %624 {offsets = [1, 0], sizes = [1, 16], strides = [1, 1]} : vector<2x16xf32> to vector<1x16xf32>
    %631 = arith.index_cast %587 : i32 to index
    %c16_124 = arith.constant 16 : index
    %632 = vector.load %arg19[%631, %c16_124] : memref<16x32xf32, #tpu.memory_space<vmem>>, vector<1x16xf32>
    tpu.vector_store %arg19[%631, %c16_124], %630 {strides = array<i32>} : memref<16x32xf32, #tpu.memory_space<vmem>>, vector<1x16xf32>,
    %c12_i32 = arith.constant 12 : i32
    %c15_i32_125 = arith.constant 15 : i32
    %633 = arith.subi %c15_i32_125, %c12_i32 : i32
    %634 = arith.index_cast %c12_i32 : i32 to index
    %c0_126 = arith.constant 0 : index
    %635 = vector.load %arg18[%634, %c0_126] : memref<16x128xf32, #tpu.memory_space<vmem>>, vector<1x64xf32>
    %636 = arith.index_cast %633 : i32 to index
    %c64_127 = arith.constant 64 : index
    %637 = vector.load %arg18[%636, %c64_127] : memref<16x128xf32, #tpu.memory_space<vmem>>, vector<1x64xf32>
    %638 = tpu.concatenate %635, %637 in 0 : vector<1x64xf32>, vector<1x64xf32> -> vector<2x64xf32>
    %cst_128 = arith.constant dense<0.000000e+00> : vector<2x128xf32>
    %639 = tpu.matmul %624, %75, %cst_128 {dimension_numbers = #tpu.dot_dimension_numbers<[1], [0], [0], [1], [0, 0, 1, 1], [], []>} : vector<2x16xf32>, vector<16x128xf32>, vector<2x128xf32> -> vector<2x128xf32>
    %640 = vector.extract_strided_slice %639 {offsets = [0, 0], sizes = [2, 64], strides = [1, 1]} : vector<2x128xf32> to vector<2x64xf32>
    %641 = vector.extract_strided_slice %639 {offsets = [0, 64], sizes = [2, 64], strides = [1, 1]} : vector<2x128xf32> to vector<2x64xf32>
    %642 = vector.shape_cast %78 : vector<2x1xi1> to vector<2x1xi1>
    %643 = vector.broadcast %642 : vector<2x1xi1> to vector<2x64xi1>
    %644 = arith.select %643, %640, %641 : vector<2x64xi1>, vector<2x64xf32>
    %645 = arith.addf %638, %644 : vector<2x64xf32>
    %646 = vector.extract_strided_slice %645 {offsets = [0, 0], sizes = [2, 48], strides = [1, 1]} : vector<2x64xf32> to vector<2x48xf32>
    %647 = arith.negf %646 : vector<2x48xf32>
    %648 = math.exp %647 : vector<2x48xf32>
    %cst_129 = arith.constant 1.000000e+00 : f32
    %649 = vector.broadcast %cst_129 : f32 to vector<2x48xf32>
    %650 = arith.addf %649, %648 : vector<2x48xf32>
    %651 = arith.divf %649, %650 : vector<2x48xf32>
    %652 = vector.extract_strided_slice %645 {offsets = [0, 48], sizes = [2, 16], strides = [1, 1]} : vector<2x64xf32> to vector<2x16xf32>
    %653 = math.tanh %652 : vector<2x16xf32>
    %654 = vector.extract_strided_slice %651 {offsets = [0, 0], sizes = [2, 16], strides = [1, 1]} : vector<2x48xf32> to vector<2x16xf32>
    %655 = vector.extract_strided_slice %651 {offsets = [0, 16], sizes = [2, 16], strides = [1, 1]} : vector<2x48xf32> to vector<2x16xf32>
    %656 = vector.extract_strided_slice %651 {offsets = [0, 32], sizes = [2, 16], strides = [1, 1]} : vector<2x48xf32> to vector<2x16xf32>
    %657 = arith.mulf %655, %626 : vector<2x16xf32>
    %658 = arith.mulf %654, %653 : vector<2x16xf32>
    %659 = arith.addf %657, %658 : vector<2x16xf32>
    %660 = math.tanh %659 : vector<2x16xf32>
    %661 = arith.mulf %656, %660 : vector<2x16xf32>
    %662 = vector.broadcast %c12_i32 : i32 to vector<2x1xi32>
    %663 = vector.broadcast %633 : i32 to vector<2x1xi32>
    %664 = arith.select %78, %662, %663 : vector<2x1xi1>, vector<2x1xi32>
    %665 = vector.broadcast %1 : i32 to vector<2x1xi32>
    %666 = arith.cmpi slt, %664, %665 : vector<2x1xi32>
    %667 = arith.extui %666 : vector<2x1xi1> to vector<2x1xi32>
    %668 = arith.sitofp %667 : vector<2x1xi32> to vector<2x1xf32>
    %669 = vector.broadcast %668 : vector<2x1xf32> to vector<2x16xf32>
    %670 = arith.mulf %661, %669 : vector<2x16xf32>
    %671 = vector.broadcast %668 : vector<2x1xf32> to vector<2x16xf32>
    %672 = arith.mulf %659, %671 : vector<2x16xf32>
    %673 = vector.extract_strided_slice %670 {offsets = [0, 0], sizes = [1, 16], strides = [1, 1]} : vector<2x16xf32> to vector<1x16xf32>
    %674 = arith.index_cast %c12_i32 : i32 to index
    %c0_130 = arith.constant 0 : index
    %675 = vector.load %arg19[%674, %c0_130] : memref<16x32xf32, #tpu.memory_space<vmem>>, vector<1x16xf32>
    tpu.vector_store %arg19[%674, %c0_130], %673 {strides = array<i32>} : memref<16x32xf32, #tpu.memory_space<vmem>>, vector<1x16xf32>,
    %676 = vector.extract_strided_slice %670 {offsets = [1, 0], sizes = [1, 16], strides = [1, 1]} : vector<2x16xf32> to vector<1x16xf32>
    %677 = arith.index_cast %633 : i32 to index
    %c16_131 = arith.constant 16 : index
    %678 = vector.load %arg19[%677, %c16_131] : memref<16x32xf32, #tpu.memory_space<vmem>>, vector<1x16xf32>
    tpu.vector_store %arg19[%677, %c16_131], %676 {strides = array<i32>} : memref<16x32xf32, #tpu.memory_space<vmem>>, vector<1x16xf32>,
    %c13_i32 = arith.constant 13 : i32
    %c15_i32_132 = arith.constant 15 : i32
    %679 = arith.subi %c15_i32_132, %c13_i32 : i32
    %680 = arith.index_cast %c13_i32 : i32 to index
    %c0_133 = arith.constant 0 : index
    %681 = vector.load %arg18[%680, %c0_133] : memref<16x128xf32, #tpu.memory_space<vmem>>, vector<1x64xf32>
    %682 = arith.index_cast %679 : i32 to index
    %c64_134 = arith.constant 64 : index
    %683 = vector.load %arg18[%682, %c64_134] : memref<16x128xf32, #tpu.memory_space<vmem>>, vector<1x64xf32>
    %684 = tpu.concatenate %681, %683 in 0 : vector<1x64xf32>, vector<1x64xf32> -> vector<2x64xf32>
    %cst_135 = arith.constant dense<0.000000e+00> : vector<2x128xf32>
    %685 = tpu.matmul %670, %75, %cst_135 {dimension_numbers = #tpu.dot_dimension_numbers<[1], [0], [0], [1], [0, 0, 1, 1], [], []>} : vector<2x16xf32>, vector<16x128xf32>, vector<2x128xf32> -> vector<2x128xf32>
    %686 = vector.extract_strided_slice %685 {offsets = [0, 0], sizes = [2, 64], strides = [1, 1]} : vector<2x128xf32> to vector<2x64xf32>
    %687 = vector.extract_strided_slice %685 {offsets = [0, 64], sizes = [2, 64], strides = [1, 1]} : vector<2x128xf32> to vector<2x64xf32>
    %688 = vector.shape_cast %78 : vector<2x1xi1> to vector<2x1xi1>
    %689 = vector.broadcast %688 : vector<2x1xi1> to vector<2x64xi1>
    %690 = arith.select %689, %686, %687 : vector<2x64xi1>, vector<2x64xf32>
    %691 = arith.addf %684, %690 : vector<2x64xf32>
    %692 = vector.extract_strided_slice %691 {offsets = [0, 0], sizes = [2, 48], strides = [1, 1]} : vector<2x64xf32> to vector<2x48xf32>
    %693 = arith.negf %692 : vector<2x48xf32>
    %694 = math.exp %693 : vector<2x48xf32>
    %cst_136 = arith.constant 1.000000e+00 : f32
    %695 = vector.broadcast %cst_136 : f32 to vector<2x48xf32>
    %696 = arith.addf %695, %694 : vector<2x48xf32>
    %697 = arith.divf %695, %696 : vector<2x48xf32>
    %698 = vector.extract_strided_slice %691 {offsets = [0, 48], sizes = [2, 16], strides = [1, 1]} : vector<2x64xf32> to vector<2x16xf32>
    %699 = math.tanh %698 : vector<2x16xf32>
    %700 = vector.extract_strided_slice %697 {offsets = [0, 0], sizes = [2, 16], strides = [1, 1]} : vector<2x48xf32> to vector<2x16xf32>
    %701 = vector.extract_strided_slice %697 {offsets = [0, 16], sizes = [2, 16], strides = [1, 1]} : vector<2x48xf32> to vector<2x16xf32>
    %702 = vector.extract_strided_slice %697 {offsets = [0, 32], sizes = [2, 16], strides = [1, 1]} : vector<2x48xf32> to vector<2x16xf32>
    %703 = arith.mulf %701, %672 : vector<2x16xf32>
    %704 = arith.mulf %700, %699 : vector<2x16xf32>
    %705 = arith.addf %703, %704 : vector<2x16xf32>
    %706 = math.tanh %705 : vector<2x16xf32>
    %707 = arith.mulf %702, %706 : vector<2x16xf32>
    %708 = vector.broadcast %c13_i32 : i32 to vector<2x1xi32>
    %709 = vector.broadcast %679 : i32 to vector<2x1xi32>
    %710 = arith.select %78, %708, %709 : vector<2x1xi1>, vector<2x1xi32>
    %711 = vector.broadcast %1 : i32 to vector<2x1xi32>
    %712 = arith.cmpi slt, %710, %711 : vector<2x1xi32>
    %713 = arith.extui %712 : vector<2x1xi1> to vector<2x1xi32>
    %714 = arith.sitofp %713 : vector<2x1xi32> to vector<2x1xf32>
    %715 = vector.broadcast %714 : vector<2x1xf32> to vector<2x16xf32>
    %716 = arith.mulf %707, %715 : vector<2x16xf32>
    %717 = vector.broadcast %714 : vector<2x1xf32> to vector<2x16xf32>
    %718 = arith.mulf %705, %717 : vector<2x16xf32>
    %719 = vector.extract_strided_slice %716 {offsets = [0, 0], sizes = [1, 16], strides = [1, 1]} : vector<2x16xf32> to vector<1x16xf32>
    %720 = arith.index_cast %c13_i32 : i32 to index
    %c0_137 = arith.constant 0 : index
    %721 = vector.load %arg19[%720, %c0_137] : memref<16x32xf32, #tpu.memory_space<vmem>>, vector<1x16xf32>
    tpu.vector_store %arg19[%720, %c0_137], %719 {strides = array<i32>} : memref<16x32xf32, #tpu.memory_space<vmem>>, vector<1x16xf32>,
    %722 = vector.extract_strided_slice %716 {offsets = [1, 0], sizes = [1, 16], strides = [1, 1]} : vector<2x16xf32> to vector<1x16xf32>
    %723 = arith.index_cast %679 : i32 to index
    %c16_138 = arith.constant 16 : index
    %724 = vector.load %arg19[%723, %c16_138] : memref<16x32xf32, #tpu.memory_space<vmem>>, vector<1x16xf32>
    tpu.vector_store %arg19[%723, %c16_138], %722 {strides = array<i32>} : memref<16x32xf32, #tpu.memory_space<vmem>>, vector<1x16xf32>,
    %c14_i32 = arith.constant 14 : i32
    %c15_i32_139 = arith.constant 15 : i32
    %725 = arith.subi %c15_i32_139, %c14_i32 : i32
    %726 = arith.index_cast %c14_i32 : i32 to index
    %c0_140 = arith.constant 0 : index
    %727 = vector.load %arg18[%726, %c0_140] : memref<16x128xf32, #tpu.memory_space<vmem>>, vector<1x64xf32>
    %728 = arith.index_cast %725 : i32 to index
    %c64_141 = arith.constant 64 : index
    %729 = vector.load %arg18[%728, %c64_141] : memref<16x128xf32, #tpu.memory_space<vmem>>, vector<1x64xf32>
    %730 = tpu.concatenate %727, %729 in 0 : vector<1x64xf32>, vector<1x64xf32> -> vector<2x64xf32>
    %cst_142 = arith.constant dense<0.000000e+00> : vector<2x128xf32>
    %731 = tpu.matmul %716, %75, %cst_142 {dimension_numbers = #tpu.dot_dimension_numbers<[1], [0], [0], [1], [0, 0, 1, 1], [], []>} : vector<2x16xf32>, vector<16x128xf32>, vector<2x128xf32> -> vector<2x128xf32>
    %732 = vector.extract_strided_slice %731 {offsets = [0, 0], sizes = [2, 64], strides = [1, 1]} : vector<2x128xf32> to vector<2x64xf32>
    %733 = vector.extract_strided_slice %731 {offsets = [0, 64], sizes = [2, 64], strides = [1, 1]} : vector<2x128xf32> to vector<2x64xf32>
    %734 = vector.shape_cast %78 : vector<2x1xi1> to vector<2x1xi1>
    %735 = vector.broadcast %734 : vector<2x1xi1> to vector<2x64xi1>
    %736 = arith.select %735, %732, %733 : vector<2x64xi1>, vector<2x64xf32>
    %737 = arith.addf %730, %736 : vector<2x64xf32>
    %738 = vector.extract_strided_slice %737 {offsets = [0, 0], sizes = [2, 48], strides = [1, 1]} : vector<2x64xf32> to vector<2x48xf32>
    %739 = arith.negf %738 : vector<2x48xf32>
    %740 = math.exp %739 : vector<2x48xf32>
    %cst_143 = arith.constant 1.000000e+00 : f32
    %741 = vector.broadcast %cst_143 : f32 to vector<2x48xf32>
    %742 = arith.addf %741, %740 : vector<2x48xf32>
    %743 = arith.divf %741, %742 : vector<2x48xf32>
    %744 = vector.extract_strided_slice %737 {offsets = [0, 48], sizes = [2, 16], strides = [1, 1]} : vector<2x64xf32> to vector<2x16xf32>
    %745 = math.tanh %744 : vector<2x16xf32>
    %746 = vector.extract_strided_slice %743 {offsets = [0, 0], sizes = [2, 16], strides = [1, 1]} : vector<2x48xf32> to vector<2x16xf32>
    %747 = vector.extract_strided_slice %743 {offsets = [0, 16], sizes = [2, 16], strides = [1, 1]} : vector<2x48xf32> to vector<2x16xf32>
    %748 = vector.extract_strided_slice %743 {offsets = [0, 32], sizes = [2, 16], strides = [1, 1]} : vector<2x48xf32> to vector<2x16xf32>
    %749 = arith.mulf %747, %718 : vector<2x16xf32>
    %750 = arith.mulf %746, %745 : vector<2x16xf32>
    %751 = arith.addf %749, %750 : vector<2x16xf32>
    %752 = math.tanh %751 : vector<2x16xf32>
    %753 = arith.mulf %748, %752 : vector<2x16xf32>
    %754 = vector.broadcast %c14_i32 : i32 to vector<2x1xi32>
    %755 = vector.broadcast %725 : i32 to vector<2x1xi32>
    %756 = arith.select %78, %754, %755 : vector<2x1xi1>, vector<2x1xi32>
    %757 = vector.broadcast %1 : i32 to vector<2x1xi32>
    %758 = arith.cmpi slt, %756, %757 : vector<2x1xi32>
    %759 = arith.extui %758 : vector<2x1xi1> to vector<2x1xi32>
    %760 = arith.sitofp %759 : vector<2x1xi32> to vector<2x1xf32>
    %761 = vector.broadcast %760 : vector<2x1xf32> to vector<2x16xf32>
    %762 = arith.mulf %753, %761 : vector<2x16xf32>
    %763 = vector.broadcast %760 : vector<2x1xf32> to vector<2x16xf32>
    %764 = arith.mulf %751, %763 : vector<2x16xf32>
    %765 = vector.extract_strided_slice %762 {offsets = [0, 0], sizes = [1, 16], strides = [1, 1]} : vector<2x16xf32> to vector<1x16xf32>
    %766 = arith.index_cast %c14_i32 : i32 to index
    %c0_144 = arith.constant 0 : index
    %767 = vector.load %arg19[%766, %c0_144] : memref<16x32xf32, #tpu.memory_space<vmem>>, vector<1x16xf32>
    tpu.vector_store %arg19[%766, %c0_144], %765 {strides = array<i32>} : memref<16x32xf32, #tpu.memory_space<vmem>>, vector<1x16xf32>,
    %768 = vector.extract_strided_slice %762 {offsets = [1, 0], sizes = [1, 16], strides = [1, 1]} : vector<2x16xf32> to vector<1x16xf32>
    %769 = arith.index_cast %725 : i32 to index
    %c16_145 = arith.constant 16 : index
    %770 = vector.load %arg19[%769, %c16_145] : memref<16x32xf32, #tpu.memory_space<vmem>>, vector<1x16xf32>
    tpu.vector_store %arg19[%769, %c16_145], %768 {strides = array<i32>} : memref<16x32xf32, #tpu.memory_space<vmem>>, vector<1x16xf32>,
    %c15_i32_146 = arith.constant 15 : i32
    %c15_i32_147 = arith.constant 15 : i32
    %771 = arith.subi %c15_i32_147, %c15_i32_146 : i32
    %772 = arith.index_cast %c15_i32_146 : i32 to index
    %c0_148 = arith.constant 0 : index
    %773 = vector.load %arg18[%772, %c0_148] : memref<16x128xf32, #tpu.memory_space<vmem>>, vector<1x64xf32>
    %774 = arith.index_cast %771 : i32 to index
    %c64_149 = arith.constant 64 : index
    %775 = vector.load %arg18[%774, %c64_149] : memref<16x128xf32, #tpu.memory_space<vmem>>, vector<1x64xf32>
    %776 = tpu.concatenate %773, %775 in 0 : vector<1x64xf32>, vector<1x64xf32> -> vector<2x64xf32>
    %cst_150 = arith.constant dense<0.000000e+00> : vector<2x128xf32>
    %777 = tpu.matmul %762, %75, %cst_150 {dimension_numbers = #tpu.dot_dimension_numbers<[1], [0], [0], [1], [0, 0, 1, 1], [], []>} : vector<2x16xf32>, vector<16x128xf32>, vector<2x128xf32> -> vector<2x128xf32>
    %778 = vector.extract_strided_slice %777 {offsets = [0, 0], sizes = [2, 64], strides = [1, 1]} : vector<2x128xf32> to vector<2x64xf32>
    %779 = vector.extract_strided_slice %777 {offsets = [0, 64], sizes = [2, 64], strides = [1, 1]} : vector<2x128xf32> to vector<2x64xf32>
    %780 = vector.shape_cast %78 : vector<2x1xi1> to vector<2x1xi1>
    %781 = vector.broadcast %780 : vector<2x1xi1> to vector<2x64xi1>
    %782 = arith.select %781, %778, %779 : vector<2x64xi1>, vector<2x64xf32>
    %783 = arith.addf %776, %782 : vector<2x64xf32>
    %784 = vector.extract_strided_slice %783 {offsets = [0, 0], sizes = [2, 48], strides = [1, 1]} : vector<2x64xf32> to vector<2x48xf32>
    %785 = arith.negf %784 : vector<2x48xf32>
    %786 = math.exp %785 : vector<2x48xf32>
    %cst_151 = arith.constant 1.000000e+00 : f32
    %787 = vector.broadcast %cst_151 : f32 to vector<2x48xf32>
    %788 = arith.addf %787, %786 : vector<2x48xf32>
    %789 = arith.divf %787, %788 : vector<2x48xf32>
    %790 = vector.extract_strided_slice %783 {offsets = [0, 48], sizes = [2, 16], strides = [1, 1]} : vector<2x64xf32> to vector<2x16xf32>
    %791 = math.tanh %790 : vector<2x16xf32>
    %792 = vector.extract_strided_slice %789 {offsets = [0, 0], sizes = [2, 16], strides = [1, 1]} : vector<2x48xf32> to vector<2x16xf32>
    %793 = vector.extract_strided_slice %789 {offsets = [0, 16], sizes = [2, 16], strides = [1, 1]} : vector<2x48xf32> to vector<2x16xf32>
    %794 = vector.extract_strided_slice %789 {offsets = [0, 32], sizes = [2, 16], strides = [1, 1]} : vector<2x48xf32> to vector<2x16xf32>
    %795 = arith.mulf %793, %764 : vector<2x16xf32>
    %796 = arith.mulf %792, %791 : vector<2x16xf32>
    %797 = arith.addf %795, %796 : vector<2x16xf32>
    %798 = math.tanh %797 : vector<2x16xf32>
    %799 = arith.mulf %794, %798 : vector<2x16xf32>
    %800 = vector.broadcast %c15_i32_146 : i32 to vector<2x1xi32>
    %801 = vector.broadcast %771 : i32 to vector<2x1xi32>
    %802 = arith.select %78, %800, %801 : vector<2x1xi1>, vector<2x1xi32>
    %803 = vector.broadcast %1 : i32 to vector<2x1xi32>
    %804 = arith.cmpi slt, %802, %803 : vector<2x1xi32>
    %805 = arith.extui %804 : vector<2x1xi1> to vector<2x1xi32>
    %806 = arith.sitofp %805 : vector<2x1xi32> to vector<2x1xf32>
    %807 = vector.broadcast %806 : vector<2x1xf32> to vector<2x16xf32>
    %808 = arith.mulf %799, %807 : vector<2x16xf32>
    %809 = vector.broadcast %806 : vector<2x1xf32> to vector<2x16xf32>
    %810 = arith.mulf %797, %809 : vector<2x16xf32>
    %811 = vector.extract_strided_slice %808 {offsets = [0, 0], sizes = [1, 16], strides = [1, 1]} : vector<2x16xf32> to vector<1x16xf32>
    %812 = arith.index_cast %c15_i32_146 : i32 to index
    %c0_152 = arith.constant 0 : index
    %813 = vector.load %arg19[%812, %c0_152] : memref<16x32xf32, #tpu.memory_space<vmem>>, vector<1x16xf32>
    tpu.vector_store %arg19[%812, %c0_152], %811 {strides = array<i32>} : memref<16x32xf32, #tpu.memory_space<vmem>>, vector<1x16xf32>,
    %814 = vector.extract_strided_slice %808 {offsets = [1, 0], sizes = [1, 16], strides = [1, 1]} : vector<2x16xf32> to vector<1x16xf32>
    %815 = arith.index_cast %771 : i32 to index
    %c16_153 = arith.constant 16 : index
    %816 = vector.load %arg19[%815, %c16_153] : memref<16x32xf32, #tpu.memory_space<vmem>>, vector<1x16xf32>
    tpu.vector_store %arg19[%815, %c16_153], %814 {strides = array<i32>} : memref<16x32xf32, #tpu.memory_space<vmem>>, vector<1x16xf32>,
    %c16_i32 = arith.constant 16 : i32
    %c0_154 = arith.constant 0 : index
    %c0_155 = arith.constant 0 : index
    %817 = vector.load %arg19[%c0_154, %c0_155] : memref<16x32xf32, #tpu.memory_space<vmem>>, vector<16x32xf32>
    %c0_156 = arith.constant 0 : index
    %c0_157 = arith.constant 0 : index
    %818 = vector.load %arg14[%c0_156, %c0_157] : memref<32x1xf32, #tpu.memory_space<vmem>>, vector<32x1xf32>
    %cst_158 = arith.constant dense<0.000000e+00> : vector<16x1xf32>
    %819 = tpu.matmul %817, %818, %cst_158 {dimension_numbers = #tpu.dot_dimension_numbers<[1], [0], [0], [1], [0, 0, 1, 1], [], []>} : vector<16x32xf32>, vector<32x1xf32>, vector<16x1xf32> -> vector<16x1xf32>
    %c0_159 = arith.constant 0 : index
    %c0_160 = arith.constant 0 : index
    %820 = vector.load %arg15[%c0_159, %c0_160] : memref<1x1xf32, #tpu.memory_space<vmem>>, vector<1x1xf32>
    %821 = vector.broadcast %820 : vector<1x1xf32> to vector<16x1xf32>
    %822 = arith.addf %819, %821 : vector<16x1xf32>
    %c0_161 = arith.constant 0 : index
    %c0_162 = arith.constant 0 : index
    %c0_163 = arith.constant 0 : index
    %823 = vector.load %arg16[%c0_161, %c0_162, %c0_163] : memref<1x16x1xf32, #tpu.memory_space<vmem>>, vector<1x16x1xf32>
    %824 = vector.shape_cast %823 : vector<1x16x1xf32> to vector<16x1xf32>
    %825 = vector.shape_cast %822 : vector<16x1xf32> to vector<1x16x1xf32>
    tpu.vector_store %arg16[%c0_161, %c0_162, %c0_163], %825 {strides = array<i32>} : memref<1x16x1xf32, #tpu.memory_space<vmem>>, vector<1x16x1xf32>,
    return
  }
  func.func @transform_0(%arg0: i32, %arg1: memref<2xi32, #tpu.memory_space<smem>>) -> (i32, i32, i32) {
    %c0_i32 = arith.constant 0 : i32
    %c0_i32_0 = arith.constant 0 : i32
    %c0_i32_1 = arith.constant 0 : i32
    return %arg0, %c0_i32, %c0_i32_0 : i32, i32, i32
  }
  func.func @transform_1(%arg0: i32, %arg1: memref<2xi32, #tpu.memory_space<smem>>) -> (i32, i32, i32) {
    %c0_i32 = arith.constant 0 : i32
    %c0_i32_0 = arith.constant 0 : i32
    %c0_i32_1 = arith.constant 0 : i32
    return %arg0, %c0_i32, %c0_i32_0 : i32, i32, i32
  }
  func.func @transform_2(%arg0: i32, %arg1: memref<2xi32, #tpu.memory_space<smem>>) -> (i32, i32, i32) {
    %c0_i32 = arith.constant 0 : i32
    %c0_i32_0 = arith.constant 0 : i32
    %c0_i32_1 = arith.constant 0 : i32
    return %arg0, %c0_i32, %c0_i32_0 : i32, i32, i32
  }
  func.func @transform_3(%arg0: i32, %arg1: memref<2xi32, #tpu.memory_space<smem>>) -> (i32, i32) {
    %c0_i32 = arith.constant 0 : i32
    %c0_i32_0 = arith.constant 0 : i32
    %c0_i32_1 = arith.constant 0 : i32
    return %c0_i32, %c0_i32_0 : i32, i32
  }
  func.func @transform_4(%arg0: i32, %arg1: memref<2xi32, #tpu.memory_space<smem>>) -> (i32, i32) {
    %c0_i32 = arith.constant 0 : i32
    %c0_i32_0 = arith.constant 0 : i32
    %c0_i32_1 = arith.constant 0 : i32
    return %c0_i32, %c0_i32_0 : i32, i32
  }
  func.func @transform_5(%arg0: i32, %arg1: memref<2xi32, #tpu.memory_space<smem>>) -> (i32, i32) {
    %c0_i32 = arith.constant 0 : i32
    %c0_i32_0 = arith.constant 0 : i32
    %c0_i32_1 = arith.constant 0 : i32
    return %c0_i32, %c0_i32_0 : i32, i32
  }
  func.func @transform_6(%arg0: i32, %arg1: memref<2xi32, #tpu.memory_space<smem>>) -> (i32, i32) {
    %c0_i32 = arith.constant 0 : i32
    %c0_i32_0 = arith.constant 0 : i32
    %c0_i32_1 = arith.constant 0 : i32
    return %c0_i32, %c0_i32_0 : i32, i32
  }
  func.func @transform_7(%arg0: i32, %arg1: memref<2xi32, #tpu.memory_space<smem>>) -> (i32, i32) {
    %c0_i32 = arith.constant 0 : i32
    %c0_i32_0 = arith.constant 0 : i32
    %c0_i32_1 = arith.constant 0 : i32
    return %c0_i32, %c0_i32_0 : i32, i32
  }
  func.func @transform_8(%arg0: i32, %arg1: memref<2xi32, #tpu.memory_space<smem>>) -> (i32, i32) {
    %c0_i32 = arith.constant 0 : i32
    %c0_i32_0 = arith.constant 0 : i32
    %c0_i32_1 = arith.constant 0 : i32
    return %c0_i32, %c0_i32_0 : i32, i32
  }
  func.func @transform_9(%arg0: i32, %arg1: memref<2xi32, #tpu.memory_space<smem>>) -> (i32, i32) {
    %c0_i32 = arith.constant 0 : i32
    %c0_i32_0 = arith.constant 0 : i32
    %c0_i32_1 = arith.constant 0 : i32
    return %c0_i32, %c0_i32_0 : i32, i32
  }
  func.func @transform_10(%arg0: i32, %arg1: memref<2xi32, #tpu.memory_space<smem>>) -> (i32, i32) {
    %c0_i32 = arith.constant 0 : i32
    %c0_i32_0 = arith.constant 0 : i32
    %c0_i32_1 = arith.constant 0 : i32
    return %c0_i32, %c0_i32_0 : i32, i32
  }
  func.func @transform_11(%arg0: i32, %arg1: memref<2xi32, #tpu.memory_space<smem>>) -> (i32, i32) {
    %c0_i32 = arith.constant 0 : i32
    %c0_i32_0 = arith.constant 0 : i32
    %c0_i32_1 = arith.constant 0 : i32
    return %c0_i32, %c0_i32_0 : i32, i32
  }
  func.func @transform_12(%arg0: i32, %arg1: memref<2xi32, #tpu.memory_space<smem>>) -> (i32, i32) {
    %c0_i32 = arith.constant 0 : i32
    %c0_i32_0 = arith.constant 0 : i32
    %c0_i32_1 = arith.constant 0 : i32
    return %c0_i32, %c0_i32_0 : i32, i32
  }
  func.func @transform_13(%arg0: i32, %arg1: memref<2xi32, #tpu.memory_space<smem>>) -> (i32, i32) {
    %c0_i32 = arith.constant 0 : i32
    %c0_i32_0 = arith.constant 0 : i32
    %c0_i32_1 = arith.constant 0 : i32
    return %c0_i32, %c0_i32_0 : i32, i32
  }
  func.func @transform_14(%arg0: i32, %arg1: memref<2xi32, #tpu.memory_space<smem>>) -> (i32, i32, i32) {
    %c0_i32 = arith.constant 0 : i32
    %c0_i32_0 = arith.constant 0 : i32
    %c0_i32_1 = arith.constant 0 : i32
    return %arg0, %c0_i32, %c0_i32_0 : i32, i32, i32
  }
  func.func @transform_15(%arg0: i32, %arg1: memref<2xi32, #tpu.memory_space<smem>>) -> (i32, i32, i32) {
    %c0_i32 = arith.constant 0 : i32
    %c0_i32_0 = arith.constant 0 : i32
    %c0_i32_1 = arith.constant 0 : i32
    return %arg0, %c0_i32, %c0_i32_0 : i32, i32, i32
  }
}

</mosaic_0001>

<llo_original>
// kernel: dap_forward.1
$region0: #{dap_forward.1}
  #allocation0 [shape = 'u32[]', space=smem, size = 0x4, offset = 0x4, fixed_abs, tag = 'smem constant byte address 0x4 - core index']
  #allocation1 [shape = 'u32[144,128]{1,0:T(1,128)}', space=vmem, size = 0x12000, scoped, tag = 'internal scratch']
  #allocation2 [shape = 'f32[16,128]{1,0:T(8,128)}', space=vmem, size = 0x2000, scoped, tag = 'scratch operand']
  #allocation3 [shape = 'f32[16,32]{1,0:T(8,128)}', space=vmem, size = 0x2000, scoped, tag = 'scratch operand']
  #allocation4 [shape = 's32[1]{0}', space=sflag, size = 0x4, scoped, tag = 'scoped memory for dap_forward.1']
  #allocation5 [shape = 'u8[512]{0}', space=smem, size = 0x200, scoped, tag = 'prefetched SMEM operand 0']
  #allocation6 [shape = 'f32[1,1]{1,0:T(1,128)S(1)}', space=vmem, size = 0x200, scoped, tag = 'scoped memory for dap_forward.1']
  %s0 = inlined_call_operand.vmem [shape: s32[2], index: 0, kind: input, shape index: {}]
  %s1 = inlined_call_operand.vmem [shape: f32[2,16,64], index: 1, kind: input, shape index: {}]
  %s2 = inlined_call_operand.vmem [shape: f32[2,1,16], index: 2, kind: input, shape index: {}]
  %s3 = inlined_call_operand.vmem [shape: f32[2,1,16], index: 3, kind: input, shape index: {}]
  %s4 = inlined_call_operand.vmem [shape: f32[192,16], index: 4, kind: input, shape index: {}]
  %s5 = inlined_call_operand.vmem [shape: f32[1,16], index: 5, kind: input, shape index: {}]
  %s6 = inlined_call_operand.vmem [shape: f32[96,32], index: 6, kind: input, shape index: {}]
  %s7 = inlined_call_operand.vmem [shape: f32[96,32], index: 7, kind: input, shape index: {}]
  %s8 = inlined_call_operand.vmem [shape: f32[1,32], index: 8, kind: input, shape index: {}]
  %s9 = inlined_call_operand.vmem [shape: f32[1,32], index: 9, kind: input, shape index: {}]
  %s10 = inlined_call_operand.vmem [shape: f32[32,128], index: 10, kind: input, shape index: {}]
  %s11 = inlined_call_operand.vmem [shape: f32[16,128], index: 11, kind: input, shape index: {}]
  %s12 = inlined_call_operand.vmem [shape: f32[1,128], index: 12, kind: input, shape index: {}]
  %s13 = inlined_call_operand.vmem [shape: f32[32,1], index: 13, kind: input, shape index: {}]
  %s14 = inlined_call_operand.<no memory space> [shape: f32[1,1], index: 14, kind: input, shape index: {}]
  %s15 = inlined_call_operand.vmem [shape: f32[2,16,1], index: 15, kind: output, shape index: {0}]
  %s16 = inlined_call_operand.hbm [shape: f32[2,1,16], index: 16, kind: output, shape index: {1}]
  %17 = xla_tuple %s15, %s16
  %s18 = sld [smem:[#allocation0]]
  $region97: #{dap_forward.1} parent=0
    _
  %s20 = ssub.s32 1, %s18
  %s21 = scalar_select 0, %s20, %s18
  %s22 = sshll.u32 %s0, 4
  %s23 = int_to_ptr.vmem [resolvable:$true] %s22
  %25 = dma.vmem_to_smem %s23, 16, [#allocation5], [#allocation4]
  %v26 = vstv %s14
  %27 = vst [vmem:[#allocation6] sm:$0x1] %v26
  %28 = dma.done [#allocation4], 16
  %29 = sfence
  $region1: #{dap_forward.1} parent=0
    #allocation7 [shape = 'u8[1024]{0}', space=vmem, size = 0x400, scoped, tag = 'output window, operand 1']
    #allocation8 [shape = 's32[2]{0}', space=sflag, size = 0x8, scoped, tag = 'scoped memory for dap_forward.1']
    %30 = vsyncpa [#allocation8], 0
    %s31 = scalar_lea.sflag [#allocation8], 1
    %32 = vsyncpa %s31, 0
    loop: start=0, step=1, limit=4
    $region2: #{dap_forward.1} parent=1 // loop_pre_header
      _
    $region3: #{dap_forward.1} parent=1 // loop_header
      %s34 = sphi 0, %s38
      %p35 = scmp.ge.s32.totalorder %s34, 4
      %s44 = sphi 0, %s46
      %s47 = sphi 0, %s44
      %s48 = sphi 0, %s47
      %s64 = sphi 0, %s48
      %s70 = sphi 0, %s72
      %s73 = sphi 0, %s70
      %s74 = sphi 0, %s73
      %s90 = sphi 0, %s74
      %s96 = sphi 0, %s98
      %s99 = sphi 0, %s96
      %s100 = sphi 0, %s99
      %s116 = sphi 0, %s100
      %s120 = sphi 0, %s120
      %s122 = sphi 0, %s120
      %s123 = sphi 0, %s122
      %s137 = sphi 0, %s123
      %s141 = sphi 0, %s141
      %s143 = sphi 0, %s141
      %s144 = sphi 0, %s143
      %s158 = sphi 0, %s144
      %s162 = sphi 0, %s162
      %s164 = sphi 0, %s162
      %s165 = sphi 0, %s164
      %s179 = sphi 0, %s165
      %s183 = sphi 0, %s183
      %s185 = sphi 0, %s183
      %s186 = sphi 0, %s185
      %s200 = sphi 0, %s186
      %s204 = sphi 0, %s204
      %s206 = sphi 0, %s204
      %s207 = sphi 0, %s206
      %s221 = sphi 0, %s207
      %s225 = sphi 0, %s225
      %s227 = sphi 0, %s225
      %s228 = sphi 0, %s227
      %s242 = sphi 0, %s228
      %s246 = sphi 0, %s246
      %s248 = sphi 0, %s246
      %s249 = sphi 0, %s248
      %s263 = sphi 0, %s249
      %s267 = sphi 0, %s267
      %s269 = sphi 0, %s267
      %s270 = sphi 0, %s269
      %s284 = sphi 0, %s270
      %s288 = sphi 0, %s288
      %s290 = sphi 0, %s288
      %s291 = sphi 0, %s290
      %s305 = sphi 0, %s291
      %s309 = sphi 0, %s309
      %s311 = sphi 0, %s309
      %s312 = sphi 0, %s311
      %s326 = sphi 0, %s312
      %s330 = sphi 0, %s330
      %s332 = sphi 0, %s330
      %s333 = sphi 0, %s332
      %s347 = sphi 0, %s333
      %s353 = sphi 0, %s355
      %s356 = sphi 0, %s353
      %s357 = sphi 0, %s356
      %s373 = sphi 0, %s357
      %s379 = sphi 0, %s381
      %s382 = sphi 0, %s379
      %s383 = sphi 0, %s382
      %s399 = sphi 0, %s383
    $region4: #{dap_forward.1} parent=1 // loop_header_branch
      %37 = sbr.rel (%p35) target = $region8
    $region5: #{dap_forward.1} parent=1 // loop_body
      %s39 = ssub.s32 %s34, 1
      %s40 = ssub.s32 %s34, 2
      %s41 = sadd.s32 %s34, 1
      %s42 = ssub.s32 %s34, %s41
      %p43 = scmp.eq.s32.totalorder %s42, 0
      %s45 = sadd.s32 %s44, 1
      %s46 = scalar_select %p43, %s44, %s45
      %p49 = pneg %p43
      %p50 = scmp.eq.s32.totalorder %s34, 1
      %p51 = por %p49, %p50
      %p52 = scmp.ne.s32.totalorder %s44, %s47
      %p53 = scmp.eq.s32.totalorder %s34, 0
      %p54 = por %p52, %p53
      %p55 = scmp.ne.s32.totalorder %s44, %s47
      %p56 = scmp.eq.s32.totalorder %s39, 1
      %p57 = por %p55, %p56
      %p58 = scmp.ne.s32.totalorder %s47, %s48
      %p59 = scmp.eq.s32.totalorder %s39, 0
      %p60 = por %p58, %p59
      %p61 = scmp.ne.s32.totalorder %s47, %s48
      %p62 = scmp.eq.s32.totalorder %s40, 1
      %p63 = por %p61, %p62
      %p65 = scmp.ne.s32.totalorder %s48, %s64
      %p66 = scmp.eq.s32.totalorder %s40, 0
      %p67 = por %p65, %p66
      %s68 = ssub.s32 %s34, %s41
      %p69 = scmp.eq.s32.totalorder %s68, 0
      %s71 = sadd.s32 %s70, 1
      %s72 = scalar_select %p69, %s70, %s71
      %p75 = pneg %p69
      %p76 = scmp.eq.s32.totalorder %s34, 1
      %p77 = por %p75, %p76
      %p78 = scmp.ne.s32.totalorder %s70, %s73
      %p79 = scmp.eq.s32.totalorder %s34, 0
      %p80 = por %p78, %p79
      %p81 = scmp.ne.s32.totalorder %s70, %s73
      %p82 = scmp.eq.s32.totalorder %s39, 1
      %p83 = por %p81, %p82
      %p84 = scmp.ne.s32.totalorder %s73, %s74
      %p85 = scmp.eq.s32.totalorder %s39, 0
      %p86 = por %p84, %p85
      %p87 = scmp.ne.s32.totalorder %s73, %s74
      %p88 = scmp.eq.s32.totalorder %s40, 1
      %p89 = por %p87, %p88
      %p91 = scmp.ne.s32.totalorder %s74, %s90
      %p92 = scmp.eq.s32.totalorder %s40, 0
      %p93 = por %p91, %p92
      %s94 = ssub.s32 %s34, %s41
      %p95 = scmp.eq.s32.totalorder %s94, 0
      %s97 = sadd.s32 %s96, 1
      %s98 = scalar_select %p95, %s96, %s97
      %p101 = pneg %p95
      %p102 = scmp.eq.s32.totalorder %s34, 1
      %p103 = por %p101, %p102
      %p104 = scmp.ne.s32.totalorder %s96, %s99
      %p105 = scmp.eq.s32.totalorder %s34, 0
      %p106 = por %p104, %p105
      %p107 = scmp.ne.s32.totalorder %s96, %s99
      %p108 = scmp.eq.s32.totalorder %s39, 1
      %p109 = por %p107, %p108
      %p110 = scmp.ne.s32.totalorder %s99, %s100
      %p111 = scmp.eq.s32.totalorder %s39, 0
      %p112 = por %p110, %p111
      %p113 = scmp.ne.s32.totalorder %s99, %s100
      %p114 = scmp.eq.s32.totalorder %s40, 1
      %p115 = por %p113, %p114
      %p117 = scmp.ne.s32.totalorder %s100, %s116
      %p118 = scmp.eq.s32.totalorder %s40, 0
      %p119 = por %p117, %p118
      %s121 = sadd.s32 %s120, 1
      %p124 = scmp.eq.s32.totalorder %s34, 1
      %p125 = scmp.ne.s32.totalorder %s120, %s122
      %p126 = scmp.eq.s32.totalorder %s34, 0
      %p127 = por %p125, %p126
      %p128 = scmp.ne.s32.totalorder %s120, %s122
      %p129 = scmp.eq.s32.totalorder %s39, 1
      %p130 = por %p128, %p129
      %p131 = scmp.ne.s32.totalorder %s122, %s123
      %p132 = scmp.eq.s32.totalorder %s39, 0
      %p133 = por %p131, %p132
      %p134 = scmp.ne.s32.totalorder %s122, %s123
      %p135 = scmp.eq.s32.totalorder %s40, 1
      %p136 = por %p134, %p135
      %p138 = scmp.ne.s32.totalorder %s123, %s137
      %p139 = scmp.eq.s32.totalorder %s40, 0
      %p140 = por %p138, %p139
      %s142 = sadd.s32 %s141, 1
      %p145 = scmp.eq.s32.totalorder %s34, 1
      %p146 = scmp.ne.s32.totalorder %s141, %s143
      %p147 = scmp.eq.s32.totalorder %s34, 0
      %p148 = por %p146, %p147
      %p149 = scmp.ne.s32.totalorder %s141, %s143
      %p150 = scmp.eq.s32.totalorder %s39, 1
      %p151 = por %p149, %p150
      %p152 = scmp.ne.s32.totalorder %s143, %s144
      %p153 = scmp.eq.s32.totalorder %s39, 0
      %p154 = por %p152, %p153
      %p155 = scmp.ne.s32.totalorder %s143, %s144
      %p156 = scmp.eq.s32.totalorder %s40, 1
      %p157 = por %p155, %p156
      %p159 = scmp.ne.s32.totalorder %s144, %s158
      %p160 = scmp.eq.s32.totalorder %s40, 0
      %p161 = por %p159, %p160
      %s163 = sadd.s32 %s162, 1
      %p166 = scmp.eq.s32.totalorder %s34, 1
      %p167 = scmp.ne.s32.totalorder %s162, %s164
      %p168 = scmp.eq.s32.totalorder %s34, 0
      %p169 = por %p167, %p168
      %p170 = scmp.ne.s32.totalorder %s162, %s164
      %p171 = scmp.eq.s32.totalorder %s39, 1
      %p172 = por %p170, %p171
      %p173 = scmp.ne.s32.totalorder %s164, %s165
      %p174 = scmp.eq.s32.totalorder %s39, 0
      %p175 = por %p173, %p174
      %p176 = scmp.ne.s32.totalorder %s164, %s165
      %p177 = scmp.eq.s32.totalorder %s40, 1
      %p178 = por %p176, %p177
      %p180 = scmp.ne.s32.totalorder %s165, %s179
      %p181 = scmp.eq.s32.totalorder %s40, 0
      %p182 = por %p180, %p181
      %s184 = sadd.s32 %s183, 1
      %p187 = scmp.eq.s32.totalorder %s34, 1
      %p188 = scmp.ne.s32.totalorder %s183, %s185
      %p189 = scmp.eq.s32.totalorder %s34, 0
      %p190 = por %p188, %p189
      %p191 = scmp.ne.s32.totalorder %s183, %s185
      %p192 = scmp.eq.s32.totalorder %s39, 1
      %p193 = por %p191, %p192
      %p194 = scmp.ne.s32.totalorder %s185, %s186
      %p195 = scmp.eq.s32.totalorder %s39, 0
      %p196 = por %p194, %p195
      %p197 = scmp.ne.s32.totalorder %s185, %s186
      %p198 = scmp.eq.s32.totalorder %s40, 1
      %p199 = por %p197, %p198
      %p201 = scmp.ne.s32.totalorder %s186, %s200
      %p202 = scmp.eq.s32.totalorder %s40, 0
      %p203 = por %p201, %p202
      %s205 = sadd.s32 %s204, 1
      %p208 = scmp.eq.s32.totalorder %s34, 1
      %p209 = scmp.ne.s32.totalorder %s204, %s206
      %p210 = scmp.eq.s32.totalorder %s34, 0
      %p211 = por %p209, %p210
      %p212 = scmp.ne.s32.totalorder %s204, %s206
      %p213 = scmp.eq.s32.totalorder %s39, 1
      %p214 = por %p212, %p213
      %p215 = scmp.ne.s32.totalorder %s206, %s207
      %p216 = scmp.eq.s32.totalorder %s39, 0
      %p217 = por %p215, %p216
      %p218 = scmp.ne.s32.totalorder %s206, %s207
      %p219 = scmp.eq.s32.totalorder %s40, 1
      %p220 = por %p218, %p219
      %p222 = scmp.ne.s32.totalorder %s207, %s221
      %p223 = scmp.eq.s32.totalorder %s40, 0
      %p224 = por %p222, %p223
      %s226 = sadd.s32 %s225, 1
      %p229 = scmp.eq.s32.totalorder %s34, 1
      %p230 = scmp.ne.s32.totalorder %s225, %s227
      %p231 = scmp.eq.s32.totalorder %s34, 0
      %p232 = por %p230, %p231
      %p233 = scmp.ne.s32.totalorder %s225, %s227
      %p234 = scmp.eq.s32.totalorder %s39, 1
      %p235 = por %p233, %p234
      %p236 = scmp.ne.s32.totalorder %s227, %s228
      %p237 = scmp.eq.s32.totalorder %s39, 0
      %p238 = por %p236, %p237
      %p239 = scmp.ne.s32.totalorder %s227, %s228
      %p240 = scmp.eq.s32.totalorder %s40, 1
      %p241 = por %p239, %p240
      %p243 = scmp.ne.s32.totalorder %s228, %s242
      %p244 = scmp.eq.s32.totalorder %s40, 0
      %p245 = por %p243, %p244
      %s247 = sadd.s32 %s246, 1
      %p250 = scmp.eq.s32.totalorder %s34, 1
      %p251 = scmp.ne.s32.totalorder %s246, %s248
      %p252 = scmp.eq.s32.totalorder %s34, 0
      %p253 = por %p251, %p252
      %p254 = scmp.ne.s32.totalorder %s246, %s248
      %p255 = scmp.eq.s32.totalorder %s39, 1
      %p256 = por %p254, %p255
      %p257 = scmp.ne.s32.totalorder %s248, %s249
      %p258 = scmp.eq.s32.totalorder %s39, 0
      %p259 = por %p257, %p258
      %p260 = scmp.ne.s32.totalorder %s248, %s249
      %p261 = scmp.eq.s32.totalorder %s40, 1
      %p262 = por %p260, %p261
      %p264 = scmp.ne.s32.totalorder %s249, %s263
      %p265 = scmp.eq.s32.totalorder %s40, 0
      %p266 = por %p264, %p265
      %s268 = sadd.s32 %s267, 1
      %p271 = scmp.eq.s32.totalorder %s34, 1
      %p272 = scmp.ne.s32.totalorder %s267, %s269
      %p273 = scmp.eq.s32.totalorder %s34, 0
      %p274 = por %p272, %p273
      %p275 = scmp.ne.s32.totalorder %s267, %s269
      %p276 = scmp.eq.s32.totalorder %s39, 1
      %p277 = por %p275, %p276
      %p278 = scmp.ne.s32.totalorder %s269, %s270
      %p279 = scmp.eq.s32.totalorder %s39, 0
      %p280 = por %p278, %p279
      %p281 = scmp.ne.s32.totalorder %s269, %s270
      %p282 = scmp.eq.s32.totalorder %s40, 1
      %p283 = por %p281, %p282
      %p285 = scmp.ne.s32.totalorder %s270, %s284
      %p286 = scmp.eq.s32.totalorder %s40, 0
      %p287 = por %p285, %p286
      %s289 = sadd.s32 %s288, 1
      %p292 = scmp.eq.s32.totalorder %s34, 1
      %p293 = scmp.ne.s32.totalorder %s288, %s290
      %p294 = scmp.eq.s32.totalorder %s34, 0
      %p295 = por %p293, %p294
      %p296 = scmp.ne.s32.totalorder %s288, %s290
      %p297 = scmp.eq.s32.totalorder %s39, 1
      %p298 = por %p296, %p297
      %p299 = scmp.ne.s32.totalorder %s290, %s291
      %p300 = scmp.eq.s32.totalorder %s39, 0
      %p301 = por %p299, %p300
      %p302 = scmp.ne.s32.totalorder %s290, %s291
      %p303 = scmp.eq.s32.totalorder %s40, 1
      %p304 = por %p302, %p303
      %p306 = scmp.ne.s32.totalorder %s291, %s305
      %p307 = scmp.eq.s32.totalorder %s40, 0
      %p308 = por %p306, %p307
      %s310 = sadd.s32 %s309, 1
      %p313 = scmp.eq.s32.totalorder %s34, 1
      %p314 = scmp.ne.s32.totalorder %s309, %s311
      %p315 = scmp.eq.s32.totalorder %s34, 0
      %p316 = por %p314, %p315
      %p317 = scmp.ne.s32.totalorder %s309, %s311
      %p318 = scmp.eq.s32.totalorder %s39, 1
      %p319 = por %p317, %p318
      %p320 = scmp.ne.s32.totalorder %s311, %s312
      %p321 = scmp.eq.s32.totalorder %s39, 0
      %p322 = por %p320, %p321
      %p323 = scmp.ne.s32.totalorder %s311, %s312
      %p324 = scmp.eq.s32.totalorder %s40, 1
      %p325 = por %p323, %p324
      %p327 = scmp.ne.s32.totalorder %s312, %s326
      %p328 = scmp.eq.s32.totalorder %s40, 0
      %p329 = por %p327, %p328
      %s331 = sadd.s32 %s330, 1
      %p334 = scmp.eq.s32.totalorder %s34, 1
      %p335 = scmp.ne.s32.totalorder %s330, %s332
      %p336 = scmp.eq.s32.totalorder %s34, 0
      %p337 = por %p335, %p336
      %p338 = scmp.ne.s32.totalorder %s330, %s332
      %p339 = scmp.eq.s32.totalorder %s39, 1
      %p340 = por %p338, %p339
      %p341 = scmp.ne.s32.totalorder %s332, %s333
      %p342 = scmp.eq.s32.totalorder %s39, 0
      %p343 = por %p341, %p342
      %p344 = scmp.ne.s32.totalorder %s332, %s333
      %p345 = scmp.eq.s32.totalorder %s40, 1
      %p346 = por %p344, %p345
      %p348 = scmp.ne.s32.totalorder %s333, %s347
      %p349 = scmp.eq.s32.totalorder %s40, 0
      %p350 = por %p348, %p349
      %s351 = ssub.s32 %s34, %s41
      %p352 = scmp.eq.s32.totalorder %s351, 0
      %s354 = sadd.s32 %s353, 1
      %s355 = scalar_select %p352, %s353, %s354
      %p358 = pneg %p352
      %p359 = scmp.eq.s32.totalorder %s34, 1
      %p360 = por %p358, %p359
      %p361 = scmp.ne.s32.totalorder %s353, %s356
      %p362 = scmp.eq.s32.totalorder %s34, 0
      %p363 = por %p361, %p362
      %p364 = scmp.ne.s32.totalorder %s353, %s356
      %p365 = scmp.eq.s32.totalorder %s39, 1
      %p366 = por %p364, %p365
      %p367 = scmp.ne.s32.totalorder %s356, %s357
      %p368 = scmp.eq.s32.totalorder %s39, 0
      %p369 = por %p367, %p368
      %p370 = scmp.ne.s32.totalorder %s356, %s357
      %p371 = scmp.eq.s32.totalorder %s40, 1
      %p372 = por %p370, %p371
      %p374 = scmp.ne.s32.totalorder %s357, %s373
      %p375 = scmp.eq.s32.totalorder %s40, 0
      %p376 = por %p374, %p375
      %s377 = ssub.s32 %s34, %s41
      %p378 = scmp.eq.s32.totalorder %s377, 0
      %s380 = sadd.s32 %s379, 1
      %s381 = scalar_select %p378, %s379, %s380
      %p384 = pneg %p378
      %p385 = scmp.eq.s32.totalorder %s34, 1
      %p386 = por %p384, %p385
      %p387 = scmp.ne.s32.totalorder %s379, %s382
      %p388 = scmp.eq.s32.totalorder %s34, 0
      %p389 = por %p387, %p388
      %p390 = scmp.ne.s32.totalorder %s379, %s382
      %p391 = scmp.eq.s32.totalorder %s39, 1
      %p392 = por %p390, %p391
      %p393 = scmp.ne.s32.totalorder %s382, %s383
      %p394 = scmp.eq.s32.totalorder %s39, 0
      %p395 = por %p393, %p394
      %p396 = scmp.ne.s32.totalorder %s382, %s383
      %p397 = scmp.eq.s32.totalorder %s40, 1
      %p398 = por %p396, %p397
      %p400 = scmp.ne.s32.totalorder %s383, %s399
      %p401 = scmp.eq.s32.totalorder %s40, 0
      %p402 = por %p400, %p401
      %p403 = scmp.le.s32.totalorder 1, %s34
      %p404 = scmp.lt.s32.totalorder %s34, 3
      %p405 = pnand %p403, %p404
      %p406 = pneg %p405
      // Predicated region
      $region9: #{dap_forward.1} parent=5 // pred_check
        _
      $region10: #{dap_forward.1} parent=5 // pred_check_branch
        %408 = sbr.rel (%p405) target = $region12
      $region11: #{dap_forward.1} parent=5 // pred_region
        %s409 = ssub.s32 %s34, 1
        // Predicated region
        $region13: #{dap_forward.1} parent=11 // pred_check
          %p410 = pneg %p133
        $region14: #{dap_forward.1} parent=11 // pred_check_branch
          %412 = sbr.rel (%p410) target = $region16
        $region15: #{dap_forward.1} parent=11 // pred_region
          _
        $region16: #{dap_forward.1} parent=11 // pred_fallthru
          _
        // Predicated region
        $region17: #{dap_forward.1} parent=11 // pred_check
          %p413 = pneg %p154
        $region18: #{dap_forward.1} parent=11 // pred_check_branch
          %415 = sbr.rel (%p413) target = $region20
        $region19: #{dap_forward.1} parent=11 // pred_region
          _
        $region20: #{dap_forward.1} parent=11 // pred_fallthru
          _
        // Predicated region
        $region21: #{dap_forward.1} parent=11 // pred_check
          %p416 = pneg %p175
        $region22: #{dap_forward.1} parent=11 // pred_check_branch
          %418 = sbr.rel (%p416) target = $region24
        $region23: #{dap_forward.1} parent=11 // pred_region
          _
        $region24: #{dap_forward.1} parent=11 // pred_fallthru
          _
        // Predicated region
        $region25: #{dap_forward.1} parent=11 // pred_check
          %p419 = pneg %p196
        $region26: #{dap_forward.1} parent=11 // pred_check_branch
          %421 = sbr.rel (%p419) target = $region28
        $region27: #{dap_forward.1} parent=11 // pred_region
          _
        $region28: #{dap_forward.1} parent=11 // pred_fallthru
          _
        // Predicated region
        $region29: #{dap_forward.1} parent=11 // pred_check
          %p422 = pneg %p217
        $region30: #{dap_forward.1} parent=11 // pred_check_branch
          %424 = sbr.rel (%p422) target = $region32
        $region31: #{dap_forward.1} parent=11 // pred_region
          _
        $region32: #{dap_forward.1} parent=11 // pred_fallthru
          _
        // Predicated region
        $region33: #{dap_forward.1} parent=11 // pred_check
          %p425 = pneg %p238
        $region34: #{dap_forward.1} parent=11 // pred_check_branch
          %427 = sbr.rel (%p425) target = $region36
        $region35: #{dap_forward.1} parent=11 // pred_region
          _
        $region36: #{dap_forward.1} parent=11 // pred_fallthru
          _
        // Predicated region
        $region37: #{dap_forward.1} parent=11 // pred_check
          %p428 = pneg %p259
        $region38: #{dap_forward.1} parent=11 // pred_check_branch
          %430 = sbr.rel (%p428) target = $region40
        $region39: #{dap_forward.1} parent=11 // pred_region
          _
        $region40: #{dap_forward.1} parent=11 // pred_fallthru
          _
        // Predicated region
        $region41: #{dap_forward.1} parent=11 // pred_check
          %p431 = pneg %p280
        $region42: #{dap_forward.1} parent=11 // pred_check_branch
          %433 = sbr.rel (%p431) target = $region44
        $region43: #{dap_forward.1} parent=11 // pred_region
          _
        $region44: #{dap_forward.1} parent=11 // pred_fallthru
          _
        // Predicated region
        $region45: #{dap_forward.1} parent=11 // pred_check
          %p434 = pneg %p301
        $region46: #{dap_forward.1} parent=11 // pred_check_branch
          %436 = sbr.rel (%p434) target = $region48
        $region47: #{dap_forward.1} parent=11 // pred_region
          _
        $region48: #{dap_forward.1} parent=11 // pred_fallthru
          _
        // Predicated region
        $region49: #{dap_forward.1} parent=11 // pred_check
          %p437 = pneg %p322
        $region50: #{dap_forward.1} parent=11 // pred_check_branch
          %439 = sbr.rel (%p437) target = $region52
        $region51: #{dap_forward.1} parent=11 // pred_region
          _
        $region52: #{dap_forward.1} parent=11 // pred_fallthru
          _
        // Predicated region
        $region53: #{dap_forward.1} parent=11 // pred_check
          %p440 = pneg %p343
        $region54: #{dap_forward.1} parent=11 // pred_check_branch
          %442 = sbr.rel (%p440) target = $region56
        $region55: #{dap_forward.1} parent=11 // pred_region
          _
        $region56: #{dap_forward.1} parent=11 // pred_fallthru
          _
      $region12: #{dap_forward.1} parent=5 // pred_fallthru
        _
      %p443 = scmp.lt.s32.totalorder %s34, 2
      // Predicated region
      $region57: #{dap_forward.1} parent=5 // pred_check
        %p444 = pneg %p443
      $region58: #{dap_forward.1} parent=5 // pred_check_branch
        %446 = sbr.rel (%p444) target = $region60
      $region59: #{dap_forward.1} parent=5 // pred_region
        // Predicated region
        $region61: #{dap_forward.1} parent=59 // pred_check
          %p447 = pneg %p54
        $region62: #{dap_forward.1} parent=59 // pred_check_branch
          %449 = sbr.rel (%p447) target = $region64
        $region63: #{dap_forward.1} parent=59 // pred_region
          %p450 = scmp.lt.s32.totalorder %s34, 1
          %s451 = scalar_select %p450, %s34, 1
          %s452 = smul.addr %s451, 2
          %s453 = smul.addr %s452, 8
          %s454 = scalar_lea.vmem %s1, %s453
        $region64: #{dap_forward.1} parent=59 // pred_fallthru
          _
        // Predicated region
        $region65: #{dap_forward.1} parent=59 // pred_check
          %p455 = pneg %p80
        $region66: #{dap_forward.1} parent=59 // pred_check_branch
          %457 = sbr.rel (%p455) target = $region68
        $region67: #{dap_forward.1} parent=59 // pred_region
          %p458 = scmp.lt.s32.totalorder %s34, 1
          %s459 = scalar_select %p458, %s34, 1
          %s460 = scalar_lea.vmem %s2, %s459
        $region68: #{dap_forward.1} parent=59 // pred_fallthru
          _
        // Predicated region
        $region69: #{dap_forward.1} parent=59 // pred_check
          %p461 = pneg %p106
        $region70: #{dap_forward.1} parent=59 // pred_check_branch
          %463 = sbr.rel (%p461) target = $region72
        $region71: #{dap_forward.1} parent=59 // pred_region
          %p464 = scmp.lt.s32.totalorder %s34, 1
          %s465 = scalar_select %p464, %s34, 1
          %s466 = scalar_lea.vmem %s3, %s465
        $region72: #{dap_forward.1} parent=59 // pred_fallthru
          _
      $region60: #{dap_forward.1} parent=5 // pred_fallthru
        _
      %p467 = scmp.le.s32.totalorder 1, %s34
      %p468 = scmp.lt.s32.totalorder %s34, 3
      %p469 = pnand %p467, %p468
      %p470 = pneg %p469
      // Predicated region
      $region73: #{dap_forward.1} parent=5 // pred_check
        _
      $region74: #{dap_forward.1} parent=5 // pred_check_branch
        %472 = sbr.rel (%p469) target = $region76
      $region75: #{dap_forward.1} parent=5 // pred_region
        %s473 = ssub.s32 %s34, 1
        %p474 = scmp.lt.s32.totalorder %s39, 1
        %s475 = scalar_select %p474, %s39, 1
        %s476 = smul.addr %s475, 2
        %s477 = smul.addr %s476, 8
        %s478 = scalar_lea.vmem %s1, %s477
        %p479 = pneg %p60
        %p480 = pneg %p57
        %p481 = scmp.lt.s32.totalorder %s39, 1
        %s482 = scalar_select %p481, %s39, 1
        %s483 = scalar_lea.vmem %s2, %s482
        %p484 = pneg %p86
        %p485 = pneg %p83
        %p486 = scmp.lt.s32.totalorder %s39, 1
        %s487 = scalar_select %p486, %s39, 1
        %s488 = scalar_lea.vmem %s3, %s487
        %p489 = pneg %p112
        %p490 = pneg %p109
        %p491 = pneg %p133
        %p492 = pneg %p130
        %p493 = pneg %p154
        %p494 = pneg %p151
        %p495 = pneg %p175
        %p496 = pneg %p172
        %p497 = pneg %p196
        %p498 = pneg %p193
        %p499 = pneg %p217
        %p500 = pneg %p214
        %p501 = pneg %p238
        %p502 = pneg %p235
        %p503 = pneg %p259
        %p504 = pneg %p256
        %p505 = pneg %p280
        %p506 = pneg %p277
        %p507 = pneg %p301
        %p508 = pneg %p298
        %p509 = pneg %p322
        %p510 = pneg %p319
        %p511 = pneg %p343
        %p512 = pneg %p340
        %p513 = pneg %p369
        %p514 = pneg %p366
        %p515 = scmp.lt.s32.totalorder %s39, 1
        %s516 = scalar_select %p515, %s39, 1
        %s517 = smul.addr %s516, 2
        %s518 = smul.addr %s517, 8
        %s519 = scalar_lea.vmem %s15, %s518
        %p520 = pneg %p395
        %p521 = pneg %p392
        %s522 = sand.u32 %s382, 1
        %s523 = scalar_lea.sflag [#allocation8], %s522
        %s524 = sand.u32 %s382, 1
        %s525 = scalar_lea.vmem [#allocation7], %s524
        %p526 = scmp.lt.s32.totalorder %s39, 1
        %s527 = scalar_select %p526, %s39, 1
        %s528 = smul.addr %s527, 2
        %s529 = smul.addr %s528, 8
        %s530 = scalar_lea.vmem %s1, %s529
        %p531 = scmp.lt.s32.totalorder %s39, 1
        %s532 = scalar_select %p531, %s39, 1
        %s533 = scalar_lea.vmem %s2, %s532
        %p534 = scmp.lt.s32.totalorder %s39, 1
        %s535 = scalar_select %p534, %s39, 1
        %s536 = scalar_lea.vmem %s3, %s535
        %p537 = scmp.lt.s32.totalorder %s39, 1
        %s538 = scalar_select %p537, %s39, 1
        %s539 = smul.addr %s538, 2
        %s540 = smul.addr %s539, 8
        %s541 = scalar_lea.vmem %s15, %s540
        %s542 = sld [smem:[#allocation5 + %s39]]
        %v543 = vld [vmem:[%s530] sm:$0xff]
        %v544 = vld [vmem:[%s530 + $0x8] sm:$0xff]
        %v545 = vld [vmem:[%s536] sm:$0x1]
        %v546 = vadd.f32 %v545, 1.0
        %v547 = vlog2.pop %v546
        %v548 = vmul.f32 %v547, 0.6931472
        %vm549 = vcmask 122880
        %550 = vst.msk [vmem:[%s525] sm:$0x1] %vm549, %v548
        %vm553 = vcmask 1040384
        %v554 = vrot.slane %v543, 7
        %v555 = vrot.slane %v544, 7
        %v556 = vsel %vm553, %v554, %v555
        %v560 = vsel %vm553, 0.0, %v554
        %v561 = vsel %vm553, %v555, 0.0
        %vm564 = vcmask 1046528
        %v565 = vrot.slane %v560, 1
        %v566 = vrot.slane %v556, 1
        %v567 = vsel %vm564, %v565, %v566
        %v568 = vrot.slane %v561, 1
        %v569 = vsel %vm564, %v566, %v568
        %570 = vrot.lane.b32.xlu0 %v567, 64
        %v571 = vpop.permute.xlu0 %570
        %572 = vrot.lane.b32.xlu0 %v569, 64
        %v573 = vpop.permute.xlu0 %572
        %vm576 = vcmask 1045504
        %v577 = vrot.slane %v560, 2
        %v578 = vrot.slane %v556, 2
        %v579 = vsel %vm576, %v577, %v578
        %v580 = vrot.slane %v561, 2
        %v581 = vsel %vm576, %v578, %v580
        %vm582 = vcmask 523264
        %v583 = vsel %vm582, %v560, %v571
        %v584 = vsel %vm582, %v556, %v573
        %v585 = vld [vmem:[%s4] sm:$0xff]
        %v586 = vld [vmem:[%s4 + $0x8] sm:$0xff]
        %v587 = vld [vmem:[%s4 + $0x10] sm:$0xff]
        %v588 = vld [vmem:[%s4 + $0x18] sm:$0xff]
        %v589 = vld [vmem:[%s4 + $0x20] sm:$0xff]
        %v590 = vld [vmem:[%s4 + $0x28] sm:$0xff]
        %v591 = vld [vmem:[%s4 + $0x30] sm:$0xff]
        %v592 = vld [vmem:[%s4 + $0x38] sm:$0xff]
        %v593 = vld [vmem:[%s4 + $0x40] sm:$0xff]
        %v594 = vld [vmem:[%s4 + $0x48] sm:$0xff]
        %v595 = vld [vmem:[%s4 + $0x50] sm:$0xff]
        %v596 = vld [vmem:[%s4 + $0x58] sm:$0xff]
        %v597 = vld [vmem:[%s4 + $0x60] sm:$0xff]
        %v598 = vld [vmem:[%s4 + $0x68] sm:$0xff]
        %v599 = vld [vmem:[%s4 + $0x70] sm:$0xff]
        %v600 = vld [vmem:[%s4 + $0x78] sm:$0xff]
        %v601 = vld [vmem:[%s4 + $0x80] sm:$0xff]
        %v602 = vld [vmem:[%s4 + $0x88] sm:$0xff]
        %v603 = vld [vmem:[%s4 + $0x90] sm:$0xff]
        %v604 = vld [vmem:[%s4 + $0x98] sm:$0xff]
        %v605 = vld [vmem:[%s4 + $0xa0] sm:$0xff]
        %v606 = vld [vmem:[%s4 + $0xa8] sm:$0xff]
        %v607 = vld [vmem:[%s4 + $0xb0] sm:$0xff]
        %v608 = vld [vmem:[%s4 + $0xb8] sm:$0xff]
        %v609 = vld [vmem:[%s5] sm:$0x1]
        %v611 = vlaneseq
        %v612 = vshrl.u32 %v611, 7
        %v613 = vsub.s32 0, %v612
        %v614 = vrot.slane %v609, %v613
        %v616 = vsel %vm582, %v579, 0
        %v618 = vsel %vm582, %v581, 0
        %620 = vmatprep.subr.mxu0 0.0
        %621 = vmatpush1.msra.mxu0 %v585
        %622 = vmatprep.subr.mxu0 0.0
        %623 = vmatpush1.msra.mxu0 %v586
        %624 = vmatprep.subr.mxu0 0.0
        %625 = vmatpush1.msra.mxu0 %v587
        %626 = vmatprep.subr.mxu0 0.0
        %627 = vmatpush1.msra.mxu0 %v588
        %628 = vmatprep.subr.mxu0 0.0
        %629 = vmatpush1.msra.mxu0 %v589
        %630 = vmatprep.subr.mxu0 0.0
        %631 = vmatpush1.msra.mxu0 %v590
        %632 = vmatprep.subr.mxu0 0.0
        %633 = vmatpush1.msra.mxu0 %v591
        %634 = vmatprep.subr.mxu0 0.0
        %635 = vmatpush1.msra.mxu0 %v592
        %636 = vmatprep.subr.mxu0 0.0
        %637 = vmatpush1.msra.mxu0 %v593
        %638 = vmatprep.subr.mxu0 0.0
        %639 = vmatpush1.msra.mxu0 %v594
        %640 = vmatprep.subr.mxu0 0.0
        %641 = vmatpush1.msra.mxu0 %v595
        %642 = vmatprep.subr.mxu0 0.0
        %643 = vmatpush1.msra.mxu0 %v596
        %644 = vmatprep.subr.mxu0 0.0
        %645 = vmatpush1.msra.mxu0 %v597
        %646 = vmatprep.subr.mxu0 0.0
        %647 = vmatpush1.msra.mxu0 %v598
        %648 = vmatprep.subr.mxu0 0.0
        %649 = vmatpush1.msra.mxu0 %v599
        %650 = vmatprep.subr.mxu0 0.0
        %651 = vmatpush1.msra.mxu0 %v600
        %652 = vmatprep.subr.mxu0 0.0
        %653 = vmatpush1.msra.mxu0 %v601
        %654 = vmatprep.subr.mxu0 0.0
        %655 = vmatpush1.msra.mxu0 %v602
        %656 = vmatprep.subr.mxu0 0.0
        %657 = vmatpush1.msra.mxu0 %v603
        %658 = vmatprep.subr.mxu0 0.0
        %659 = vmatpush1.msra.mxu0 %v604
        %660 = vmatprep.subr.mxu0 0.0
        %661 = vmatpush1.msra.mxu0 %v605
        %662 = vmatprep.subr.mxu0 0.0
        %663 = vmatpush1.msra.mxu0 %v606
        %664 = vmatprep.subr.mxu0 0.0
        %665 = vmatpush1.msra.mxu0 %v607
        %666 = vmatprep.subr.mxu0 0.0
        %667 = vmatpush1.msra.mxu0 %v608
        %668 = vmatprep.subr.mxu0 0.0
        %669 = vmatpush1.msra.mxu0 0.0
        %670 = vmatprep.subr.mxu0 0.0
        %671 = vmatpush1.msra.mxu0 0.0
        %672 = vmatprep.subr.mxu0 0.0
        %673 = vmatpush1.msra.mxu0 0.0
        %674 = vmatprep.subr.mxu0 0.0
        %675 = vmatpush1.msra.mxu0 0.0
        %676 = vmatprep.subr.mxu0 0.0
        %677 = vmatpush1.msra.mxu0 0.0
        %678 = vmatprep.subr.mxu0 0.0
        %679 = vmatpush1.msra.mxu0 0.0
        %680 = vmatprep.subr.mxu0 0.0
        %681 = vmatpush1.msra.mxu0 0.0
        %682 = vmatprep.subr.mxu0 0.0
        %683 = vmatpush1.msra.mxu0 0.0
        %684 = vmatprep.mubr.f32.mxu0 %v616
        %685 = vmatmul.mubr.f32.gmra.mrb[0].mxu0 %v583
        %v686 = vpop.f32.mrb[0].mxu0
        %v687 = vadd.f32 %v614, %v686
        %v688 = vpop.f32.mrb[0].mxu0
        %689 = vmatprep.mubr.f32.mxu0 %v618
        %690 = vmatmul.mubr.f32.gmra.mrb[0].mxu0 %v584
        %v691 = vpop.f32.mrb[0].mxu0
        %v692 = vadd.f32 %v614, %v691
        %v693 = vpop.f32.mrb[0].mxu0
        %694 = vdwg.mxu0
        %v695 = vmax.f32 %v687, 0.0
        %v696 = vmax.f32 %v692, 0.0
        %v697 = vld [vmem:[%s533] sm:$0x1]
        %v699 = vlaneseq
        %v700 = vshrl.u32 %v699, 7
        %v701 = vsub.s32 0, %v700
        %v702 = vrot.slane %v697, %v701
        %703 = vrot.lane.b32.xlu0 %v702, 16
        %v704 = vpop.permute.xlu0 %703
        %vm706 = vcmask 130048
        %v707 = vsel %vm706, %v695, %v704
        %v708 = vsel %vm706, %v696, %v704
        %v709 = vlaneseq
        %v710 = vshrl.u32 %v709, 7
        %v711 = vadd.s32 %v710, 8
        %v712 = vstv %s542
        %vm713 = vcmp.lt.s32.totalorder %v710, %v712
        %vm714 = vcmp.lt.s32.totalorder %v711, %v712
        %v715 = vsel %vm713, 1, 0
        %v716 = vsel %vm714, 1, 0
        %v717 = vcvt.s32.f32 %v715
        %v718 = vcvt.s32.f32 %v716
        %v719 = vmul.f32 %v707, %v717
        %v720 = vmul.f32 %v708, %v718
        %v723 = vrot.slane %v719, 7
        %v724 = vrot.slane %v720, 7
        %v725 = vsel %vm553, %v723, %v724
        %v729 = vsel %vm553, 0.0, %v723
        %v730 = vsel %vm553, %v724, 0.0
        %v733 = vrot.slane %v729, 1
        %v734 = vrot.slane %v725, 1
        %v735 = vsel %vm564, %v733, %v734
        %v736 = vrot.slane %v730, 1
        %v737 = vsel %vm564, %v734, %v736
        %738 = vrot.lane.b32.xlu0 %v735, 32
        %v739 = vpop.permute.xlu0 %738
        %740 = vrot.lane.b32.xlu0 %v737, 32
        %v741 = vpop.permute.xlu0 %740
        %v744 = vrot.slane %v729, 2
        %v745 = vrot.slane %v725, 2
        %v746 = vsel %vm576, %v744, %v745
        %v747 = vrot.slane %v730, 2
        %v748 = vsel %vm576, %v745, %v747
        %749 = vrot.lane.b32.xlu0 %v746, 64
        %v750 = vpop.permute.xlu0 %749
        %751 = vrot.lane.b32.xlu0 %v748, 64
        %v752 = vpop.permute.xlu0 %751
        %vm755 = vcmask 261120
        %v756 = vsel %vm755, %v729, %v739
        %v757 = vsel %vm755, %v725, %v741
        %v758 = vsel %vm582, %v756, %v750
        %v759 = vsel %vm582, %v757, %v752
        %v760 = vld [vmem:[%s6] sm:$0xff]
        %v761 = vld [vmem:[%s6 + $0x8] sm:$0xff]
        %v762 = vld [vmem:[%s6 + $0x10] sm:$0xff]
        %v763 = vld [vmem:[%s6 + $0x18] sm:$0xff]
        %v764 = vld [vmem:[%s6 + $0x20] sm:$0xff]
        %v765 = vld [vmem:[%s6 + $0x28] sm:$0xff]
        %v766 = vld [vmem:[%s6 + $0x30] sm:$0xff]
        %v767 = vld [vmem:[%s6 + $0x38] sm:$0xff]
        %v768 = vld [vmem:[%s6 + $0x40] sm:$0xff]
        %v769 = vld [vmem:[%s6 + $0x48] sm:$0xff]
        %v770 = vld [vmem:[%s6 + $0x50] sm:$0xff]
        %v771 = vld [vmem:[%s6 + $0x58] sm:$0xff]
        %v772 = vld [vmem:[%s8] sm:$0x1]
        %v774 = vlaneseq
        %v775 = vshrl.u32 %v774, 7
        %v776 = vsub.s32 0, %v775
        %v777 = vrot.slane %v772, %v776
        %vm779 = vcmask 785408
        %v781 = vsel %vm779, %v758, 0
        %v784 = vsel %vm779, %v759, 0
        %786 = vmatprep.subr.mxu0 0.0
        %787 = vmatpush1.msra.mxu0 %v760
        %788 = vmatprep.subr.mxu0 0.0
        %789 = vmatpush1.msra.mxu0 %v761
        %790 = vmatprep.subr.mxu0 0.0
        %791 = vmatpush1.msra.mxu0 %v762
        %792 = vmatprep.subr.mxu0 0.0
        %793 = vmatpush1.msra.mxu0 %v763
        %794 = vmatprep.subr.mxu0 0.0
        %795 = vmatpush1.msra.mxu0 %v764
        %796 = vmatprep.subr.mxu0 0.0
        %797 = vmatpush1.msra.mxu0 %v765
        %798 = vmatprep.subr.mxu0 0.0
        %799 = vmatpush1.msra.mxu0 %v766
        %800 = vmatprep.subr.mxu0 0.0
        %801 = vmatpush1.msra.mxu0 %v767
        %802 = vmatprep.subr.mxu0 0.0
        %803 = vmatpush1.msra.mxu0 %v768
        %804 = vmatprep.subr.mxu0 0.0
        %805 = vmatpush1.msra.mxu0 %v769
        %806 = vmatprep.subr.mxu0 0.0
        %807 = vmatpush1.msra.mxu0 %v770
        %808 = vmatprep.subr.mxu0 0.0
        %809 = vmatpush1.msra.mxu0 %v771
        %810 = vmatprep.subr.mxu0 0.0
        %811 = vmatpush1.msra.mxu0 0.0
        %812 = vmatprep.subr.mxu0 0.0
        %813 = vmatpush1.msra.mxu0 0.0
        %814 = vmatprep.subr.mxu0 0.0
        %815 = vmatpush1.msra.mxu0 0.0
        %816 = vmatprep.subr.mxu0 0.0
        %817 = vmatpush1.msra.mxu0 0.0
        %818 = vmatprep.subr.mxu0 0.0
        %819 = vmatpush1.msra.mxu0 0.0
        %820 = vmatprep.subr.mxu0 0.0
        %821 = vmatpush1.msra.mxu0 0.0
        %822 = vmatprep.subr.mxu0 0.0
        %823 = vmatpush1.msra.mxu0 0.0
        %824 = vmatprep.subr.mxu0 0.0
        %825 = vmatpush1.msra.mxu0 0.0
        %826 = vmatprep.subr.mxu0 0.0
        %827 = vmatpush1.msra.mxu0 0.0
        %828 = vmatprep.subr.mxu0 0.0
        %829 = vmatpush1.msra.mxu0 0.0
        %830 = vmatprep.subr.mxu0 0.0
        %831 = vmatpush1.msra.mxu0 0.0
        %832 = vmatprep.subr.mxu0 0.0
        %833 = vmatpush1.msra.mxu0 0.0
        %834 = vmatprep.subr.mxu0 0.0
        %835 = vmatpush1.msra.mxu0 0.0
        %836 = vmatprep.subr.mxu0 0.0
        %837 = vmatpush1.msra.mxu0 0.0
        %838 = vmatprep.subr.mxu0 0.0
        %839 = vmatpush1.msra.mxu0 0.0
        %840 = vmatprep.subr.mxu0 0.0
        %841 = vmatpush1.msra.mxu0 0.0
        %842 = vmatprep.subr.mxu0 0.0
        %843 = vmatpush1.msra.mxu0 0.0
        %844 = vmatprep.subr.mxu0 0.0
        %845 = vmatpush1.msra.mxu0 0.0
        %846 = vmatprep.subr.mxu0 0.0
        %847 = vmatpush1.msra.mxu0 0.0
        %848 = vmatprep.subr.mxu0 0.0
        %849 = vmatpush1.msra.mxu0 0.0
        %850 = vmatprep.mubr.f32.mxu0 0.0
        %851 = vmatmul.mubr.f32.gmra.mrb[0].mxu0 %v781
        %v852 = vpop.f32.mrb[0].mxu0
        %v853 = vadd.f32 %v777, %v852
        %v854 = vpop.f32.mrb[0].mxu0
        %855 = vmatprep.mubr.f32.mxu0 0.0
        %856 = vmatmul.mubr.f32.gmra.mrb[0].mxu0 %v784
        %v857 = vpop.f32.mrb[0].mxu0
        %v858 = vadd.f32 %v777, %v857
        %v859 = vpop.f32.mrb[0].mxu0
        %860 = vdwg.mxu0
        %v861 = vmax.f32 %v853, 0.0
        %v862 = vmax.f32 %v858, 0.0
        %v863 = vmul.f32 %v861, %v717
        %v864 = vmul.f32 %v862, %v718
        %v865 = vmul.f32 %v863, %v717
        %v866 = vmul.f32 %v864, %v718
        %v869 = vrot.slane %v865, 7
        %v870 = vrot.slane %v866, 7
        %v871 = vsel %vm553, %v869, %v870
        %v875 = vsel %vm553, 0.0, %v869
        %v876 = vsel %vm553, %v870, 0.0
        %v879 = vrot.slane %v875, 1
        %v880 = vrot.slane %v871, 1
        %v881 = vsel %vm564, %v879, %v880
        %v882 = vrot.slane %v876, 1
        %v883 = vsel %vm564, %v880, %v882
        %884 = vrot.lane.b32.xlu0 %v881, 32
        %v885 = vpop.permute.xlu0 %884
        %886 = vrot.lane.b32.xlu0 %v883, 32
        %v887 = vpop.permute.xlu0 %886
        %v890 = vrot.slane %v875, 2
        %v891 = vrot.slane %v871, 2
        %v892 = vsel %vm576, %v890, %v891
        %v893 = vrot.slane %v876, 2
        %v894 = vsel %vm576, %v891, %v893
        %895 = vrot.lane.b32.xlu0 %v892, 64
        %v896 = vpop.permute.xlu0 %895
        %897 = vrot.lane.b32.xlu0 %v894, 64
        %v898 = vpop.permute.xlu0 %897
        %v901 = vsel %vm755, %v875, %v885
        %v902 = vsel %vm755, %v871, %v887
        %v903 = vsel %vm582, %v901, %v896
        %v904 = vsel %vm582, %v902, %v898
        %v905 = vld [vmem:[%s7] sm:$0xff]
        %v906 = vld [vmem:[%s7 + $0x8] sm:$0xff]
        %v907 = vld [vmem:[%s7 + $0x10] sm:$0xff]
        %v908 = vld [vmem:[%s7 + $0x18] sm:$0xff]
        %v909 = vld [vmem:[%s7 + $0x20] sm:$0xff]
        %v910 = vld [vmem:[%s7 + $0x28] sm:$0xff]
        %v911 = vld [vmem:[%s7 + $0x30] sm:$0xff]
        %v912 = vld [vmem:[%s7 + $0x38] sm:$0xff]
        %v913 = vld [vmem:[%s7 + $0x40] sm:$0xff]
        %v914 = vld [vmem:[%s7 + $0x48] sm:$0xff]
        %v915 = vld [vmem:[%s7 + $0x50] sm:$0xff]
        %v916 = vld [vmem:[%s7 + $0x58] sm:$0xff]
        %v917 = vld [vmem:[%s9] sm:$0x1]
        %v919 = vlaneseq
        %v920 = vshrl.u32 %v919, 7
        %v921 = vsub.s32 0, %v920
        %v922 = vrot.slane %v917, %v921
        %v925 = vsel %vm779, %v903, 0
        %v928 = vsel %vm779, %v904, 0
        %930 = vmatprep.subr.mxu0 0.0
        %931 = vmatpush1.msra.mxu0 %v905
        %932 = vmatprep.subr.mxu0 0.0
        %933 = vmatpush1.msra.mxu0 %v906
        %934 = vmatprep.subr.mxu0 0.0
        %935 = vmatpush1.msra.mxu0 %v907
        %936 = vmatprep.subr.mxu0 0.0
        %937 = vmatpush1.msra.mxu0 %v908
        %938 = vmatprep.subr.mxu0 0.0
        %939 = vmatpush1.msra.mxu0 %v909
        %940 = vmatprep.subr.mxu0 0.0
        %941 = vmatpush1.msra.mxu0 %v910
        %942 = vmatprep.subr.mxu0 0.0
        %943 = vmatpush1.msra.mxu0 %v911
        %944 = vmatprep.subr.mxu0 0.0
        %945 = vmatpush1.msra.mxu0 %v912
        %946 = vmatprep.subr.mxu0 0.0
        %947 = vmatpush1.msra.mxu0 %v913
        %948 = vmatprep.subr.mxu0 0.0
        %949 = vmatpush1.msra.mxu0 %v914
        %950 = vmatprep.subr.mxu0 0.0
        %951 = vmatpush1.msra.mxu0 %v915
        %952 = vmatprep.subr.mxu0 0.0
        %953 = vmatpush1.msra.mxu0 %v916
        %954 = vmatprep.subr.mxu0 0.0
        %955 = vmatpush1.msra.mxu0 0.0
        %956 = vmatprep.subr.mxu0 0.0
        %957 = vmatpush1.msra.mxu0 0.0
        %958 = vmatprep.subr.mxu0 0.0
        %959 = vmatpush1.msra.mxu0 0.0
        %960 = vmatprep.subr.mxu0 0.0
        %961 = vmatpush1.msra.mxu0 0.0
        %962 = vmatprep.subr.mxu0 0.0
        %963 = vmatpush1.msra.mxu0 0.0
        %964 = vmatprep.subr.mxu0 0.0
        %965 = vmatpush1.msra.mxu0 0.0
        %966 = vmatprep.subr.mxu0 0.0
        %967 = vmatpush1.msra.mxu0 0.0
        %968 = vmatprep.subr.mxu0 0.0
        %969 = vmatpush1.msra.mxu0 0.0
        %970 = vmatprep.subr.mxu0 0.0
        %971 = vmatpush1.msra.mxu0 0.0
        %972 = vmatprep.subr.mxu0 0.0
        %973 = vmatpush1.msra.mxu0 0.0
        %974 = vmatprep.subr.mxu0 0.0
        %975 = vmatpush1.msra.mxu0 0.0
        %976 = vmatprep.subr.mxu0 0.0
        %977 = vmatpush1.msra.mxu0 0.0
        %978 = vmatprep.subr.mxu0 0.0
        %979 = vmatpush1.msra.mxu0 0.0
        %980 = vmatprep.subr.mxu0 0.0
        %981 = vmatpush1.msra.mxu0 0.0
        %982 = vmatprep.subr.mxu0 0.0
        %983 = vmatpush1.msra.mxu0 0.0
        %984 = vmatprep.subr.mxu0 0.0
        %985 = vmatpush1.msra.mxu0 0.0
        %986 = vmatprep.subr.mxu0 0.0
        %987 = vmatpush1.msra.mxu0 0.0
        %988 = vmatprep.subr.mxu0 0.0
        %989 = vmatpush1.msra.mxu0 0.0
        %990 = vmatprep.subr.mxu0 0.0
        %991 = vmatpush1.msra.mxu0 0.0
        %992 = vmatprep.subr.mxu0 0.0
        %993 = vmatpush1.msra.mxu0 0.0
        %994 = vmatprep.mubr.f32.mxu0 0.0
        %995 = vmatmul.mubr.f32.gmra.mrb[0].mxu0 %v925
        %v996 = vpop.f32.mrb[0].mxu0
        %v997 = vadd.f32 %v922, %v996
        %v998 = vpop.f32.mrb[0].mxu0
        %999 = vmatprep.mubr.f32.mxu0 0.0
        %1000 = vmatmul.mubr.f32.gmra.mrb[0].mxu0 %v928
        %v1001 = vpop.f32.mrb[0].mxu0
        %v1002 = vadd.f32 %v922, %v1001
        %v1003 = vpop.f32.mrb[0].mxu0
        %1004 = vdwg.mxu0
        %v1005 = vmax.f32 %v997, 0.0
        %v1006 = vmax.f32 %v1002, 0.0
        %v1007 = vmul.f32 %v1005, %v717
        %v1008 = vmul.f32 %v1006, %v718
        %v1009 = vld [vmem:[%s10] sm:$0xff]
        %v1010 = vld [vmem:[%s10 + $0x8] sm:$0xff]
        %v1011 = vld [vmem:[%s10 + $0x10] sm:$0xff]
        %v1012 = vld [vmem:[%s10 + $0x18] sm:$0xff]
        %v1013 = vld [vmem:[%s12] sm:$0x1]
        %v1015 = vlaneseq
        %v1016 = vshrl.u32 %v1015, 7
        %v1017 = vsub.s32 0, %v1016
        %v1018 = vrot.slane %v1013, %v1017
        %v1021 = vsel %vm755, %v1007, 0
        %v1024 = vsel %vm755, %v1008, 0
        %1026 = vmatprep.subr.mxu0 0.0
        %1027 = vmatpush1.msra.mxu0 %v1009
        %1028 = vmatprep.subr.mxu0 0.0
        %1029 = vmatpush1.msra.mxu0 %v1010
        %1030 = vmatprep.subr.mxu0 0.0
        %1031 = vmatpush1.msra.mxu0 %v1011
        %1032 = vmatprep.subr.mxu0 0.0
        %1033 = vmatpush1.msra.mxu0 %v1012
        %1034 = vmatprep.subr.mxu0 0.0
        %1035 = vmatpush1.msra.mxu0 0.0
        %1036 = vmatprep.subr.mxu0 0.0
        %1037 = vmatpush1.msra.mxu0 0.0
        %1038 = vmatprep.subr.mxu0 0.0
        %1039 = vmatpush1.msra.mxu0 0.0
        %1040 = vmatprep.subr.mxu0 0.0
        %1041 = vmatpush1.msra.mxu0 0.0
        %1042 = vmatprep.subr.mxu0 0.0
        %1043 = vmatpush1.msra.mxu0 0.0
        %1044 = vmatprep.subr.mxu0 0.0
        %1045 = vmatpush1.msra.mxu0 0.0
        %1046 = vmatprep.subr.mxu0 0.0
        %1047 = vmatpush1.msra.mxu0 0.0
        %1048 = vmatprep.subr.mxu0 0.0
        %1049 = vmatpush1.msra.mxu0 0.0
        %1050 = vmatprep.subr.mxu0 0.0
        %1051 = vmatpush1.msra.mxu0 0.0
        %1052 = vmatprep.subr.mxu0 0.0
        %1053 = vmatpush1.msra.mxu0 0.0
        %1054 = vmatprep.subr.mxu0 0.0
        %1055 = vmatpush1.msra.mxu0 0.0
        %1056 = vmatprep.subr.mxu0 0.0
        %1057 = vmatpush1.msra.mxu0 0.0
        %1058 = vmatprep.subr.mxu0 0.0
        %1059 = vmatpush1.msra.mxu0 0.0
        %1060 = vmatprep.subr.mxu0 0.0
        %1061 = vmatpush1.msra.mxu0 0.0
        %1062 = vmatprep.subr.mxu0 0.0
        %1063 = vmatpush1.msra.mxu0 0.0
        %1064 = vmatprep.subr.mxu0 0.0
        %1065 = vmatpush1.msra.mxu0 0.0
        %1066 = vmatprep.subr.mxu0 0.0
        %1067 = vmatpush1.msra.mxu0 0.0
        %1068 = vmatprep.subr.mxu0 0.0
        %1069 = vmatpush1.msra.mxu0 0.0
        %1070 = vmatprep.subr.mxu0 0.0
        %1071 = vmatpush1.msra.mxu0 0.0
        %1072 = vmatprep.subr.mxu0 0.0
        %1073 = vmatpush1.msra.mxu0 0.0
        %1074 = vmatprep.subr.mxu0 0.0
        %1075 = vmatpush1.msra.mxu0 0.0
        %1076 = vmatprep.subr.mxu0 0.0
        %1077 = vmatpush1.msra.mxu0 0.0
        %1078 = vmatprep.subr.mxu0 0.0
        %1079 = vmatpush1.msra.mxu0 0.0
        %1080 = vmatprep.subr.mxu0 0.0
        %1081 = vmatpush1.msra.mxu0 0.0
        %1082 = vmatprep.subr.mxu0 0.0
        %1083 = vmatpush1.msra.mxu0 0.0
        %1084 = vmatprep.subr.mxu0 0.0
        %1085 = vmatpush1.msra.mxu0 0.0
        %1086 = vmatprep.subr.mxu0 0.0
        %1087 = vmatpush1.msra.mxu0 0.0
        %1088 = vmatprep.subr.mxu0 0.0
        %1089 = vmatpush1.msra.mxu0 0.0
        %1090 = vmatprep.mubr.f32.mxu0 0.0
        %1091 = vmatmul.mubr.f32.gmra.mrb[0].mxu0 %v1021
        %v1092 = vpop.f32.mrb[0].mxu0
        %v1093 = vadd.f32 %v1018, %v1092
        %v1094 = vpop.f32.mrb[0].mxu0
        %1095 = vmatprep.mubr.f32.mxu0 0.0
        %1096 = vmatmul.mubr.f32.gmra.mrb[0].mxu0 %v1024
        %v1097 = vpop.f32.mrb[0].mxu0
        %v1098 = vadd.f32 %v1018, %v1097
        %v1099 = vpop.f32.mrb[0].mxu0
        %1100 = vdwg.mxu0
        %1101 = vst [vmem:[#allocation2] sm:$0xff] %v1093
        %1102 = vst [vmem:[#allocation2 + $0x8] sm:$0xff] %v1098
        %v1103 = vld [vmem:[%s11] sm:$0xff]
        %v1104 = vld [vmem:[%s11 + $0x8] sm:$0xff]
        %vm1105 = vcmp.eq.s32.totalorder %v710, 0
        %v1106 = vld [vmem:[#allocation2] sm:$0x1]
        %v1107 = vld [vmem:[#allocation2 + $0xf] sm:$0x1]
        %v1109 = vrot.slane %v1107, 7
        %1110 = vrot.lane.b32.xlu0 %v1109, 64
        %v1111 = vpop.permute.xlu0 %1110
        %v1113 = vsel %vm553, %v1106, %v1111
        %v1115 = vsel %vm706, 0.0, 0
        %1117 = vmatprep.subr.mxu0 0.0
        %1118 = vmatpush1.msra.mxu0 %v1103
        %1119 = vmatprep.subr.mxu0 0.0
        %1120 = vmatpush1.msra.mxu0 %v1104
        %1121 = vmatprep.subr.mxu0 0.0
        %1122 = vmatpush1.msra.mxu0 0.0
        %1123 = vmatprep.subr.mxu0 0.0
        %1124 = vmatpush1.msra.mxu0 0.0
        %1125 = vmatprep.subr.mxu0 0.0
        %1126 = vmatpush1.msra.mxu0 0.0
        %1127 = vmatprep.subr.mxu0 0.0
        %1128 = vmatpush1.msra.mxu0 0.0
        %1129 = vmatprep.subr.mxu0 0.0
        %1130 = vmatpush1.msra.mxu0 0.0
        %1131 = vmatprep.subr.mxu0 0.0
        %1132 = vmatpush1.msra.mxu0 0.0
        %1133 = vmatprep.subr.mxu0 0.0
        %1134 = vmatpush1.msra.mxu0 0.0
        %1135 = vmatprep.subr.mxu0 0.0
        %1136 = vmatpush1.msra.mxu0 0.0
        %1137 = vmatprep.subr.mxu0 0.0
        %1138 = vmatpush1.msra.mxu0 0.0
        %1139 = vmatprep.subr.mxu0 0.0
        %1140 = vmatpush1.msra.mxu0 0.0
        %1141 = vmatprep.subr.mxu0 0.0
        %1142 = vmatpush1.msra.mxu0 0.0
        %1143 = vmatprep.subr.mxu0 0.0
        %1144 = vmatpush1.msra.mxu0 0.0
        %1145 = vmatprep.subr.mxu0 0.0
        %1146 = vmatpush1.msra.mxu0 0.0
        %1147 = vmatprep.subr.mxu0 0.0
        %1148 = vmatpush1.msra.mxu0 0.0
        %1149 = vmatprep.subr.mxu0 0.0
        %1150 = vmatpush1.msra.mxu0 0.0
        %1151 = vmatprep.subr.mxu0 0.0
        %1152 = vmatpush1.msra.mxu0 0.0
        %1153 = vmatprep.subr.mxu0 0.0
        %1154 = vmatpush1.msra.mxu0 0.0
        %1155 = vmatprep.subr.mxu0 0.0
        %1156 = vmatpush1.msra.mxu0 0.0
        %1157 = vmatprep.subr.mxu0 0.0
        %1158 = vmatpush1.msra.mxu0 0.0
        %1159 = vmatprep.subr.mxu0 0.0
        %1160 = vmatpush1.msra.mxu0 0.0
        %1161 = vmatprep.subr.mxu0 0.0
        %1162 = vmatpush1.msra.mxu0 0.0
        %1163 = vmatprep.subr.mxu0 0.0
        %1164 = vmatpush1.msra.mxu0 0.0
        %1165 = vmatprep.subr.mxu0 0.0
        %1166 = vmatpush1.msra.mxu0 0.0
        %1167 = vmatprep.subr.mxu0 0.0
        %1168 = vmatpush1.msra.mxu0 0.0
        %1169 = vmatprep.subr.mxu0 0.0
        %1170 = vmatpush1.msra.mxu0 0.0
        %1171 = vmatprep.subr.mxu0 0.0
        %1172 = vmatpush1.msra.mxu0 0.0
        %1173 = vmatprep.subr.mxu0 0.0
        %1174 = vmatpush1.msra.mxu0 0.0
        %1175 = vmatprep.subr.mxu0 0.0
        %1176 = vmatpush1.msra.mxu0 0.0
        %1177 = vmatprep.subr.mxu0 0.0
        %1178 = vmatpush1.msra.mxu0 0.0
        %1179 = vmatprep.subr.mxu0 0.0
        %1180 = vmatpush1.msra.mxu0 0.0
        %1181 = vmatprep.mubr.f32.mxu0 0.0
        %1182 = vmatmul.mubr.f32.gmra.mrb[0].mxu0 %v1115
        %v1183 = vpop.f32.mrb[0].mxu0
        %v1184 = vadd.f32 0.0, %v1183
        %v1185 = vpop.f32.mrb[0].mxu0
        %1186 = vdwg.mxu0
        %v1187 = vsel %vm1105, 1, 0
        %vm1188 = vcmp.eq.s32.totalorder %v1187, 1
        %1190 = vrot.lane.b32.xlu0 %v1184, 64
        %v1191 = vpop.permute.xlu0 %1190
        %v1193 = vsel %vm1188, %v1184, %v1191
        %v1194 = vadd.f32 %v1113, %v1193
        %v1195 = vxor.u32 %v1194, 2147483648
        %v1196 = vmul.f32 %v1195, 1.442695
        %v1197 = vpow.pop %v1196
        %v1198 = vadd.f32 %v1197, 1.0
        %v1199 = vrcp.pop %v1198
        %v1200 = vmul.f32 1.0, %v1199
        %v1201 = vtanh.pop %v1194
        %v1202 = vmul.f32 %v1200, 0.0
        %1204 = vrot.lane.b32.xlu0 %v1201, 80
        %v1205 = vpop.permute.xlu0 %1204
        %v1207 = vmul.f32 %v1200, %v1205
        %1209 = vrot.lane.b32.xlu0 %v1207, 16
        %v1210 = vpop.permute.xlu0 %1209
        %v1212 = vadd.f32 %v1202, %v1210
        %v1213 = vtanh.pop %v1212
        %1215 = vrot.lane.b32.xlu0 %v1213, 16
        %v1216 = vpop.permute.xlu0 %1215
        %v1218 = vmul.f32 %v1200, %v1216
        %v1219 = vsel %vm1105, 0, 15
        %vm1220 = vcmp.lt.s32.totalorder %v1219, %v712
        %v1221 = vsel %vm1220, 1, 0
        %v1222 = vcvt.s32.f32 %v1221
        %v1223 = vmul.f32 %v1218, %v1222
        %v1224 = vmul.f32 %v1212, %v1222
        %1226 = vrot.lane.b32.xlu0 %v1223, 96
        %v1227 = vpop.permute.xlu0 %1226
        %1229 = vst.msk [vmem:[#allocation3] sm:$0x1] %vm549, %v1227
        %1230 = vrot.lane.b32.xlu0 %v1223, 112
        %v1231 = vpop.permute.xlu0 %1230
        %vm1233 = vcmask 255105
        %1234 = vst.msk [vmem:[#allocation3 + $0xe] sm:$0x2] %vm1233, %v1231
        %v1235 = vld [vmem:[#allocation2 + $0x1] sm:$0x1]
        %v1236 = vld [vmem:[#allocation2 + $0xe] sm:$0x1]
        %v1238 = vrot.slane %v1236, 7
        %1239 = vrot.lane.b32.xlu0 %v1238, 64
        %v1240 = vpop.permute.xlu0 %1239
        %v1242 = vsel %vm553, %v1235, %v1240
        %v1243 = vsel %vm706, %v1227, 0
        %1245 = vmatprep.subr.mxu0 0.0
        %1246 = vmatpush1.msra.mxu0 %v1103
        %1247 = vmatprep.subr.mxu0 0.0
        %1248 = vmatpush1.msra.mxu0 %v1104
        %1249 = vmatprep.subr.mxu0 0.0
        %1250 = vmatpush1.msra.mxu0 0.0
        %1251 = vmatprep.subr.mxu0 0.0
        %1252 = vmatpush1.msra.mxu0 0.0
        %1253 = vmatprep.subr.mxu0 0.0
        %1254 = vmatpush1.msra.mxu0 0.0
        %1255 = vmatprep.subr.mxu0 0.0
        %1256 = vmatpush1.msra.mxu0 0.0
        %1257 = vmatprep.subr.mxu0 0.0
        %1258 = vmatpush1.msra.mxu0 0.0
        %1259 = vmatprep.subr.mxu0 0.0
        %1260 = vmatpush1.msra.mxu0 0.0
        %1261 = vmatprep.subr.mxu0 0.0
        %1262 = vmatpush1.msra.mxu0 0.0
        %1263 = vmatprep.subr.mxu0 0.0
        %1264 = vmatpush1.msra.mxu0 0.0
        %1265 = vmatprep.subr.mxu0 0.0
        %1266 = vmatpush1.msra.mxu0 0.0
        %1267 = vmatprep.subr.mxu0 0.0
        %1268 = vmatpush1.msra.mxu0 0.0
        %1269 = vmatprep.subr.mxu0 0.0
        %1270 = vmatpush1.msra.mxu0 0.0
        %1271 = vmatprep.subr.mxu0 0.0
        %1272 = vmatpush1.msra.mxu0 0.0
        %1273 = vmatprep.subr.mxu0 0.0
        %1274 = vmatpush1.msra.mxu0 0.0
        %1275 = vmatprep.subr.mxu0 0.0
        %1276 = vmatpush1.msra.mxu0 0.0
        %1277 = vmatprep.subr.mxu0 0.0
        %1278 = vmatpush1.msra.mxu0 0.0
        %1279 = vmatprep.subr.mxu0 0.0
        %1280 = vmatpush1.msra.mxu0 0.0
        %1281 = vmatprep.subr.mxu0 0.0
        %1282 = vmatpush1.msra.mxu0 0.0
        %1283 = vmatprep.subr.mxu0 0.0
        %1284 = vmatpush1.msra.mxu0 0.0
        %1285 = vmatprep.subr.mxu0 0.0
        %1286 = vmatpush1.msra.mxu0 0.0
        %1287 = vmatprep.subr.mxu0 0.0
        %1288 = vmatpush1.msra.mxu0 0.0
        %1289 = vmatprep.subr.mxu0 0.0
        %1290 = vmatpush1.msra.mxu0 0.0
        %1291 = vmatprep.subr.mxu0 0.0
        %1292 = vmatpush1.msra.mxu0 0.0
        %1293 = vmatprep.subr.mxu0 0.0
        %1294 = vmatpush1.msra.mxu0 0.0
        %1295 = vmatprep.subr.mxu0 0.0
        %1296 = vmatpush1.msra.mxu0 0.0
        %1297 = vmatprep.subr.mxu0 0.0
        %1298 = vmatpush1.msra.mxu0 0.0
        %1299 = vmatprep.subr.mxu0 0.0
        %1300 = vmatpush1.msra.mxu0 0.0
        %1301 = vmatprep.subr.mxu0 0.0
        %1302 = vmatpush1.msra.mxu0 0.0
        %1303 = vmatprep.subr.mxu0 0.0
        %1304 = vmatpush1.msra.mxu0 0.0
        %1305 = vmatprep.subr.mxu0 0.0
        %1306 = vmatpush1.msra.mxu0 0.0
        %1307 = vmatprep.subr.mxu0 0.0
        %1308 = vmatpush1.msra.mxu0 0.0
        %1309 = vmatprep.mubr.f32.mxu0 0.0
        %1310 = vmatmul.mubr.f32.gmra.mrb[0].mxu0 %v1243
        %v1311 = vpop.f32.mrb[0].mxu0
        %v1312 = vadd.f32 0.0, %v1311
        %v1313 = vpop.f32.mrb[0].mxu0
        %1314 = vdwg.mxu0
        %1316 = vrot.lane.b32.xlu0 %v1312, 64
        %v1317 = vpop.permute.xlu0 %1316
        %v1319 = vsel %vm1188, %v1312, %v1317
        %v1320 = vadd.f32 %v1242, %v1319
        %v1321 = vxor.u32 %v1320, 2147483648
        %v1322 = vmul.f32 %v1321, 1.442695
        %v1323 = vpow.pop %v1322
        %v1324 = vadd.f32 %v1323, 1.0
        %v1325 = vrcp.pop %v1324
        %v1326 = vmul.f32 1.0, %v1325
        %v1327 = vtanh.pop %v1320
        %v1328 = vmul.f32 %v1326, %v1224
        %1330 = vrot.lane.b32.xlu0 %v1327, 80
        %v1331 = vpop.permute.xlu0 %1330
        %v1333 = vmul.f32 %v1326, %v1331
        %1335 = vrot.lane.b32.xlu0 %v1333, 16
        %v1336 = vpop.permute.xlu0 %1335
        %v1338 = vadd.f32 %v1328, %v1336
        %v1339 = vtanh.pop %v1338
        %1341 = vrot.lane.b32.xlu0 %v1339, 16
        %v1342 = vpop.permute.xlu0 %1341
        %v1344 = vmul.f32 %v1326, %v1342
        %v1345 = vsel %vm1105, 1, 14
        %vm1346 = vcmp.lt.s32.totalorder %v1345, %v712
        %v1347 = vsel %vm1346, 1, 0
        %v1348 = vcvt.s32.f32 %v1347
        %v1349 = vmul.f32 %v1344, %v1348
        %v1350 = vmul.f32 %v1338, %v1348
        %1352 = vrot.lane.b32.xlu0 %v1349, 96
        %v1353 = vpop.permute.xlu0 %1352
        %1355 = vst.msk [vmem:[#allocation3 + $0x1] sm:$0x1] %vm549, %v1353
        %1356 = vrot.lane.b32.xlu0 %v1349, 112
        %v1357 = vpop.permute.xlu0 %1356
        %1359 = vst.msk [vmem:[#allocation3 + $0xd] sm:$0x2] %vm1233, %v1357
        %v1360 = vld [vmem:[#allocation2 + $0x2] sm:$0x1]
        %v1361 = vld [vmem:[#allocation2 + $0xd] sm:$0x1]
        %v1363 = vrot.slane %v1361, 7
        %1364 = vrot.lane.b32.xlu0 %v1363, 64
        %v1365 = vpop.permute.xlu0 %1364
        %v1367 = vsel %vm553, %v1360, %v1365
        %v1368 = vsel %vm706, %v1353, 0
        %1370 = vmatprep.subr.mxu0 0.0
        %1371 = vmatpush1.msra.mxu0 %v1103
        %1372 = vmatprep.subr.mxu0 0.0
        %1373 = vmatpush1.msra.mxu0 %v1104
        %1374 = vmatprep.subr.mxu0 0.0
        %1375 = vmatpush1.msra.mxu0 0.0
        %1376 = vmatprep.subr.mxu0 0.0
        %1377 = vmatpush1.msra.mxu0 0.0
        %1378 = vmatprep.subr.mxu0 0.0
        %1379 = vmatpush1.msra.mxu0 0.0
        %1380 = vmatprep.subr.mxu0 0.0
        %1381 = vmatpush1.msra.mxu0 0.0
        %1382 = vmatprep.subr.mxu0 0.0
        %1383 = vmatpush1.msra.mxu0 0.0
        %1384 = vmatprep.subr.mxu0 0.0
        %1385 = vmatpush1.msra.mxu0 0.0
        %1386 = vmatprep.subr.mxu0 0.0
        %1387 = vmatpush1.msra.mxu0 0.0
        %1388 = vmatprep.subr.mxu0 0.0
        %1389 = vmatpush1.msra.mxu0 0.0
        %1390 = vmatprep.subr.mxu0 0.0
        %1391 = vmatpush1.msra.mxu0 0.0
        %1392 = vmatprep.subr.mxu0 0.0
        %1393 = vmatpush1.msra.mxu0 0.0
        %1394 = vmatprep.subr.mxu0 0.0
        %1395 = vmatpush1.msra.mxu0 0.0
        %1396 = vmatprep.subr.mxu0 0.0
        %1397 = vmatpush1.msra.mxu0 0.0
        %1398 = vmatprep.subr.mxu0 0.0
        %1399 = vmatpush1.msra.mxu0 0.0
        %1400 = vmatprep.subr.mxu0 0.0
        %1401 = vmatpush1.msra.mxu0 0.0
        %1402 = vmatprep.subr.mxu0 0.0
        %1403 = vmatpush1.msra.mxu0 0.0
        %1404 = vmatprep.subr.mxu0 0.0
        %1405 = vmatpush1.msra.mxu0 0.0
        %1406 = vmatprep.subr.mxu0 0.0
        %1407 = vmatpush1.msra.mxu0 0.0
        %1408 = vmatprep.subr.mxu0 0.0
        %1409 = vmatpush1.msra.mxu0 0.0
        %1410 = vmatprep.subr.mxu0 0.0
        %1411 = vmatpush1.msra.mxu0 0.0
        %1412 = vmatprep.subr.mxu0 0.0
        %1413 = vmatpush1.msra.mxu0 0.0
        %1414 = vmatprep.subr.mxu0 0.0
        %1415 = vmatpush1.msra.mxu0 0.0
        %1416 = vmatprep.subr.mxu0 0.0
        %1417 = vmatpush1.msra.mxu0 0.0
        %1418 = vmatprep.subr.mxu0 0.0
        %1419 = vmatpush1.msra.mxu0 0.0
        %1420 = vmatprep.subr.mxu0 0.0
        %1421 = vmatpush1.msra.mxu0 0.0
        %1422 = vmatprep.subr.mxu0 0.0
        %1423 = vmatpush1.msra.mxu0 0.0
        %1424 = vmatprep.subr.mxu0 0.0
        %1425 = vmatpush1.msra.mxu0 0.0
        %1426 = vmatprep.subr.mxu0 0.0
        %1427 = vmatpush1.msra.mxu0 0.0
        %1428 = vmatprep.subr.mxu0 0.0
        %1429 = vmatpush1.msra.mxu0 0.0
        %1430 = vmatprep.subr.mxu0 0.0
        %1431 = vmatpush1.msra.mxu0 0.0
        %1432 = vmatprep.subr.mxu0 0.0
        %1433 = vmatpush1.msra.mxu0 0.0
        %1434 = vmatprep.mubr.f32.mxu0 0.0
        %1435 = vmatmul.mubr.f32.gmra.mrb[0].mxu0 %v1368
        %v1436 = vpop.f32.mrb[0].mxu0
        %v1437 = vadd.f32 0.0, %v1436
        %v1438 = vpop.f32.mrb[0].mxu0
        %1439 = vdwg.mxu0
        %1441 = vrot.lane.b32.xlu0 %v1437, 64
        %v1442 = vpop.permute.xlu0 %1441
        %v1444 = vsel %vm1188, %v1437, %v1442
        %v1445 = vadd.f32 %v1367, %v1444
        %v1446 = vxor.u32 %v1445, 2147483648
        %v1447 = vmul.f32 %v1446, 1.442695
        %v1448 = vpow.pop %v1447
        %v1449 = vadd.f32 %v1448, 1.0
        %v1450 = vrcp.pop %v1449
        %v1451 = vmul.f32 1.0, %v1450
        %v1452 = vtanh.pop %v1445
        %v1453 = vmul.f32 %v1451, %v1350
        %1455 = vrot.lane.b32.xlu0 %v1452, 80
        %v1456 = vpop.permute.xlu0 %1455
        %v1458 = vmul.f32 %v1451, %v1456
        %1460 = vrot.lane.b32.xlu0 %v1458, 16
        %v1461 = vpop.permute.xlu0 %1460
        %v1463 = vadd.f32 %v1453, %v1461
        %v1464 = vtanh.pop %v1463
        %1466 = vrot.lane.b32.xlu0 %v1464, 16
        %v1467 = vpop.permute.xlu0 %1466
        %v1469 = vmul.f32 %v1451, %v1467
        %v1470 = vsel %vm1105, 2, 13
        %vm1471 = vcmp.lt.s32.totalorder %v1470, %v712
        %v1472 = vsel %vm1471, 1, 0
        %v1473 = vcvt.s32.f32 %v1472
        %v1474 = vmul.f32 %v1469, %v1473
        %v1475 = vmul.f32 %v1463, %v1473
        %1477 = vrot.lane.b32.xlu0 %v1474, 96
        %v1478 = vpop.permute.xlu0 %1477
        %1480 = vst.msk [vmem:[#allocation3 + $0x2] sm:$0x1] %vm549, %v1478
        %1481 = vrot.lane.b32.xlu0 %v1474, 112
        %v1482 = vpop.permute.xlu0 %1481
        %1484 = vst.msk [vmem:[#allocation3 + $0xc] sm:$0x2] %vm1233, %v1482
        %v1485 = vld [vmem:[#allocation2 + $0x3] sm:$0x1]
        %v1486 = vld [vmem:[#allocation2 + $0xc] sm:$0x1]
        %v1488 = vrot.slane %v1486, 7
        %1489 = vrot.lane.b32.xlu0 %v1488, 64
        %v1490 = vpop.permute.xlu0 %1489
        %v1492 = vsel %vm553, %v1485, %v1490
        %v1493 = vsel %vm706, %v1478, 0
        %1495 = vmatprep.subr.mxu0 0.0
        %1496 = vmatpush1.msra.mxu0 %v1103
        %1497 = vmatprep.subr.mxu0 0.0
        %1498 = vmatpush1.msra.mxu0 %v1104
        %1499 = vmatprep.subr.mxu0 0.0
        %1500 = vmatpush1.msra.mxu0 0.0
        %1501 = vmatprep.subr.mxu0 0.0
        %1502 = vmatpush1.msra.mxu0 0.0
        %1503 = vmatprep.subr.mxu0 0.0
        %1504 = vmatpush1.msra.mxu0 0.0
        %1505 = vmatprep.subr.mxu0 0.0
        %1506 = vmatpush1.msra.mxu0 0.0
        %1507 = vmatprep.subr.mxu0 0.0
        %1508 = vmatpush1.msra.mxu0 0.0
        %1509 = vmatprep.subr.mxu0 0.0
        %1510 = vmatpush1.msra.mxu0 0.0
        %1511 = vmatprep.subr.mxu0 0.0
        %1512 = vmatpush1.msra.mxu0 0.0
        %1513 = vmatprep.subr.mxu0 0.0
        %1514 = vmatpush1.msra.mxu0 0.0
        %1515 = vmatprep.subr.mxu0 0.0
        %1516 = vmatpush1.msra.mxu0 0.0
        %1517 = vmatprep.subr.mxu0 0.0
        %1518 = vmatpush1.msra.mxu0 0.0
        %1519 = vmatprep.subr.mxu0 0.0
        %1520 = vmatpush1.msra.mxu0 0.0
        %1521 = vmatprep.subr.mxu0 0.0
        %1522 = vmatpush1.msra.mxu0 0.0
        %1523 = vmatprep.subr.mxu0 0.0
        %1524 = vmatpush1.msra.mxu0 0.0
        %1525 = vmatprep.subr.mxu0 0.0
        %1526 = vmatpush1.msra.mxu0 0.0
        %1527 = vmatprep.subr.mxu0 0.0
        %1528 = vmatpush1.msra.mxu0 0.0
        %1529 = vmatprep.subr.mxu0 0.0
        %1530 = vmatpush1.msra.mxu0 0.0
        %1531 = vmatprep.subr.mxu0 0.0
        %1532 = vmatpush1.msra.mxu0 0.0
        %1533 = vmatprep.subr.mxu0 0.0
        %1534 = vmatpush1.msra.mxu0 0.0
        %1535 = vmatprep.subr.mxu0 0.0
        %1536 = vmatpush1.msra.mxu0 0.0
        %1537 = vmatprep.subr.mxu0 0.0
        %1538 = vmatpush1.msra.mxu0 0.0
        %1539 = vmatprep.subr.mxu0 0.0
        %1540 = vmatpush1.msra.mxu0 0.0
        %1541 = vmatprep.subr.mxu0 0.0
        %1542 = vmatpush1.msra.mxu0 0.0
        %1543 = vmatprep.subr.mxu0 0.0
        %1544 = vmatpush1.msra.mxu0 0.0
        %1545 = vmatprep.subr.mxu0 0.0
        %1546 = vmatpush1.msra.mxu0 0.0
        %1547 = vmatprep.subr.mxu0 0.0
        %1548 = vmatpush1.msra.mxu0 0.0
        %1549 = vmatprep.subr.mxu0 0.0
        %1550 = vmatpush1.msra.mxu0 0.0
        %1551 = vmatprep.subr.mxu0 0.0
        %1552 = vmatpush1.msra.mxu0 0.0
        %1553 = vmatprep.subr.mxu0 0.0
        %1554 = vmatpush1.msra.mxu0 0.0
        %1555 = vmatprep.subr.mxu0 0.0
        %1556 = vmatpush1.msra.mxu0 0.0
        %1557 = vmatprep.subr.mxu0 0.0
        %1558 = vmatpush1.msra.mxu0 0.0
        %1559 = vmatprep.mubr.f32.mxu0 0.0
        %1560 = vmatmul.mubr.f32.gmra.mrb[0].mxu0 %v1493
        %v1561 = vpop.f32.mrb[0].mxu0
        %v1562 = vadd.f32 0.0, %v1561
        %v1563 = vpop.f32.mrb[0].mxu0
        %1564 = vdwg.mxu0
        %1566 = vrot.lane.b32.xlu0 %v1562, 64
        %v1567 = vpop.permute.xlu0 %1566
        %v1569 = vsel %vm1188, %v1562, %v1567
        %v1570 = vadd.f32 %v1492, %v1569
        %v1571 = vxor.u32 %v1570, 2147483648
        %v1572 = vmul.f32 %v1571, 1.442695
        %v1573 = vpow.pop %v1572
        %v1574 = vadd.f32 %v1573, 1.0
        %v1575 = vrcp.pop %v1574
        %v1576 = vmul.f32 1.0, %v1575
        %v1577 = vtanh.pop %v1570
        %v1578 = vmul.f32 %v1576, %v1475
        %1580 = vrot.lane.b32.xlu0 %v1577, 80
        %v1581 = vpop.permute.xlu0 %1580
        %v1583 = vmul.f32 %v1576, %v1581
        %1585 = vrot.lane.b32.xlu0 %v1583, 16
        %v1586 = vpop.permute.xlu0 %1585
        %v1588 = vadd.f32 %v1578, %v1586
        %v1589 = vtanh.pop %v1588
        %1591 = vrot.lane.b32.xlu0 %v1589, 16
        %v1592 = vpop.permute.xlu0 %1591
        %v1594 = vmul.f32 %v1576, %v1592
        %v1595 = vsel %vm1105, 3, 12
        %vm1596 = vcmp.lt.s32.totalorder %v1595, %v712
        %v1597 = vsel %vm1596, 1, 0
        %v1598 = vcvt.s32.f32 %v1597
        %v1599 = vmul.f32 %v1594, %v1598
        %v1600 = vmul.f32 %v1588, %v1598
        %1602 = vrot.lane.b32.xlu0 %v1599, 96
        %v1603 = vpop.permute.xlu0 %1602
        %1605 = vst.msk [vmem:[#allocation3 + $0x3] sm:$0x1] %vm549, %v1603
        %1606 = vrot.lane.b32.xlu0 %v1599, 112
        %v1607 = vpop.permute.xlu0 %1606
        %1609 = vst.msk [vmem:[#allocation3 + $0xb] sm:$0x2] %vm1233, %v1607
        %v1610 = vld [vmem:[#allocation2 + $0x4] sm:$0x1]
        %v1611 = vld [vmem:[#allocation2 + $0xb] sm:$0x1]
        %v1613 = vrot.slane %v1611, 7
        %1614 = vrot.lane.b32.xlu0 %v1613, 64
        %v1615 = vpop.permute.xlu0 %1614
        %v1617 = vsel %vm553, %v1610, %v1615
        %v1618 = vsel %vm706, %v1603, 0
        %1620 = vmatprep.subr.mxu0 0.0
        %1621 = vmatpush1.msra.mxu0 %v1103
        %1622 = vmatprep.subr.mxu0 0.0
        %1623 = vmatpush1.msra.mxu0 %v1104
        %1624 = vmatprep.subr.mxu0 0.0
        %1625 = vmatpush1.msra.mxu0 0.0
        %1626 = vmatprep.subr.mxu0 0.0
        %1627 = vmatpush1.msra.mxu0 0.0
        %1628 = vmatprep.subr.mxu0 0.0
        %1629 = vmatpush1.msra.mxu0 0.0
        %1630 = vmatprep.subr.mxu0 0.0
        %1631 = vmatpush1.msra.mxu0 0.0
        %1632 = vmatprep.subr.mxu0 0.0
        %1633 = vmatpush1.msra.mxu0 0.0
        %1634 = vmatprep.subr.mxu0 0.0
        %1635 = vmatpush1.msra.mxu0 0.0
        %1636 = vmatprep.subr.mxu0 0.0
        %1637 = vmatpush1.msra.mxu0 0.0
        %1638 = vmatprep.subr.mxu0 0.0
        %1639 = vmatpush1.msra.mxu0 0.0
        %1640 = vmatprep.subr.mxu0 0.0
        %1641 = vmatpush1.msra.mxu0 0.0
        %1642 = vmatprep.subr.mxu0 0.0
        %1643 = vmatpush1.msra.mxu0 0.0
        %1644 = vmatprep.subr.mxu0 0.0
        %1645 = vmatpush1.msra.mxu0 0.0
        %1646 = vmatprep.subr.mxu0 0.0
        %1647 = vmatpush1.msra.mxu0 0.0
        %1648 = vmatprep.subr.mxu0 0.0
        %1649 = vmatpush1.msra.mxu0 0.0
        %1650 = vmatprep.subr.mxu0 0.0
        %1651 = vmatpush1.msra.mxu0 0.0
        %1652 = vmatprep.subr.mxu0 0.0
        %1653 = vmatpush1.msra.mxu0 0.0
        %1654 = vmatprep.subr.mxu0 0.0
        %1655 = vmatpush1.msra.mxu0 0.0
        %1656 = vmatprep.subr.mxu0 0.0
        %1657 = vmatpush1.msra.mxu0 0.0
        %1658 = vmatprep.subr.mxu0 0.0
        %1659 = vmatpush1.msra.mxu0 0.0
        %1660 = vmatprep.subr.mxu0 0.0
        %1661 = vmatpush1.msra.mxu0 0.0
        %1662 = vmatprep.subr.mxu0 0.0
        %1663 = vmatpush1.msra.mxu0 0.0
        %1664 = vmatprep.subr.mxu0 0.0
        %1665 = vmatpush1.msra.mxu0 0.0
        %1666 = vmatprep.subr.mxu0 0.0
        %1667 = vmatpush1.msra.mxu0 0.0
        %1668 = vmatprep.subr.mxu0 0.0
        %1669 = vmatpush1.msra.mxu0 0.0
        %1670 = vmatprep.subr.mxu0 0.0
        %1671 = vmatpush1.msra.mxu0 0.0
        %1672 = vmatprep.subr.mxu0 0.0
        %1673 = vmatpush1.msra.mxu0 0.0
        %1674 = vmatprep.subr.mxu0 0.0
        %1675 = vmatpush1.msra.mxu0 0.0
        %1676 = vmatprep.subr.mxu0 0.0
        %1677 = vmatpush1.msra.mxu0 0.0
        %1678 = vmatprep.subr.mxu0 0.0
        %1679 = vmatpush1.msra.mxu0 0.0
        %1680 = vmatprep.subr.mxu0 0.0
        %1681 = vmatpush1.msra.mxu0 0.0
        %1682 = vmatprep.subr.mxu0 0.0
        %1683 = vmatpush1.msra.mxu0 0.0
        %1684 = vmatprep.mubr.f32.mxu0 0.0
        %1685 = vmatmul.mubr.f32.gmra.mrb[0].mxu0 %v1618
        %v1686 = vpop.f32.mrb[0].mxu0
        %v1687 = vadd.f32 0.0, %v1686
        %v1688 = vpop.f32.mrb[0].mxu0
        %1689 = vdwg.mxu0
        %1691 = vrot.lane.b32.xlu0 %v1687, 64
        %v1692 = vpop.permute.xlu0 %1691
        %v1694 = vsel %vm1188, %v1687, %v1692
        %v1695 = vadd.f32 %v1617, %v1694
        %v1696 = vxor.u32 %v1695, 2147483648
        %v1697 = vmul.f32 %v1696, 1.442695
        %v1698 = vpow.pop %v1697
        %v1699 = vadd.f32 %v1698, 1.0
        %v1700 = vrcp.pop %v1699
        %v1701 = vmul.f32 1.0, %v1700
        %v1702 = vtanh.pop %v1695
        %v1703 = vmul.f32 %v1701, %v1600
        %1705 = vrot.lane.b32.xlu0 %v1702, 80
        %v1706 = vpop.permute.xlu0 %1705
        %v1708 = vmul.f32 %v1701, %v1706
        %1710 = vrot.lane.b32.xlu0 %v1708, 16
        %v1711 = vpop.permute.xlu0 %1710
        %v1713 = vadd.f32 %v1703, %v1711
        %v1714 = vtanh.pop %v1713
        %1716 = vrot.lane.b32.xlu0 %v1714, 16
        %v1717 = vpop.permute.xlu0 %1716
        %v1719 = vmul.f32 %v1701, %v1717
        %v1720 = vsel %vm1105, 4, 11
        %vm1721 = vcmp.lt.s32.totalorder %v1720, %v712
        %v1722 = vsel %vm1721, 1, 0
        %v1723 = vcvt.s32.f32 %v1722
        %v1724 = vmul.f32 %v1719, %v1723
        %v1725 = vmul.f32 %v1713, %v1723
        %1727 = vrot.lane.b32.xlu0 %v1724, 96
        %v1728 = vpop.permute.xlu0 %1727
        %1730 = vst.msk [vmem:[#allocation3 + $0x4] sm:$0x1] %vm549, %v1728
        %1731 = vrot.lane.b32.xlu0 %v1724, 112
        %v1732 = vpop.permute.xlu0 %1731
        %1734 = vst.msk [vmem:[#allocation3 + $0xa] sm:$0x2] %vm1233, %v1732
        %v1735 = vld [vmem:[#allocation2 + $0x5] sm:$0x1]
        %v1736 = vld [vmem:[#allocation2 + $0xa] sm:$0x1]
        %v1738 = vrot.slane %v1736, 7
        %1739 = vrot.lane.b32.xlu0 %v1738, 64
        %v1740 = vpop.permute.xlu0 %1739
        %v1742 = vsel %vm553, %v1735, %v1740
        %v1743 = vsel %vm706, %v1728, 0
        %1745 = vmatprep.subr.mxu0 0.0
        %1746 = vmatpush1.msra.mxu0 %v1103
        %1747 = vmatprep.subr.mxu0 0.0
        %1748 = vmatpush1.msra.mxu0 %v1104
        %1749 = vmatprep.subr.mxu0 0.0
        %1750 = vmatpush1.msra.mxu0 0.0
        %1751 = vmatprep.subr.mxu0 0.0
        %1752 = vmatpush1.msra.mxu0 0.0
        %1753 = vmatprep.subr.mxu0 0.0
        %1754 = vmatpush1.msra.mxu0 0.0
        %1755 = vmatprep.subr.mxu0 0.0
        %1756 = vmatpush1.msra.mxu0 0.0
        %1757 = vmatprep.subr.mxu0 0.0
        %1758 = vmatpush1.msra.mxu0 0.0
        %1759 = vmatprep.subr.mxu0 0.0
        %1760 = vmatpush1.msra.mxu0 0.0
        %1761 = vmatprep.subr.mxu0 0.0
        %1762 = vmatpush1.msra.mxu0 0.0
        %1763 = vmatprep.subr.mxu0 0.0
        %1764 = vmatpush1.msra.mxu0 0.0
        %1765 = vmatprep.subr.mxu0 0.0
        %1766 = vmatpush1.msra.mxu0 0.0
        %1767 = vmatprep.subr.mxu0 0.0
        %1768 = vmatpush1.msra.mxu0 0.0
        %1769 = vmatprep.subr.mxu0 0.0
        %1770 = vmatpush1.msra.mxu0 0.0
        %1771 = vmatprep.subr.mxu0 0.0
        %1772 = vmatpush1.msra.mxu0 0.0
        %1773 = vmatprep.subr.mxu0 0.0
        %1774 = vmatpush1.msra.mxu0 0.0
        %1775 = vmatprep.subr.mxu0 0.0
        %1776 = vmatpush1.msra.mxu0 0.0
        %1777 = vmatprep.subr.mxu0 0.0
        %1778 = vmatpush1.msra.mxu0 0.0
        %1779 = vmatprep.subr.mxu0 0.0
        %1780 = vmatpush1.msra.mxu0 0.0
        %1781 = vmatprep.subr.mxu0 0.0
        %1782 = vmatpush1.msra.mxu0 0.0
        %1783 = vmatprep.subr.mxu0 0.0
        %1784 = vmatpush1.msra.mxu0 0.0
        %1785 = vmatprep.subr.mxu0 0.0
        %1786 = vmatpush1.msra.mxu0 0.0
        %1787 = vmatprep.subr.mxu0 0.0
        %1788 = vmatpush1.msra.mxu0 0.0
        %1789 = vmatprep.subr.mxu0 0.0
        %1790 = vmatpush1.msra.mxu0 0.0
        %1791 = vmatprep.subr.mxu0 0.0
        %1792 = vmatpush1.msra.mxu0 0.0
        %1793 = vmatprep.subr.mxu0 0.0
        %1794 = vmatpush1.msra.mxu0 0.0
        %1795 = vmatprep.subr.mxu0 0.0
        %1796 = vmatpush1.msra.mxu0 0.0
        %1797 = vmatprep.subr.mxu0 0.0
        %1798 = vmatpush1.msra.mxu0 0.0
        %1799 = vmatprep.subr.mxu0 0.0
        %1800 = vmatpush1.msra.mxu0 0.0
        %1801 = vmatprep.subr.mxu0 0.0
        %1802 = vmatpush1.msra.mxu0 0.0
        %1803 = vmatprep.subr.mxu0 0.0
        %1804 = vmatpush1.msra.mxu0 0.0
        %1805 = vmatprep.subr.mxu0 0.0
        %1806 = vmatpush1.msra.mxu0 0.0
        %1807 = vmatprep.subr.mxu0 0.0
        %1808 = vmatpush1.msra.mxu0 0.0
        %1809 = vmatprep.mubr.f32.mxu0 0.0
        %1810 = vmatmul.mubr.f32.gmra.mrb[0].mxu0 %v1743
        %v1811 = vpop.f32.mrb[0].mxu0
        %v1812 = vadd.f32 0.0, %v1811
        %v1813 = vpop.f32.mrb[0].mxu0
        %1814 = vdwg.mxu0
        %1816 = vrot.lane.b32.xlu0 %v1812, 64
        %v1817 = vpop.permute.xlu0 %1816
        %v1819 = vsel %vm1188, %v1812, %v1817
        %v1820 = vadd.f32 %v1742, %v1819
        %v1821 = vxor.u32 %v1820, 2147483648
        %v1822 = vmul.f32 %v1821, 1.442695
        %v1823 = vpow.pop %v1822
        %v1824 = vadd.f32 %v1823, 1.0
        %v1825 = vrcp.pop %v1824
        %v1826 = vmul.f32 1.0, %v1825
        %v1827 = vtanh.pop %v1820
        %v1828 = vmul.f32 %v1826, %v1725
        %1830 = vrot.lane.b32.xlu0 %v1827, 80
        %v1831 = vpop.permute.xlu0 %1830
        %v1833 = vmul.f32 %v1826, %v1831
        %1835 = vrot.lane.b32.xlu0 %v1833, 16
        %v1836 = vpop.permute.xlu0 %1835
        %v1838 = vadd.f32 %v1828, %v1836
        %v1839 = vtanh.pop %v1838
        %1841 = vrot.lane.b32.xlu0 %v1839, 16
        %v1842 = vpop.permute.xlu0 %1841
        %v1844 = vmul.f32 %v1826, %v1842
        %v1845 = vsel %vm1105, 5, 10
        %vm1846 = vcmp.lt.s32.totalorder %v1845, %v712
        %v1847 = vsel %vm1846, 1, 0
        %v1848 = vcvt.s32.f32 %v1847
        %v1849 = vmul.f32 %v1844, %v1848
        %v1850 = vmul.f32 %v1838, %v1848
        %1852 = vrot.lane.b32.xlu0 %v1849, 96
        %v1853 = vpop.permute.xlu0 %1852
        %1855 = vst.msk [vmem:[#allocation3 + $0x5] sm:$0x1] %vm549, %v1853
        %1856 = vrot.lane.b32.xlu0 %v1849, 112
        %v1857 = vpop.permute.xlu0 %1856
        %1859 = vst.msk [vmem:[#allocation3 + $0x9] sm:$0x2] %vm1233, %v1857
        %v1860 = vld [vmem:[#allocation2 + $0x6] sm:$0x1]
        %v1861 = vld [vmem:[#allocation2 + $0x9] sm:$0x1]
        %v1863 = vrot.slane %v1861, 7
        %1864 = vrot.lane.b32.xlu0 %v1863, 64
        %v1865 = vpop.permute.xlu0 %1864
        %v1867 = vsel %vm553, %v1860, %v1865
        %v1868 = vsel %vm706, %v1853, 0
        %1870 = vmatprep.subr.mxu0 0.0
        %1871 = vmatpush1.msra.mxu0 %v1103
        %1872 = vmatprep.subr.mxu0 0.0
        %1873 = vmatpush1.msra.mxu0 %v1104
        %1874 = vmatprep.subr.mxu0 0.0
        %1875 = vmatpush1.msra.mxu0 0.0
        %1876 = vmatprep.subr.mxu0 0.0
        %1877 = vmatpush1.msra.mxu0 0.0
        %1878 = vmatprep.subr.mxu0 0.0
        %1879 = vmatpush1.msra.mxu0 0.0
        %1880 = vmatprep.subr.mxu0 0.0
        %1881 = vmatpush1.msra.mxu0 0.0
        %1882 = vmatprep.subr.mxu0 0.0
        %1883 = vmatpush1.msra.mxu0 0.0
        %1884 = vmatprep.subr.mxu0 0.0
        %1885 = vmatpush1.msra.mxu0 0.0
        %1886 = vmatprep.subr.mxu0 0.0
        %1887 = vmatpush1.msra.mxu0 0.0
        %1888 = vmatprep.subr.mxu0 0.0
        %1889 = vmatpush1.msra.mxu0 0.0
        %1890 = vmatprep.subr.mxu0 0.0
        %1891 = vmatpush1.msra.mxu0 0.0
        %1892 = vmatprep.subr.mxu0 0.0
        %1893 = vmatpush1.msra.mxu0 0.0
        %1894 = vmatprep.subr.mxu0 0.0
        %1895 = vmatpush1.msra.mxu0 0.0
        %1896 = vmatprep.subr.mxu0 0.0
        %1897 = vmatpush1.msra.mxu0 0.0
        %1898 = vmatprep.subr.mxu0 0.0
        %1899 = vmatpush1.msra.mxu0 0.0
        %1900 = vmatprep.subr.mxu0 0.0
        %1901 = vmatpush1.msra.mxu0 0.0
        %1902 = vmatprep.subr.mxu0 0.0
        %1903 = vmatpush1.msra.mxu0 0.0
        %1904 = vmatprep.subr.mxu0 0.0
        %1905 = vmatpush1.msra.mxu0 0.0
        %1906 = vmatprep.subr.mxu0 0.0
        %1907 = vmatpush1.msra.mxu0 0.0
        %1908 = vmatprep.subr.mxu0 0.0
        %1909 = vmatpush1.msra.mxu0 0.0
        %1910 = vmatprep.subr.mxu0 0.0
        %1911 = vmatpush1.msra.mxu0 0.0
        %1912 = vmatprep.subr.mxu0 0.0
        %1913 = vmatpush1.msra.mxu0 0.0
        %1914 = vmatprep.subr.mxu0 0.0
        %1915 = vmatpush1.msra.mxu0 0.0
        %1916 = vmatprep.subr.mxu0 0.0
        %1917 = vmatpush1.msra.mxu0 0.0
        %1918 = vmatprep.subr.mxu0 0.0
        %1919 = vmatpush1.msra.mxu0 0.0
        %1920 = vmatprep.subr.mxu0 0.0
        %1921 = vmatpush1.msra.mxu0 0.0
        %1922 = vmatprep.subr.mxu0 0.0
        %1923 = vmatpush1.msra.mxu0 0.0
        %1924 = vmatprep.subr.mxu0 0.0
        %1925 = vmatpush1.msra.mxu0 0.0
        %1926 = vmatprep.subr.mxu0 0.0
        %1927 = vmatpush1.msra.mxu0 0.0
        %1928 = vmatprep.subr.mxu0 0.0
        %1929 = vmatpush1.msra.mxu0 0.0
        %1930 = vmatprep.subr.mxu0 0.0
        %1931 = vmatpush1.msra.mxu0 0.0
        %1932 = vmatprep.subr.mxu0 0.0
        %1933 = vmatpush1.msra.mxu0 0.0
        %1934 = vmatprep.mubr.f32.mxu0 0.0
        %1935 = vmatmul.mubr.f32.gmra.mrb[0].mxu0 %v1868
        %v1936 = vpop.f32.mrb[0].mxu0
        %v1937 = vadd.f32 0.0, %v1936
        %v1938 = vpop.f32.mrb[0].mxu0
        %1939 = vdwg.mxu0
        %1941 = vrot.lane.b32.xlu0 %v1937, 64
        %v1942 = vpop.permute.xlu0 %1941
        %v1944 = vsel %vm1188, %v1937, %v1942
        %v1945 = vadd.f32 %v1867, %v1944
        %v1946 = vxor.u32 %v1945, 2147483648
        %v1947 = vmul.f32 %v1946, 1.442695
        %v1948 = vpow.pop %v1947
        %v1949 = vadd.f32 %v1948, 1.0
        %v1950 = vrcp.pop %v1949
        %v1951 = vmul.f32 1.0, %v1950
        %v1952 = vtanh.pop %v1945
        %v1953 = vmul.f32 %v1951, %v1850
        %1955 = vrot.lane.b32.xlu0 %v1952, 80
        %v1956 = vpop.permute.xlu0 %1955
        %v1958 = vmul.f32 %v1951, %v1956
        %1960 = vrot.lane.b32.xlu0 %v1958, 16
        %v1961 = vpop.permute.xlu0 %1960
        %v1963 = vadd.f32 %v1953, %v1961
        %v1964 = vtanh.pop %v1963
        %1966 = vrot.lane.b32.xlu0 %v1964, 16
        %v1967 = vpop.permute.xlu0 %1966
        %v1969 = vmul.f32 %v1951, %v1967
        %v1970 = vsel %vm1105, 6, 9
        %vm1971 = vcmp.lt.s32.totalorder %v1970, %v712
        %v1972 = vsel %vm1971, 1, 0
        %v1973 = vcvt.s32.f32 %v1972
        %v1974 = vmul.f32 %v1969, %v1973
        %v1975 = vmul.f32 %v1963, %v1973
        %1977 = vrot.lane.b32.xlu0 %v1974, 96
        %v1978 = vpop.permute.xlu0 %1977
        %1980 = vst.msk [vmem:[#allocation3 + $0x6] sm:$0x1] %vm549, %v1978
        %1981 = vrot.lane.b32.xlu0 %v1974, 112
        %v1982 = vpop.permute.xlu0 %1981
        %1984 = vst.msk [vmem:[#allocation3 + $0x8] sm:$0x2] %vm1233, %v1982
        %v1985 = vld [vmem:[#allocation2 + $0x7] sm:$0x1]
        %v1986 = vld [vmem:[#allocation2 + $0x8] sm:$0x1]
        %v1988 = vrot.slane %v1986, 7
        %1989 = vrot.lane.b32.xlu0 %v1988, 64
        %v1990 = vpop.permute.xlu0 %1989
        %v1992 = vsel %vm553, %v1985, %v1990
        %v1993 = vsel %vm706, %v1978, 0
        %1995 = vmatprep.subr.mxu0 0.0
        %1996 = vmatpush1.msra.mxu0 %v1103
        %1997 = vmatprep.subr.mxu0 0.0
        %1998 = vmatpush1.msra.mxu0 %v1104
        %1999 = vmatprep.subr.mxu0 0.0
        %2000 = vmatpush1.msra.mxu0 0.0
        %2001 = vmatprep.subr.mxu0 0.0
        %2002 = vmatpush1.msra.mxu0 0.0
        %2003 = vmatprep.subr.mxu0 0.0
        %2004 = vmatpush1.msra.mxu0 0.0
        %2005 = vmatprep.subr.mxu0 0.0
        %2006 = vmatpush1.msra.mxu0 0.0
        %2007 = vmatprep.subr.mxu0 0.0
        %2008 = vmatpush1.msra.mxu0 0.0
        %2009 = vmatprep.subr.mxu0 0.0
        %2010 = vmatpush1.msra.mxu0 0.0
        %2011 = vmatprep.subr.mxu0 0.0
        %2012 = vmatpush1.msra.mxu0 0.0
        %2013 = vmatprep.subr.mxu0 0.0
        %2014 = vmatpush1.msra.mxu0 0.0
        %2015 = vmatprep.subr.mxu0 0.0
        %2016 = vmatpush1.msra.mxu0 0.0
        %2017 = vmatprep.subr.mxu0 0.0
        %2018 = vmatpush1.msra.mxu0 0.0
        %2019 = vmatprep.subr.mxu0 0.0
        %2020 = vmatpush1.msra.mxu0 0.0
        %2021 = vmatprep.subr.mxu0 0.0
        %2022 = vmatpush1.msra.mxu0 0.0
        %2023 = vmatprep.subr.mxu0 0.0
        %2024 = vmatpush1.msra.mxu0 0.0
        %2025 = vmatprep.subr.mxu0 0.0
        %2026 = vmatpush1.msra.mxu0 0.0
        %2027 = vmatprep.subr.mxu0 0.0
        %2028 = vmatpush1.msra.mxu0 0.0
        %2029 = vmatprep.subr.mxu0 0.0
        %2030 = vmatpush1.msra.mxu0 0.0
        %2031 = vmatprep.subr.mxu0 0.0
        %2032 = vmatpush1.msra.mxu0 0.0
        %2033 = vmatprep.subr.mxu0 0.0
        %2034 = vmatpush1.msra.mxu0 0.0
        %2035 = vmatprep.subr.mxu0 0.0
        %2036 = vmatpush1.msra.mxu0 0.0
        %2037 = vmatprep.subr.mxu0 0.0
        %2038 = vmatpush1.msra.mxu0 0.0
        %2039 = vmatprep.subr.mxu0 0.0
        %2040 = vmatpush1.msra.mxu0 0.0
        %2041 = vmatprep.subr.mxu0 0.0
        %2042 = vmatpush1.msra.mxu0 0.0
        %2043 = vmatprep.subr.mxu0 0.0
        %2044 = vmatpush1.msra.mxu0 0.0
        %2045 = vmatprep.subr.mxu0 0.0
        %2046 = vmatpush1.msra.mxu0 0.0
        %2047 = vmatprep.subr.mxu0 0.0
        %2048 = vmatpush1.msra.mxu0 0.0
        %2049 = vmatprep.subr.mxu0 0.0
        %2050 = vmatpush1.msra.mxu0 0.0
        %2051 = vmatprep.subr.mxu0 0.0
        %2052 = vmatpush1.msra.mxu0 0.0
        %2053 = vmatprep.subr.mxu0 0.0
        %2054 = vmatpush1.msra.mxu0 0.0
        %2055 = vmatprep.subr.mxu0 0.0
        %2056 = vmatpush1.msra.mxu0 0.0
        %2057 = vmatprep.subr.mxu0 0.0
        %2058 = vmatpush1.msra.mxu0 0.0
        %2059 = vmatprep.mubr.f32.mxu0 0.0
        %2060 = vmatmul.mubr.f32.gmra.mrb[0].mxu0 %v1993
        %v2061 = vpop.f32.mrb[0].mxu0
        %v2062 = vadd.f32 0.0, %v2061
        %v2063 = vpop.f32.mrb[0].mxu0
        %2064 = vdwg.mxu0
        %2066 = vrot.lane.b32.xlu0 %v2062, 64
        %v2067 = vpop.permute.xlu0 %2066
        %v2069 = vsel %vm1188, %v2062, %v2067
        %v2070 = vadd.f32 %v1992, %v2069
        %v2071 = vxor.u32 %v2070, 2147483648
        %v2072 = vmul.f32 %v2071, 1.442695
        %v2073 = vpow.pop %v2072
        %v2074 = vadd.f32 %v2073, 1.0
        %v2075 = vrcp.pop %v2074
        %v2076 = vmul.f32 1.0, %v2075
        %v2077 = vtanh.pop %v2070
        %v2078 = vmul.f32 %v2076, %v1975
        %2080 = vrot.lane.b32.xlu0 %v2077, 80
        %v2081 = vpop.permute.xlu0 %2080
        %v2083 = vmul.f32 %v2076, %v2081
        %2085 = vrot.lane.b32.xlu0 %v2083, 16
        %v2086 = vpop.permute.xlu0 %2085
        %v2088 = vadd.f32 %v2078, %v2086
        %v2089 = vtanh.pop %v2088
        %2091 = vrot.lane.b32.xlu0 %v2089, 16
        %v2092 = vpop.permute.xlu0 %2091
        %v2094 = vmul.f32 %v2076, %v2092
        %v2095 = vsel %vm1105, 7, 8
        %vm2096 = vcmp.lt.s32.totalorder %v2095, %v712
        %v2097 = vsel %vm2096, 1, 0
        %v2098 = vcvt.s32.f32 %v2097
        %v2099 = vmul.f32 %v2094, %v2098
        %v2100 = vmul.f32 %v2088, %v2098
        %2102 = vrot.lane.b32.xlu0 %v2099, 96
        %v2103 = vpop.permute.xlu0 %2102
        %2105 = vst.msk [vmem:[#allocation3 + $0x7] sm:$0x1] %vm549, %v2103
        %2106 = vrot.lane.b32.xlu0 %v2099, 112
        %v2107 = vpop.permute.xlu0 %2106
        %2109 = vst.msk [vmem:[#allocation3 + $0x7] sm:$0x2] %vm1233, %v2107
        %v2110 = vld [vmem:[#allocation2 + $0x8] sm:$0x1]
        %v2111 = vld [vmem:[#allocation2 + $0x7] sm:$0x1]
        %v2113 = vrot.slane %v2111, 7
        %2114 = vrot.lane.b32.xlu0 %v2113, 64
        %v2115 = vpop.permute.xlu0 %2114
        %v2117 = vsel %vm553, %v2110, %v2115
        %v2118 = vsel %vm706, %v2103, 0
        %2120 = vmatprep.subr.mxu0 0.0
        %2121 = vmatpush1.msra.mxu0 %v1103
        %2122 = vmatprep.subr.mxu0 0.0
        %2123 = vmatpush1.msra.mxu0 %v1104
        %2124 = vmatprep.subr.mxu0 0.0
        %2125 = vmatpush1.msra.mxu0 0.0
        %2126 = vmatprep.subr.mxu0 0.0
        %2127 = vmatpush1.msra.mxu0 0.0
        %2128 = vmatprep.subr.mxu0 0.0
        %2129 = vmatpush1.msra.mxu0 0.0
        %2130 = vmatprep.subr.mxu0 0.0
        %2131 = vmatpush1.msra.mxu0 0.0
        %2132 = vmatprep.subr.mxu0 0.0
        %2133 = vmatpush1.msra.mxu0 0.0
        %2134 = vmatprep.subr.mxu0 0.0
        %2135 = vmatpush1.msra.mxu0 0.0
        %2136 = vmatprep.subr.mxu0 0.0
        %2137 = vmatpush1.msra.mxu0 0.0
        %2138 = vmatprep.subr.mxu0 0.0
        %2139 = vmatpush1.msra.mxu0 0.0
        %2140 = vmatprep.subr.mxu0 0.0
        %2141 = vmatpush1.msra.mxu0 0.0
        %2142 = vmatprep.subr.mxu0 0.0
        %2143 = vmatpush1.msra.mxu0 0.0
        %2144 = vmatprep.subr.mxu0 0.0
        %2145 = vmatpush1.msra.mxu0 0.0
        %2146 = vmatprep.subr.mxu0 0.0
        %2147 = vmatpush1.msra.mxu0 0.0
        %2148 = vmatprep.subr.mxu0 0.0
        %2149 = vmatpush1.msra.mxu0 0.0
        %2150 = vmatprep.subr.mxu0 0.0
        %2151 = vmatpush1.msra.mxu0 0.0
        %2152 = vmatprep.subr.mxu0 0.0
        %2153 = vmatpush1.msra.mxu0 0.0
        %2154 = vmatprep.subr.mxu0 0.0
        %2155 = vmatpush1.msra.mxu0 0.0
        %2156 = vmatprep.subr.mxu0 0.0
        %2157 = vmatpush1.msra.mxu0 0.0
        %2158 = vmatprep.subr.mxu0 0.0
        %2159 = vmatpush1.msra.mxu0 0.0
        %2160 = vmatprep.subr.mxu0 0.0
        %2161 = vmatpush1.msra.mxu0 0.0
        %2162 = vmatprep.subr.mxu0 0.0
        %2163 = vmatpush1.msra.mxu0 0.0
        %2164 = vmatprep.subr.mxu0 0.0
        %2165 = vmatpush1.msra.mxu0 0.0
        %2166 = vmatprep.subr.mxu0 0.0
        %2167 = vmatpush1.msra.mxu0 0.0
        %2168 = vmatprep.subr.mxu0 0.0
        %2169 = vmatpush1.msra.mxu0 0.0
        %2170 = vmatprep.subr.mxu0 0.0
        %2171 = vmatpush1.msra.mxu0 0.0
        %2172 = vmatprep.subr.mxu0 0.0
        %2173 = vmatpush1.msra.mxu0 0.0
        %2174 = vmatprep.subr.mxu0 0.0
        %2175 = vmatpush1.msra.mxu0 0.0
        %2176 = vmatprep.subr.mxu0 0.0
        %2177 = vmatpush1.msra.mxu0 0.0
        %2178 = vmatprep.subr.mxu0 0.0
        %2179 = vmatpush1.msra.mxu0 0.0
        %2180 = vmatprep.subr.mxu0 0.0
        %2181 = vmatpush1.msra.mxu0 0.0
        %2182 = vmatprep.subr.mxu0 0.0
        %2183 = vmatpush1.msra.mxu0 0.0
        %2184 = vmatprep.mubr.f32.mxu0 0.0
        %2185 = vmatmul.mubr.f32.gmra.mrb[0].mxu0 %v2118
        %v2186 = vpop.f32.mrb[0].mxu0
        %v2187 = vadd.f32 0.0, %v2186
        %v2188 = vpop.f32.mrb[0].mxu0
        %2189 = vdwg.mxu0
        %2191 = vrot.lane.b32.xlu0 %v2187, 64
        %v2192 = vpop.permute.xlu0 %2191
        %v2194 = vsel %vm1188, %v2187, %v2192
        %v2195 = vadd.f32 %v2117, %v2194
        %v2196 = vxor.u32 %v2195, 2147483648
        %v2197 = vmul.f32 %v2196, 1.442695
        %v2198 = vpow.pop %v2197
        %v2199 = vadd.f32 %v2198, 1.0
        %v2200 = vrcp.pop %v2199
        %v2201 = vmul.f32 1.0, %v2200
        %v2202 = vtanh.pop %v2195
        %v2203 = vmul.f32 %v2201, %v2100
        %2205 = vrot.lane.b32.xlu0 %v2202, 80
        %v2206 = vpop.permute.xlu0 %2205
        %v2208 = vmul.f32 %v2201, %v2206
        %2210 = vrot.lane.b32.xlu0 %v2208, 16
        %v2211 = vpop.permute.xlu0 %2210
        %v2213 = vadd.f32 %v2203, %v2211
        %v2214 = vtanh.pop %v2213
        %2216 = vrot.lane.b32.xlu0 %v2214, 16
        %v2217 = vpop.permute.xlu0 %2216
        %v2219 = vmul.f32 %v2201, %v2217
        %v2220 = vsel %vm1105, 8, 7
        %vm2221 = vcmp.lt.s32.totalorder %v2220, %v712
        %v2222 = vsel %vm2221, 1, 0
        %v2223 = vcvt.s32.f32 %v2222
        %v2224 = vmul.f32 %v2219, %v2223
        %v2225 = vmul.f32 %v2213, %v2223
        %2227 = vrot.lane.b32.xlu0 %v2224, 96
        %v2228 = vpop.permute.xlu0 %2227
        %2230 = vst.msk [vmem:[#allocation3 + $0x8] sm:$0x1] %vm549, %v2228
        %2231 = vrot.lane.b32.xlu0 %v2224, 112
        %v2232 = vpop.permute.xlu0 %2231
        %2234 = vst.msk [vmem:[#allocation3 + $0x6] sm:$0x2] %vm1233, %v2232
        %v2235 = vld [vmem:[#allocation2 + $0x9] sm:$0x1]
        %v2236 = vld [vmem:[#allocation2 + $0x6] sm:$0x1]
        %v2238 = vrot.slane %v2236, 7
        %2239 = vrot.lane.b32.xlu0 %v2238, 64
        %v2240 = vpop.permute.xlu0 %2239
        %v2242 = vsel %vm553, %v2235, %v2240
        %v2243 = vsel %vm706, %v2228, 0
        %2245 = vmatprep.subr.mxu0 0.0
        %2246 = vmatpush1.msra.mxu0 %v1103
        %2247 = vmatprep.subr.mxu0 0.0
        %2248 = vmatpush1.msra.mxu0 %v1104
        %2249 = vmatprep.subr.mxu0 0.0
        %2250 = vmatpush1.msra.mxu0 0.0
        %2251 = vmatprep.subr.mxu0 0.0
        %2252 = vmatpush1.msra.mxu0 0.0
        %2253 = vmatprep.subr.mxu0 0.0
        %2254 = vmatpush1.msra.mxu0 0.0
        %2255 = vmatprep.subr.mxu0 0.0
        %2256 = vmatpush1.msra.mxu0 0.0
        %2257 = vmatprep.subr.mxu0 0.0
        %2258 = vmatpush1.msra.mxu0 0.0
        %2259 = vmatprep.subr.mxu0 0.0
        %2260 = vmatpush1.msra.mxu0 0.0
        %2261 = vmatprep.subr.mxu0 0.0
        %2262 = vmatpush1.msra.mxu0 0.0
        %2263 = vmatprep.subr.mxu0 0.0
        %2264 = vmatpush1.msra.mxu0 0.0
        %2265 = vmatprep.subr.mxu0 0.0
        %2266 = vmatpush1.msra.mxu0 0.0
        %2267 = vmatprep.subr.mxu0 0.0
        %2268 = vmatpush1.msra.mxu0 0.0
        %2269 = vmatprep.subr.mxu0 0.0
        %2270 = vmatpush1.msra.mxu0 0.0
        %2271 = vmatprep.subr.mxu0 0.0
        %2272 = vmatpush1.msra.mxu0 0.0
        %2273 = vmatprep.subr.mxu0 0.0
        %2274 = vmatpush1.msra.mxu0 0.0
        %2275 = vmatprep.subr.mxu0 0.0
        %2276 = vmatpush1.msra.mxu0 0.0
        %2277 = vmatprep.subr.mxu0 0.0
        %2278 = vmatpush1.msra.mxu0 0.0
        %2279 = vmatprep.subr.mxu0 0.0
        %2280 = vmatpush1.msra.mxu0 0.0
        %2281 = vmatprep.subr.mxu0 0.0
        %2282 = vmatpush1.msra.mxu0 0.0
        %2283 = vmatprep.subr.mxu0 0.0
        %2284 = vmatpush1.msra.mxu0 0.0
        %2285 = vmatprep.subr.mxu0 0.0
        %2286 = vmatpush1.msra.mxu0 0.0
        %2287 = vmatprep.subr.mxu0 0.0
        %2288 = vmatpush1.msra.mxu0 0.0
        %2289 = vmatprep.subr.mxu0 0.0
        %2290 = vmatpush1.msra.mxu0 0.0
        %2291 = vmatprep.subr.mxu0 0.0
        %2292 = vmatpush1.msra.mxu0 0.0
        %2293 = vmatprep.subr.mxu0 0.0
        %2294 = vmatpush1.msra.mxu0 0.0
        %2295 = vmatprep.subr.mxu0 0.0
        %2296 = vmatpush1.msra.mxu0 0.0
        %2297 = vmatprep.subr.mxu0 0.0
        %2298 = vmatpush1.msra.mxu0 0.0
        %2299 = vmatprep.subr.mxu0 0.0
        %2300 = vmatpush1.msra.mxu0 0.0
        %2301 = vmatprep.subr.mxu0 0.0
        %2302 = vmatpush1.msra.mxu0 0.0
        %2303 = vmatprep.subr.mxu0 0.0
        %2304 = vmatpush1.msra.mxu0 0.0
        %2305 = vmatprep.subr.mxu0 0.0
        %2306 = vmatpush1.msra.mxu0 0.0
        %2307 = vmatprep.subr.mxu0 0.0
        %2308 = vmatpush1.msra.mxu0 0.0
        %2309 = vmatprep.mubr.f32.mxu0 0.0
        %2310 = vmatmul.mubr.f32.gmra.mrb[0].mxu0 %v2243
        %v2311 = vpop.f32.mrb[0].mxu0
        %v2312 = vadd.f32 0.0, %v2311
        %v2313 = vpop.f32.mrb[0].mxu0
        %2314 = vdwg.mxu0
        %2316 = vrot.lane.b32.xlu0 %v2312, 64
        %v2317 = vpop.permute.xlu0 %2316
        %v2319 = vsel %vm1188, %v2312, %v2317
        %v2320 = vadd.f32 %v2242, %v2319
        %v2321 = vxor.u32 %v2320, 2147483648
        %v2322 = vmul.f32 %v2321, 1.442695
        %v2323 = vpow.pop %v2322
        %v2324 = vadd.f32 %v2323, 1.0
        %v2325 = vrcp.pop %v2324
        %v2326 = vmul.f32 1.0, %v2325
        %v2327 = vtanh.pop %v2320
        %v2328 = vmul.f32 %v2326, %v2225
        %2330 = vrot.lane.b32.xlu0 %v2327, 80
        %v2331 = vpop.permute.xlu0 %2330
        %v2333 = vmul.f32 %v2326, %v2331
        %2335 = vrot.lane.b32.xlu0 %v2333, 16
        %v2336 = vpop.permute.xlu0 %2335
        %v2338 = vadd.f32 %v2328, %v2336
        %v2339 = vtanh.pop %v2338
        %2341 = vrot.lane.b32.xlu0 %v2339, 16
        %v2342 = vpop.permute.xlu0 %2341
        %v2344 = vmul.f32 %v2326, %v2342
        %v2345 = vsel %vm1105, 9, 6
        %vm2346 = vcmp.lt.s32.totalorder %v2345, %v712
        %v2347 = vsel %vm2346, 1, 0
        %v2348 = vcvt.s32.f32 %v2347
        %v2349 = vmul.f32 %v2344, %v2348
        %v2350 = vmul.f32 %v2338, %v2348
        %2352 = vrot.lane.b32.xlu0 %v2349, 96
        %v2353 = vpop.permute.xlu0 %2352
        %2355 = vst.msk [vmem:[#allocation3 + $0x9] sm:$0x1] %vm549, %v2353
        %2356 = vrot.lane.b32.xlu0 %v2349, 112
        %v2357 = vpop.permute.xlu0 %2356
        %2359 = vst.msk [vmem:[#allocation3 + $0x5] sm:$0x2] %vm1233, %v2357
        %v2360 = vld [vmem:[#allocation2 + $0xa] sm:$0x1]
        %v2361 = vld [vmem:[#allocation2 + $0x5] sm:$0x1]
        %v2363 = vrot.slane %v2361, 7
        %2364 = vrot.lane.b32.xlu0 %v2363, 64
        %v2365 = vpop.permute.xlu0 %2364
        %v2367 = vsel %vm553, %v2360, %v2365
        %v2368 = vsel %vm706, %v2353, 0
        %2370 = vmatprep.subr.mxu0 0.0
        %2371 = vmatpush1.msra.mxu0 %v1103
        %2372 = vmatprep.subr.mxu0 0.0
        %2373 = vmatpush1.msra.mxu0 %v1104
        %2374 = vmatprep.subr.mxu0 0.0
        %2375 = vmatpush1.msra.mxu0 0.0
        %2376 = vmatprep.subr.mxu0 0.0
        %2377 = vmatpush1.msra.mxu0 0.0
        %2378 = vmatprep.subr.mxu0 0.0
        %2379 = vmatpush1.msra.mxu0 0.0
        %2380 = vmatprep.subr.mxu0 0.0
        %2381 = vmatpush1.msra.mxu0 0.0
        %2382 = vmatprep.subr.mxu0 0.0
        %2383 = vmatpush1.msra.mxu0 0.0
        %2384 = vmatprep.subr.mxu0 0.0
        %2385 = vmatpush1.msra.mxu0 0.0
        %2386 = vmatprep.subr.mxu0 0.0
        %2387 = vmatpush1.msra.mxu0 0.0
        %2388 = vmatprep.subr.mxu0 0.0
        %2389 = vmatpush1.msra.mxu0 0.0
        %2390 = vmatprep.subr.mxu0 0.0
        %2391 = vmatpush1.msra.mxu0 0.0
        %2392 = vmatprep.subr.mxu0 0.0
        %2393 = vmatpush1.msra.mxu0 0.0
        %2394 = vmatprep.subr.mxu0 0.0
        %2395 = vmatpush1.msra.mxu0 0.0
        %2396 = vmatprep.subr.mxu0 0.0
        %2397 = vmatpush1.msra.mxu0 0.0
        %2398 = vmatprep.subr.mxu0 0.0
        %2399 = vmatpush1.msra.mxu0 0.0
        %2400 = vmatprep.subr.mxu0 0.0
        %2401 = vmatpush1.msra.mxu0 0.0
        %2402 = vmatprep.subr.mxu0 0.0
        %2403 = vmatpush1.msra.mxu0 0.0
        %2404 = vmatprep.subr.mxu0 0.0
        %2405 = vmatpush1.msra.mxu0 0.0
        %2406 = vmatprep.subr.mxu0 0.0
        %2407 = vmatpush1.msra.mxu0 0.0
        %2408 = vmatprep.subr.mxu0 0.0
        %2409 = vmatpush1.msra.mxu0 0.0
        %2410 = vmatprep.subr.mxu0 0.0
        %2411 = vmatpush1.msra.mxu0 0.0
        %2412 = vmatprep.subr.mxu0 0.0
        %2413 = vmatpush1.msra.mxu0 0.0
        %2414 = vmatprep.subr.mxu0 0.0
        %2415 = vmatpush1.msra.mxu0 0.0
        %2416 = vmatprep.subr.mxu0 0.0
        %2417 = vmatpush1.msra.mxu0 0.0
        %2418 = vmatprep.subr.mxu0 0.0
        %2419 = vmatpush1.msra.mxu0 0.0
        %2420 = vmatprep.subr.mxu0 0.0
        %2421 = vmatpush1.msra.mxu0 0.0
        %2422 = vmatprep.subr.mxu0 0.0
        %2423 = vmatpush1.msra.mxu0 0.0
        %2424 = vmatprep.subr.mxu0 0.0
        %2425 = vmatpush1.msra.mxu0 0.0
        %2426 = vmatprep.subr.mxu0 0.0
        %2427 = vmatpush1.msra.mxu0 0.0
        %2428 = vmatprep.subr.mxu0 0.0
        %2429 = vmatpush1.msra.mxu0 0.0
        %2430 = vmatprep.subr.mxu0 0.0
        %2431 = vmatpush1.msra.mxu0 0.0
        %2432 = vmatprep.subr.mxu0 0.0
        %2433 = vmatpush1.msra.mxu0 0.0
        %2434 = vmatprep.mubr.f32.mxu0 0.0
        %2435 = vmatmul.mubr.f32.gmra.mrb[0].mxu0 %v2368
        %v2436 = vpop.f32.mrb[0].mxu0
        %v2437 = vadd.f32 0.0, %v2436
        %v2438 = vpop.f32.mrb[0].mxu0
        %2439 = vdwg.mxu0
        %2441 = vrot.lane.b32.xlu0 %v2437, 64
        %v2442 = vpop.permute.xlu0 %2441
        %v2444 = vsel %vm1188, %v2437, %v2442
        %v2445 = vadd.f32 %v2367, %v2444
        %v2446 = vxor.u32 %v2445, 2147483648
        %v2447 = vmul.f32 %v2446, 1.442695
        %v2448 = vpow.pop %v2447
        %v2449 = vadd.f32 %v2448, 1.0
        %v2450 = vrcp.pop %v2449
        %v2451 = vmul.f32 1.0, %v2450
        %v2452 = vtanh.pop %v2445
        %v2453 = vmul.f32 %v2451, %v2350
        %2455 = vrot.lane.b32.xlu0 %v2452, 80
        %v2456 = vpop.permute.xlu0 %2455
        %v2458 = vmul.f32 %v2451, %v2456
        %2460 = vrot.lane.b32.xlu0 %v2458, 16
        %v2461 = vpop.permute.xlu0 %2460
        %v2463 = vadd.f32 %v2453, %v2461
        %v2464 = vtanh.pop %v2463
        %2466 = vrot.lane.b32.xlu0 %v2464, 16
        %v2467 = vpop.permute.xlu0 %2466
        %v2469 = vmul.f32 %v2451, %v2467
        %v2470 = vsel %vm1105, 10, 5
        %vm2471 = vcmp.lt.s32.totalorder %v2470, %v712
        %v2472 = vsel %vm2471, 1, 0
        %v2473 = vcvt.s32.f32 %v2472
        %v2474 = vmul.f32 %v2469, %v2473
        %v2475 = vmul.f32 %v2463, %v2473
        %2477 = vrot.lane.b32.xlu0 %v2474, 96
        %v2478 = vpop.permute.xlu0 %2477
        %2480 = vst.msk [vmem:[#allocation3 + $0xa] sm:$0x1] %vm549, %v2478
        %2481 = vrot.lane.b32.xlu0 %v2474, 112
        %v2482 = vpop.permute.xlu0 %2481
        %2484 = vst.msk [vmem:[#allocation3 + $0x4] sm:$0x2] %vm1233, %v2482
        %v2485 = vld [vmem:[#allocation2 + $0xb] sm:$0x1]
        %v2486 = vld [vmem:[#allocation2 + $0x4] sm:$0x1]
        %v2488 = vrot.slane %v2486, 7
        %2489 = vrot.lane.b32.xlu0 %v2488, 64
        %v2490 = vpop.permute.xlu0 %2489
        %v2492 = vsel %vm553, %v2485, %v2490
        %v2493 = vsel %vm706, %v2478, 0
        %2495 = vmatprep.subr.mxu0 0.0
        %2496 = vmatpush1.msra.mxu0 %v1103
        %2497 = vmatprep.subr.mxu0 0.0
        %2498 = vmatpush1.msra.mxu0 %v1104
        %2499 = vmatprep.subr.mxu0 0.0
        %2500 = vmatpush1.msra.mxu0 0.0
        %2501 = vmatprep.subr.mxu0 0.0
        %2502 = vmatpush1.msra.mxu0 0.0
        %2503 = vmatprep.subr.mxu0 0.0
        %2504 = vmatpush1.msra.mxu0 0.0
        %2505 = vmatprep.subr.mxu0 0.0
        %2506 = vmatpush1.msra.mxu0 0.0
        %2507 = vmatprep.subr.mxu0 0.0
        %2508 = vmatpush1.msra.mxu0 0.0
        %2509 = vmatprep.subr.mxu0 0.0
        %2510 = vmatpush1.msra.mxu0 0.0
        %2511 = vmatprep.subr.mxu0 0.0
        %2512 = vmatpush1.msra.mxu0 0.0
        %2513 = vmatprep.subr.mxu0 0.0
        %2514 = vmatpush1.msra.mxu0 0.0
        %2515 = vmatprep.subr.mxu0 0.0
        %2516 = vmatpush1.msra.mxu0 0.0
        %2517 = vmatprep.subr.mxu0 0.0
        %2518 = vmatpush1.msra.mxu0 0.0
        %2519 = vmatprep.subr.mxu0 0.0
        %2520 = vmatpush1.msra.mxu0 0.0
        %2521 = vmatprep.subr.mxu0 0.0
        %2522 = vmatpush1.msra.mxu0 0.0
        %2523 = vmatprep.subr.mxu0 0.0
        %2524 = vmatpush1.msra.mxu0 0.0
        %2525 = vmatprep.subr.mxu0 0.0
        %2526 = vmatpush1.msra.mxu0 0.0
        %2527 = vmatprep.subr.mxu0 0.0
        %2528 = vmatpush1.msra.mxu0 0.0
        %2529 = vmatprep.subr.mxu0 0.0
        %2530 = vmatpush1.msra.mxu0 0.0
        %2531 = vmatprep.subr.mxu0 0.0
        %2532 = vmatpush1.msra.mxu0 0.0
        %2533 = vmatprep.subr.mxu0 0.0
        %2534 = vmatpush1.msra.mxu0 0.0
        %2535 = vmatprep.subr.mxu0 0.0
        %2536 = vmatpush1.msra.mxu0 0.0
        %2537 = vmatprep.subr.mxu0 0.0
        %2538 = vmatpush1.msra.mxu0 0.0
        %2539 = vmatprep.subr.mxu0 0.0
        %2540 = vmatpush1.msra.mxu0 0.0
        %2541 = vmatprep.subr.mxu0 0.0
        %2542 = vmatpush1.msra.mxu0 0.0
        %2543 = vmatprep.subr.mxu0 0.0
        %2544 = vmatpush1.msra.mxu0 0.0
        %2545 = vmatprep.subr.mxu0 0.0
        %2546 = vmatpush1.msra.mxu0 0.0
        %2547 = vmatprep.subr.mxu0 0.0
        %2548 = vmatpush1.msra.mxu0 0.0
        %2549 = vmatprep.subr.mxu0 0.0
        %2550 = vmatpush1.msra.mxu0 0.0
        %2551 = vmatprep.subr.mxu0 0.0
        %2552 = vmatpush1.msra.mxu0 0.0
        %2553 = vmatprep.subr.mxu0 0.0
        %2554 = vmatpush1.msra.mxu0 0.0
        %2555 = vmatprep.subr.mxu0 0.0
        %2556 = vmatpush1.msra.mxu0 0.0
        %2557 = vmatprep.subr.mxu0 0.0
        %2558 = vmatpush1.msra.mxu0 0.0
        %2559 = vmatprep.mubr.f32.mxu0 0.0
        %2560 = vmatmul.mubr.f32.gmra.mrb[0].mxu0 %v2493
        %v2561 = vpop.f32.mrb[0].mxu0
        %v2562 = vadd.f32 0.0, %v2561
        %v2563 = vpop.f32.mrb[0].mxu0
        %2564 = vdwg.mxu0
        %2566 = vrot.lane.b32.xlu0 %v2562, 64
        %v2567 = vpop.permute.xlu0 %2566
        %v2569 = vsel %vm1188, %v2562, %v2567
        %v2570 = vadd.f32 %v2492, %v2569
        %v2571 = vxor.u32 %v2570, 2147483648
        %v2572 = vmul.f32 %v2571, 1.442695
        %v2573 = vpow.pop %v2572
        %v2574 = vadd.f32 %v2573, 1.0
        %v2575 = vrcp.pop %v2574
        %v2576 = vmul.f32 1.0, %v2575
        %v2577 = vtanh.pop %v2570
        %v2578 = vmul.f32 %v2576, %v2475
        %2580 = vrot.lane.b32.xlu0 %v2577, 80
        %v2581 = vpop.permute.xlu0 %2580
        %v2583 = vmul.f32 %v2576, %v2581
        %2585 = vrot.lane.b32.xlu0 %v2583, 16
        %v2586 = vpop.permute.xlu0 %2585
        %v2588 = vadd.f32 %v2578, %v2586
        %v2589 = vtanh.pop %v2588
        %2591 = vrot.lane.b32.xlu0 %v2589, 16
        %v2592 = vpop.permute.xlu0 %2591
        %v2594 = vmul.f32 %v2576, %v2592
        %v2595 = vsel %vm1105, 11, 4
        %vm2596 = vcmp.lt.s32.totalorder %v2595, %v712
        %v2597 = vsel %vm2596, 1, 0
        %v2598 = vcvt.s32.f32 %v2597
        %v2599 = vmul.f32 %v2594, %v2598
        %v2600 = vmul.f32 %v2588, %v2598
        %2602 = vrot.lane.b32.xlu0 %v2599, 96
        %v2603 = vpop.permute.xlu0 %2602
        %2605 = vst.msk [vmem:[#allocation3 + $0xb] sm:$0x1] %vm549, %v2603
        %2606 = vrot.lane.b32.xlu0 %v2599, 112
        %v2607 = vpop.permute.xlu0 %2606
        %2609 = vst.msk [vmem:[#allocation3 + $0x3] sm:$0x2] %vm1233, %v2607
        %v2610 = vld [vmem:[#allocation2 + $0xc] sm:$0x1]
        %v2611 = vld [vmem:[#allocation2 + $0x3] sm:$0x1]
        %v2613 = vrot.slane %v2611, 7
        %2614 = vrot.lane.b32.xlu0 %v2613, 64
        %v2615 = vpop.permute.xlu0 %2614
        %v2617 = vsel %vm553, %v2610, %v2615
        %v2618 = vsel %vm706, %v2603, 0
        %2620 = vmatprep.subr.mxu0 0.0
        %2621 = vmatpush1.msra.mxu0 %v1103
        %2622 = vmatprep.subr.mxu0 0.0
        %2623 = vmatpush1.msra.mxu0 %v1104
        %2624 = vmatprep.subr.mxu0 0.0
        %2625 = vmatpush1.msra.mxu0 0.0
        %2626 = vmatprep.subr.mxu0 0.0
        %2627 = vmatpush1.msra.mxu0 0.0
        %2628 = vmatprep.subr.mxu0 0.0
        %2629 = vmatpush1.msra.mxu0 0.0
        %2630 = vmatprep.subr.mxu0 0.0
        %2631 = vmatpush1.msra.mxu0 0.0
        %2632 = vmatprep.subr.mxu0 0.0
        %2633 = vmatpush1.msra.mxu0 0.0
        %2634 = vmatprep.subr.mxu0 0.0
        %2635 = vmatpush1.msra.mxu0 0.0
        %2636 = vmatprep.subr.mxu0 0.0
        %2637 = vmatpush1.msra.mxu0 0.0
        %2638 = vmatprep.subr.mxu0 0.0
        %2639 = vmatpush1.msra.mxu0 0.0
        %2640 = vmatprep.subr.mxu0 0.0
        %2641 = vmatpush1.msra.mxu0 0.0
        %2642 = vmatprep.subr.mxu0 0.0
        %2643 = vmatpush1.msra.mxu0 0.0
        %2644 = vmatprep.subr.mxu0 0.0
        %2645 = vmatpush1.msra.mxu0 0.0
        %2646 = vmatprep.subr.mxu0 0.0
        %2647 = vmatpush1.msra.mxu0 0.0
        %2648 = vmatprep.subr.mxu0 0.0
        %2649 = vmatpush1.msra.mxu0 0.0
        %2650 = vmatprep.subr.mxu0 0.0
        %2651 = vmatpush1.msra.mxu0 0.0
        %2652 = vmatprep.subr.mxu0 0.0
        %2653 = vmatpush1.msra.mxu0 0.0
        %2654 = vmatprep.subr.mxu0 0.0
        %2655 = vmatpush1.msra.mxu0 0.0
        %2656 = vmatprep.subr.mxu0 0.0
        %2657 = vmatpush1.msra.mxu0 0.0
        %2658 = vmatprep.subr.mxu0 0.0
        %2659 = vmatpush1.msra.mxu0 0.0
        %2660 = vmatprep.subr.mxu0 0.0
        %2661 = vmatpush1.msra.mxu0 0.0
        %2662 = vmatprep.subr.mxu0 0.0
        %2663 = vmatpush1.msra.mxu0 0.0
        %2664 = vmatprep.subr.mxu0 0.0
        %2665 = vmatpush1.msra.mxu0 0.0
        %2666 = vmatprep.subr.mxu0 0.0
        %2667 = vmatpush1.msra.mxu0 0.0
        %2668 = vmatprep.subr.mxu0 0.0
        %2669 = vmatpush1.msra.mxu0 0.0
        %2670 = vmatprep.subr.mxu0 0.0
        %2671 = vmatpush1.msra.mxu0 0.0
        %2672 = vmatprep.subr.mxu0 0.0
        %2673 = vmatpush1.msra.mxu0 0.0
        %2674 = vmatprep.subr.mxu0 0.0
        %2675 = vmatpush1.msra.mxu0 0.0
        %2676 = vmatprep.subr.mxu0 0.0
        %2677 = vmatpush1.msra.mxu0 0.0
        %2678 = vmatprep.subr.mxu0 0.0
        %2679 = vmatpush1.msra.mxu0 0.0
        %2680 = vmatprep.subr.mxu0 0.0
        %2681 = vmatpush1.msra.mxu0 0.0
        %2682 = vmatprep.subr.mxu0 0.0
        %2683 = vmatpush1.msra.mxu0 0.0
        %2684 = vmatprep.mubr.f32.mxu0 0.0
        %2685 = vmatmul.mubr.f32.gmra.mrb[0].mxu0 %v2618
        %v2686 = vpop.f32.mrb[0].mxu0
        %v2687 = vadd.f32 0.0, %v2686
        %v2688 = vpop.f32.mrb[0].mxu0
        %2689 = vdwg.mxu0
        %2691 = vrot.lane.b32.xlu0 %v2687, 64
        %v2692 = vpop.permute.xlu0 %2691
        %v2694 = vsel %vm1188, %v2687, %v2692
        %v2695 = vadd.f32 %v2617, %v2694
        %v2696 = vxor.u32 %v2695, 2147483648
        %v2697 = vmul.f32 %v2696, 1.442695
        %v2698 = vpow.pop %v2697
        %v2699 = vadd.f32 %v2698, 1.0
        %v2700 = vrcp.pop %v2699
        %v2701 = vmul.f32 1.0, %v2700
        %v2702 = vtanh.pop %v2695
        %v2703 = vmul.f32 %v2701, %v2600
        %2705 = vrot.lane.b32.xlu0 %v2702, 80
        %v2706 = vpop.permute.xlu0 %2705
        %v2708 = vmul.f32 %v2701, %v2706
        %2710 = vrot.lane.b32.xlu0 %v2708, 16
        %v2711 = vpop.permute.xlu0 %2710
        %v2713 = vadd.f32 %v2703, %v2711
        %v2714 = vtanh.pop %v2713
        %2716 = vrot.lane.b32.xlu0 %v2714, 16
        %v2717 = vpop.permute.xlu0 %2716
        %v2719 = vmul.f32 %v2701, %v2717
        %v2720 = vsel %vm1105, 12, 3
        %vm2721 = vcmp.lt.s32.totalorder %v2720, %v712
        %v2722 = vsel %vm2721, 1, 0
        %v2723 = vcvt.s32.f32 %v2722
        %v2724 = vmul.f32 %v2719, %v2723
        %v2725 = vmul.f32 %v2713, %v2723
        %2727 = vrot.lane.b32.xlu0 %v2724, 96
        %v2728 = vpop.permute.xlu0 %2727
        %2730 = vst.msk [vmem:[#allocation3 + $0xc] sm:$0x1] %vm549, %v2728
        %2731 = vrot.lane.b32.xlu0 %v2724, 112
        %v2732 = vpop.permute.xlu0 %2731
        %2734 = vst.msk [vmem:[#allocation3 + $0x2] sm:$0x2] %vm1233, %v2732
        %v2735 = vld [vmem:[#allocation2 + $0xd] sm:$0x1]
        %v2736 = vld [vmem:[#allocation2 + $0x2] sm:$0x1]
        %v2738 = vrot.slane %v2736, 7
        %2739 = vrot.lane.b32.xlu0 %v2738, 64
        %v2740 = vpop.permute.xlu0 %2739
        %v2742 = vsel %vm553, %v2735, %v2740
        %v2743 = vsel %vm706, %v2728, 0
        %2745 = vmatprep.subr.mxu0 0.0
        %2746 = vmatpush1.msra.mxu0 %v1103
        %2747 = vmatprep.subr.mxu0 0.0
        %2748 = vmatpush1.msra.mxu0 %v1104
        %2749 = vmatprep.subr.mxu0 0.0
        %2750 = vmatpush1.msra.mxu0 0.0
        %2751 = vmatprep.subr.mxu0 0.0
        %2752 = vmatpush1.msra.mxu0 0.0
        %2753 = vmatprep.subr.mxu0 0.0
        %2754 = vmatpush1.msra.mxu0 0.0
        %2755 = vmatprep.subr.mxu0 0.0
        %2756 = vmatpush1.msra.mxu0 0.0
        %2757 = vmatprep.subr.mxu0 0.0
        %2758 = vmatpush1.msra.mxu0 0.0
        %2759 = vmatprep.subr.mxu0 0.0
        %2760 = vmatpush1.msra.mxu0 0.0
        %2761 = vmatprep.subr.mxu0 0.0
        %2762 = vmatpush1.msra.mxu0 0.0
        %2763 = vmatprep.subr.mxu0 0.0
        %2764 = vmatpush1.msra.mxu0 0.0
        %2765 = vmatprep.subr.mxu0 0.0
        %2766 = vmatpush1.msra.mxu0 0.0
        %2767 = vmatprep.subr.mxu0 0.0
        %2768 = vmatpush1.msra.mxu0 0.0
        %2769 = vmatprep.subr.mxu0 0.0
        %2770 = vmatpush1.msra.mxu0 0.0
        %2771 = vmatprep.subr.mxu0 0.0
        %2772 = vmatpush1.msra.mxu0 0.0
        %2773 = vmatprep.subr.mxu0 0.0
        %2774 = vmatpush1.msra.mxu0 0.0
        %2775 = vmatprep.subr.mxu0 0.0
        %2776 = vmatpush1.msra.mxu0 0.0
        %2777 = vmatprep.subr.mxu0 0.0
        %2778 = vmatpush1.msra.mxu0 0.0
        %2779 = vmatprep.subr.mxu0 0.0
        %2780 = vmatpush1.msra.mxu0 0.0
        %2781 = vmatprep.subr.mxu0 0.0
        %2782 = vmatpush1.msra.mxu0 0.0
        %2783 = vmatprep.subr.mxu0 0.0
        %2784 = vmatpush1.msra.mxu0 0.0
        %2785 = vmatprep.subr.mxu0 0.0
        %2786 = vmatpush1.msra.mxu0 0.0
        %2787 = vmatprep.subr.mxu0 0.0
        %2788 = vmatpush1.msra.mxu0 0.0
        %2789 = vmatprep.subr.mxu0 0.0
        %2790 = vmatpush1.msra.mxu0 0.0
        %2791 = vmatprep.subr.mxu0 0.0
        %2792 = vmatpush1.msra.mxu0 0.0
        %2793 = vmatprep.subr.mxu0 0.0
        %2794 = vmatpush1.msra.mxu0 0.0
        %2795 = vmatprep.subr.mxu0 0.0
        %2796 = vmatpush1.msra.mxu0 0.0
        %2797 = vmatprep.subr.mxu0 0.0
        %2798 = vmatpush1.msra.mxu0 0.0
        %2799 = vmatprep.subr.mxu0 0.0
        %2800 = vmatpush1.msra.mxu0 0.0
        %2801 = vmatprep.subr.mxu0 0.0
        %2802 = vmatpush1.msra.mxu0 0.0
        %2803 = vmatprep.subr.mxu0 0.0
        %2804 = vmatpush1.msra.mxu0 0.0
        %2805 = vmatprep.subr.mxu0 0.0
        %2806 = vmatpush1.msra.mxu0 0.0
        %2807 = vmatprep.subr.mxu0 0.0
        %2808 = vmatpush1.msra.mxu0 0.0
        %2809 = vmatprep.mubr.f32.mxu0 0.0
        %2810 = vmatmul.mubr.f32.gmra.mrb[0].mxu0 %v2743
        %v2811 = vpop.f32.mrb[0].mxu0
        %v2812 = vadd.f32 0.0, %v2811
        %v2813 = vpop.f32.mrb[0].mxu0
        %2814 = vdwg.mxu0
        %2816 = vrot.lane.b32.xlu0 %v2812, 64
        %v2817 = vpop.permute.xlu0 %2816
        %v2819 = vsel %vm1188, %v2812, %v2817
        %v2820 = vadd.f32 %v2742, %v2819
        %v2821 = vxor.u32 %v2820, 2147483648
        %v2822 = vmul.f32 %v2821, 1.442695
        %v2823 = vpow.pop %v2822
        %v2824 = vadd.f32 %v2823, 1.0
        %v2825 = vrcp.pop %v2824
        %v2826 = vmul.f32 1.0, %v2825
        %v2827 = vtanh.pop %v2820
        %v2828 = vmul.f32 %v2826, %v2725
        %2830 = vrot.lane.b32.xlu0 %v2827, 80
        %v2831 = vpop.permute.xlu0 %2830
        %v2833 = vmul.f32 %v2826, %v2831
        %2835 = vrot.lane.b32.xlu0 %v2833, 16
        %v2836 = vpop.permute.xlu0 %2835
        %v2838 = vadd.f32 %v2828, %v2836
        %v2839 = vtanh.pop %v2838
        %2841 = vrot.lane.b32.xlu0 %v2839, 16
        %v2842 = vpop.permute.xlu0 %2841
        %v2844 = vmul.f32 %v2826, %v2842
        %v2845 = vsel %vm1105, 13, 2
        %vm2846 = vcmp.lt.s32.totalorder %v2845, %v712
        %v2847 = vsel %vm2846, 1, 0
        %v2848 = vcvt.s32.f32 %v2847
        %v2849 = vmul.f32 %v2844, %v2848
        %v2850 = vmul.f32 %v2838, %v2848
        %2852 = vrot.lane.b32.xlu0 %v2849, 96
        %v2853 = vpop.permute.xlu0 %2852
        %2855 = vst.msk [vmem:[#allocation3 + $0xd] sm:$0x1] %vm549, %v2853
        %2856 = vrot.lane.b32.xlu0 %v2849, 112
        %v2857 = vpop.permute.xlu0 %2856
        %2859 = vst.msk [vmem:[#allocation3 + $0x1] sm:$0x2] %vm1233, %v2857
        %v2860 = vld [vmem:[#allocation2 + $0xe] sm:$0x1]
        %v2861 = vld [vmem:[#allocation2 + $0x1] sm:$0x1]
        %v2863 = vrot.slane %v2861, 7
        %2864 = vrot.lane.b32.xlu0 %v2863, 64
        %v2865 = vpop.permute.xlu0 %2864
        %v2867 = vsel %vm553, %v2860, %v2865
        %v2868 = vsel %vm706, %v2853, 0
        %2870 = vmatprep.subr.mxu0 0.0
        %2871 = vmatpush1.msra.mxu0 %v1103
        %2872 = vmatprep.subr.mxu0 0.0
        %2873 = vmatpush1.msra.mxu0 %v1104
        %2874 = vmatprep.subr.mxu0 0.0
        %2875 = vmatpush1.msra.mxu0 0.0
        %2876 = vmatprep.subr.mxu0 0.0
        %2877 = vmatpush1.msra.mxu0 0.0
        %2878 = vmatprep.subr.mxu0 0.0
        %2879 = vmatpush1.msra.mxu0 0.0
        %2880 = vmatprep.subr.mxu0 0.0
        %2881 = vmatpush1.msra.mxu0 0.0
        %2882 = vmatprep.subr.mxu0 0.0
        %2883 = vmatpush1.msra.mxu0 0.0
        %2884 = vmatprep.subr.mxu0 0.0
        %2885 = vmatpush1.msra.mxu0 0.0
        %2886 = vmatprep.subr.mxu0 0.0
        %2887 = vmatpush1.msra.mxu0 0.0
        %2888 = vmatprep.subr.mxu0 0.0
        %2889 = vmatpush1.msra.mxu0 0.0
        %2890 = vmatprep.subr.mxu0 0.0
        %2891 = vmatpush1.msra.mxu0 0.0
        %2892 = vmatprep.subr.mxu0 0.0
        %2893 = vmatpush1.msra.mxu0 0.0
        %2894 = vmatprep.subr.mxu0 0.0
        %2895 = vmatpush1.msra.mxu0 0.0
        %2896 = vmatprep.subr.mxu0 0.0
        %2897 = vmatpush1.msra.mxu0 0.0
        %2898 = vmatprep.subr.mxu0 0.0
        %2899 = vmatpush1.msra.mxu0 0.0
        %2900 = vmatprep.subr.mxu0 0.0
        %2901 = vmatpush1.msra.mxu0 0.0
        %2902 = vmatprep.subr.mxu0 0.0
        %2903 = vmatpush1.msra.mxu0 0.0
        %2904 = vmatprep.subr.mxu0 0.0
        %2905 = vmatpush1.msra.mxu0 0.0
        %2906 = vmatprep.subr.mxu0 0.0
        %2907 = vmatpush1.msra.mxu0 0.0
        %2908 = vmatprep.subr.mxu0 0.0
        %2909 = vmatpush1.msra.mxu0 0.0
        %2910 = vmatprep.subr.mxu0 0.0
        %2911 = vmatpush1.msra.mxu0 0.0
        %2912 = vmatprep.subr.mxu0 0.0
        %2913 = vmatpush1.msra.mxu0 0.0
        %2914 = vmatprep.subr.mxu0 0.0
        %2915 = vmatpush1.msra.mxu0 0.0
        %2916 = vmatprep.subr.mxu0 0.0
        %2917 = vmatpush1.msra.mxu0 0.0
        %2918 = vmatprep.subr.mxu0 0.0
        %2919 = vmatpush1.msra.mxu0 0.0
        %2920 = vmatprep.subr.mxu0 0.0
        %2921 = vmatpush1.msra.mxu0 0.0
        %2922 = vmatprep.subr.mxu0 0.0
        %2923 = vmatpush1.msra.mxu0 0.0
        %2924 = vmatprep.subr.mxu0 0.0
        %2925 = vmatpush1.msra.mxu0 0.0
        %2926 = vmatprep.subr.mxu0 0.0
        %2927 = vmatpush1.msra.mxu0 0.0
        %2928 = vmatprep.subr.mxu0 0.0
        %2929 = vmatpush1.msra.mxu0 0.0
        %2930 = vmatprep.subr.mxu0 0.0
        %2931 = vmatpush1.msra.mxu0 0.0
        %2932 = vmatprep.subr.mxu0 0.0
        %2933 = vmatpush1.msra.mxu0 0.0
        %2934 = vmatprep.mubr.f32.mxu0 0.0
        %2935 = vmatmul.mubr.f32.gmra.mrb[0].mxu0 %v2868
        %v2936 = vpop.f32.mrb[0].mxu0
        %v2937 = vadd.f32 0.0, %v2936
        %v2938 = vpop.f32.mrb[0].mxu0
        %2939 = vdwg.mxu0
        %2941 = vrot.lane.b32.xlu0 %v2937, 64
        %v2942 = vpop.permute.xlu0 %2941
        %v2944 = vsel %vm1188, %v2937, %v2942
        %v2945 = vadd.f32 %v2867, %v2944
        %v2946 = vxor.u32 %v2945, 2147483648
        %v2947 = vmul.f32 %v2946, 1.442695
        %v2948 = vpow.pop %v2947
        %v2949 = vadd.f32 %v2948, 1.0
        %v2950 = vrcp.pop %v2949
        %v2951 = vmul.f32 1.0, %v2950
        %v2952 = vtanh.pop %v2945
        %v2953 = vmul.f32 %v2951, %v2850
        %2955 = vrot.lane.b32.xlu0 %v2952, 80
        %v2956 = vpop.permute.xlu0 %2955
        %v2958 = vmul.f32 %v2951, %v2956
        %2960 = vrot.lane.b32.xlu0 %v2958, 16
        %v2961 = vpop.permute.xlu0 %2960
        %v2963 = vadd.f32 %v2953, %v2961
        %v2964 = vtanh.pop %v2963
        %2966 = vrot.lane.b32.xlu0 %v2964, 16
        %v2967 = vpop.permute.xlu0 %2966
        %v2969 = vmul.f32 %v2951, %v2967
        %v2970 = vsel %vm1105, 14, 1
        %vm2971 = vcmp.lt.s32.totalorder %v2970, %v712
        %v2972 = vsel %vm2971, 1, 0
        %v2973 = vcvt.s32.f32 %v2972
        %v2974 = vmul.f32 %v2969, %v2973
        %v2975 = vmul.f32 %v2963, %v2973
        %2977 = vrot.lane.b32.xlu0 %v2974, 96
        %v2978 = vpop.permute.xlu0 %2977
        %2980 = vst.msk [vmem:[#allocation3 + $0xe] sm:$0x1] %vm549, %v2978
        %2981 = vrot.lane.b32.xlu0 %v2974, 112
        %v2982 = vpop.permute.xlu0 %2981
        %2984 = vst.msk [vmem:[#allocation3] sm:$0x2] %vm1233, %v2982
        %v2985 = vld [vmem:[#allocation2 + $0xf] sm:$0x1]
        %v2986 = vld [vmem:[#allocation2] sm:$0x1]
        %v2988 = vrot.slane %v2986, 7
        %2989 = vrot.lane.b32.xlu0 %v2988, 64
        %v2990 = vpop.permute.xlu0 %2989
        %v2992 = vsel %vm553, %v2985, %v2990
        %v2993 = vsel %vm706, %v2978, 0
        %2995 = vmatprep.subr.mxu0 0.0
        %2996 = vmatpush1.msra.mxu0 %v1103
        %2997 = vmatprep.subr.mxu0 0.0
        %2998 = vmatpush1.msra.mxu0 %v1104
        %2999 = vmatprep.subr.mxu0 0.0
        %3000 = vmatpush1.msra.mxu0 0.0
        %3001 = vmatprep.subr.mxu0 0.0
        %3002 = vmatpush1.msra.mxu0 0.0
        %3003 = vmatprep.subr.mxu0 0.0
        %3004 = vmatpush1.msra.mxu0 0.0
        %3005 = vmatprep.subr.mxu0 0.0
        %3006 = vmatpush1.msra.mxu0 0.0
        %3007 = vmatprep.subr.mxu0 0.0
        %3008 = vmatpush1.msra.mxu0 0.0
        %3009 = vmatprep.subr.mxu0 0.0
        %3010 = vmatpush1.msra.mxu0 0.0
        %3011 = vmatprep.subr.mxu0 0.0
        %3012 = vmatpush1.msra.mxu0 0.0
        %3013 = vmatprep.subr.mxu0 0.0
        %3014 = vmatpush1.msra.mxu0 0.0
        %3015 = vmatprep.subr.mxu0 0.0
        %3016 = vmatpush1.msra.mxu0 0.0
        %3017 = vmatprep.subr.mxu0 0.0
        %3018 = vmatpush1.msra.mxu0 0.0
        %3019 = vmatprep.subr.mxu0 0.0
        %3020 = vmatpush1.msra.mxu0 0.0
        %3021 = vmatprep.subr.mxu0 0.0
        %3022 = vmatpush1.msra.mxu0 0.0
        %3023 = vmatprep.subr.mxu0 0.0
        %3024 = vmatpush1.msra.mxu0 0.0
        %3025 = vmatprep.subr.mxu0 0.0
        %3026 = vmatpush1.msra.mxu0 0.0
        %3027 = vmatprep.subr.mxu0 0.0
        %3028 = vmatpush1.msra.mxu0 0.0
        %3029 = vmatprep.subr.mxu0 0.0
        %3030 = vmatpush1.msra.mxu0 0.0
        %3031 = vmatprep.subr.mxu0 0.0
        %3032 = vmatpush1.msra.mxu0 0.0
        %3033 = vmatprep.subr.mxu0 0.0
        %3034 = vmatpush1.msra.mxu0 0.0
        %3035 = vmatprep.subr.mxu0 0.0
        %3036 = vmatpush1.msra.mxu0 0.0
        %3037 = vmatprep.subr.mxu0 0.0
        %3038 = vmatpush1.msra.mxu0 0.0
        %3039 = vmatprep.subr.mxu0 0.0
        %3040 = vmatpush1.msra.mxu0 0.0
        %3041 = vmatprep.subr.mxu0 0.0
        %3042 = vmatpush1.msra.mxu0 0.0
        %3043 = vmatprep.subr.mxu0 0.0
        %3044 = vmatpush1.msra.mxu0 0.0
        %3045 = vmatprep.subr.mxu0 0.0
        %3046 = vmatpush1.msra.mxu0 0.0
        %3047 = vmatprep.subr.mxu0 0.0
        %3048 = vmatpush1.msra.mxu0 0.0
        %3049 = vmatprep.subr.mxu0 0.0
        %3050 = vmatpush1.msra.mxu0 0.0
        %3051 = vmatprep.subr.mxu0 0.0
        %3052 = vmatpush1.msra.mxu0 0.0
        %3053 = vmatprep.subr.mxu0 0.0
        %3054 = vmatpush1.msra.mxu0 0.0
        %3055 = vmatprep.subr.mxu0 0.0
        %3056 = vmatpush1.msra.mxu0 0.0
        %3057 = vmatprep.subr.mxu0 0.0
        %3058 = vmatpush1.msra.mxu0 0.0
        %3059 = vmatprep.mubr.f32.mxu0 0.0
        %3060 = vmatmul.mubr.f32.gmra.mrb[0].mxu0 %v2993
        %v3061 = vpop.f32.mrb[0].mxu0
        %v3062 = vadd.f32 0.0, %v3061
        %v3063 = vpop.f32.mrb[0].mxu0
        %3064 = vdwg.mxu0
        %3066 = vrot.lane.b32.xlu0 %v3062, 64
        %v3067 = vpop.permute.xlu0 %3066
        %v3069 = vsel %vm1188, %v3062, %v3067
        %v3070 = vadd.f32 %v2992, %v3069
        %v3071 = vxor.u32 %v3070, 2147483648
        %v3072 = vmul.f32 %v3071, 1.442695
        %v3073 = vpow.pop %v3072
        %v3074 = vadd.f32 %v3073, 1.0
        %v3075 = vrcp.pop %v3074
        %v3076 = vmul.f32 1.0, %v3075
        %v3077 = vtanh.pop %v3070
        %v3078 = vmul.f32 %v3076, %v2975
        %3080 = vrot.lane.b32.xlu0 %v3077, 80
        %v3081 = vpop.permute.xlu0 %3080
        %v3083 = vmul.f32 %v3076, %v3081
        %3085 = vrot.lane.b32.xlu0 %v3083, 16
        %v3086 = vpop.permute.xlu0 %3085
        %v3088 = vadd.f32 %v3078, %v3086
        %v3089 = vtanh.pop %v3088
        %3091 = vrot.lane.b32.xlu0 %v3089, 16
        %v3092 = vpop.permute.xlu0 %3091
        %v3094 = vmul.f32 %v3076, %v3092
        %v3095 = vsel %vm1105, 15, 0
        %vm3096 = vcmp.lt.s32.totalorder %v3095, %v712
        %v3097 = vsel %vm3096, 1, 0
        %v3098 = vcvt.s32.f32 %v3097
        %v3099 = vmul.f32 %v3094, %v3098
        %3101 = vrot.lane.b32.xlu0 %v3099, 96
        %v3102 = vpop.permute.xlu0 %3101
        %3104 = vst.msk [vmem:[#allocation3 + $0xf] sm:$0x1] %vm549, %v3102
        %3105 = vrot.lane.b32.xlu0 %v3099, 112
        %v3106 = vpop.permute.xlu0 %3105
        %3108 = vst.msk [vmem:[#allocation3 - $0x1] sm:$0x2] %vm1233, %v3106
        %v3109 = vld [vmem:[#allocation3] sm:$0xff]
        %v3110 = vld [vmem:[#allocation3 + $0x8] sm:$0xff]
        %v3111 = vld [vmem:[%s13] sm:$0xff]
        %v3112 = vld [vmem:[%s13 + $0x8] sm:$0xff]
        %v3113 = vld [vmem:[%s13 + $0x10] sm:$0xff]
        %v3114 = vld [vmem:[%s13 + $0x18] sm:$0xff]
        %v3115 = vld [vmem:[#allocation6] sm:$0x1]
        %v3117 = vlaneseq
        %v3118 = vshrl.u32 %v3117, 7
        %v3119 = vsub.s32 0, %v3118
        %v3120 = vrot.slane %v3115, %v3119
        %v3123 = vsel %vm755, %v3109, 0
        %v3126 = vsel %vm755, %v3110, 0
        %3128 = vmatprep.subr.mxu0 0.0
        %3129 = vmatpush1.msra.mxu0 %v3111
        %3130 = vmatprep.subr.mxu0 0.0
        %3131 = vmatpush1.msra.mxu0 %v3112
        %3132 = vmatprep.subr.mxu0 0.0
        %3133 = vmatpush1.msra.mxu0 %v3113
        %3134 = vmatprep.subr.mxu0 0.0
        %3135 = vmatpush1.msra.mxu0 %v3114
        %3136 = vmatprep.subr.mxu0 0.0
        %3137 = vmatpush1.msra.mxu0 0.0
        %3138 = vmatprep.subr.mxu0 0.0
        %3139 = vmatpush1.msra.mxu0 0.0
        %3140 = vmatprep.subr.mxu0 0.0
        %3141 = vmatpush1.msra.mxu0 0.0
        %3142 = vmatprep.subr.mxu0 0.0
        %3143 = vmatpush1.msra.mxu0 0.0
        %3144 = vmatprep.subr.mxu0 0.0
        %3145 = vmatpush1.msra.mxu0 0.0
        %3146 = vmatprep.subr.mxu0 0.0
        %3147 = vmatpush1.msra.mxu0 0.0
        %3148 = vmatprep.subr.mxu0 0.0
        %3149 = vmatpush1.msra.mxu0 0.0
        %3150 = vmatprep.subr.mxu0 0.0
        %3151 = vmatpush1.msra.mxu0 0.0
        %3152 = vmatprep.subr.mxu0 0.0
        %3153 = vmatpush1.msra.mxu0 0.0
        %3154 = vmatprep.subr.mxu0 0.0
        %3155 = vmatpush1.msra.mxu0 0.0
        %3156 = vmatprep.subr.mxu0 0.0
        %3157 = vmatpush1.msra.mxu0 0.0
        %3158 = vmatprep.subr.mxu0 0.0
        %3159 = vmatpush1.msra.mxu0 0.0
        %3160 = vmatprep.subr.mxu0 0.0
        %3161 = vmatpush1.msra.mxu0 0.0
        %3162 = vmatprep.subr.mxu0 0.0
        %3163 = vmatpush1.msra.mxu0 0.0
        %3164 = vmatprep.subr.mxu0 0.0
        %3165 = vmatpush1.msra.mxu0 0.0
        %3166 = vmatprep.subr.mxu0 0.0
        %3167 = vmatpush1.msra.mxu0 0.0
        %3168 = vmatprep.subr.mxu0 0.0
        %3169 = vmatpush1.msra.mxu0 0.0
        %3170 = vmatprep.subr.mxu0 0.0
        %3171 = vmatpush1.msra.mxu0 0.0
        %3172 = vmatprep.subr.mxu0 0.0
        %3173 = vmatpush1.msra.mxu0 0.0
        %3174 = vmatprep.subr.mxu0 0.0
        %3175 = vmatpush1.msra.mxu0 0.0
        %3176 = vmatprep.subr.mxu0 0.0
        %3177 = vmatpush1.msra.mxu0 0.0
        %3178 = vmatprep.subr.mxu0 0.0
        %3179 = vmatpush1.msra.mxu0 0.0
        %3180 = vmatprep.subr.mxu0 0.0
        %3181 = vmatpush1.msra.mxu0 0.0
        %3182 = vmatprep.subr.mxu0 0.0
        %3183 = vmatpush1.msra.mxu0 0.0
        %3184 = vmatprep.subr.mxu0 0.0
        %3185 = vmatpush1.msra.mxu0 0.0
        %3186 = vmatprep.subr.mxu0 0.0
        %3187 = vmatpush1.msra.mxu0 0.0
        %3188 = vmatprep.subr.mxu0 0.0
        %3189 = vmatpush1.msra.mxu0 0.0
        %3190 = vmatprep.subr.mxu0 0.0
        %3191 = vmatpush1.msra.mxu0 0.0
        %3192 = vmatprep.mubr.f32.mxu0 0.0
        %3193 = vmatmul.mubr.f32.gmra.mrb[0].mxu0 %v3123
        %v3194 = vpop.f32.mrb[0].mxu0
        %v3195 = vadd.f32 %v3120, %v3194
        %v3196 = vpop.f32.mrb[0].mxu0
        %3197 = vmatprep.mubr.f32.mxu0 0.0
        %3198 = vmatmul.mubr.f32.gmra.mrb[0].mxu0 %v3126
        %v3199 = vpop.f32.mrb[0].mxu0
        %v3200 = vadd.f32 %v3120, %v3199
        %v3201 = vpop.f32.mrb[0].mxu0
        %3202 = vdwg.mxu0
        %vm3203 = vcmask 7168
        %3204 = vst.msk [vmem:[%s541] sm:$0xff] %vm3203, %v3195
        %3205 = vst.msk [vmem:[%s541 + $0x8] sm:$0xff] %vm3203, %v3200
        %p3206 = scmp.lt.s32.totalorder %s39, 1
        %s3207 = scalar_select %p3206, %s39, 1
        %s3208 = smul.addr %s3207, 2
        %s3209 = smul.addr %s3208, 8
        %s3210 = scalar_lea.vmem %s15, %s3209
        %s3211 = sand.u32 %s382, 1
        %s3212 = scalar_lea.sflag [#allocation8], %s3211
        %s3213 = sand.u32 %s382, 1
        %s3214 = scalar_lea.vmem [#allocation7], %s3213
        // Predicated region
        $region77: #{dap_forward.1} parent=75 // pred_check
          %p3215 = pneg %p366
        $region78: #{dap_forward.1} parent=75 // pred_check_branch
          %3217 = sbr.rel (%p3215) target = $region80
        $region79: #{dap_forward.1} parent=75 // pred_region
          _
        $region80: #{dap_forward.1} parent=75 // pred_fallthru
          _
        // Predicated region
        $region81: #{dap_forward.1} parent=75 // pred_check
          %p3218 = pneg %p392
        $region82: #{dap_forward.1} parent=75 // pred_check_branch
          %3220 = sbr.rel (%p3218) target = $region84
        $region83: #{dap_forward.1} parent=75 // pred_region
          %s3222 = ssub.s32 16, 16
          %3223 = vsyncadd %s3212, %s3222
          %s3224 = smul.addr %s39, 16
          %s3225 = scalar_lea.hbm %s16, %s3224
          %s3227 = sshll.u32 %s3214, 4
          %s3228 = int_to_ptr.vmem [resolvable:$true] %s3227
          %3230 = dma.vmem_to_hbm [thread:$0]  %s3228, 16, %s3225, %s3212
        $region84: #{dap_forward.1} parent=75 // pred_fallthru
          _
      $region76: #{dap_forward.1} parent=5 // pred_fallthru
        _
      %p3231 = scmp.le.s32.totalorder 2, %s34
      // Predicated region
      $region85: #{dap_forward.1} parent=5 // pred_check
        %p3232 = pneg %p3231
      $region86: #{dap_forward.1} parent=5 // pred_check_branch
        %3234 = sbr.rel (%p3232) target = $region88
      $region87: #{dap_forward.1} parent=5 // pred_region
        %s3235 = ssub.s32 %s34, 2
        // Predicated region
        $region89: #{dap_forward.1} parent=87 // pred_check
          %p3236 = pneg %p372
        $region90: #{dap_forward.1} parent=87 // pred_check_branch
          %3238 = sbr.rel (%p3236) target = $region92
        $region91: #{dap_forward.1} parent=87 // pred_region
          %p3239 = scmp.lt.s32.totalorder %s40, 1
          %s3240 = scalar_select %p3239, %s40, 1
          %s3241 = smul.addr %s3240, 2
          %s3242 = smul.addr %s3241, 8
          %s3243 = scalar_lea.vmem %s15, %s3242
        $region92: #{dap_forward.1} parent=87 // pred_fallthru
          _
        // Predicated region
        $region93: #{dap_forward.1} parent=87 // pred_check
          %p3244 = pneg %p398
        $region94: #{dap_forward.1} parent=87 // pred_check_branch
          %3246 = sbr.rel (%p3244) target = $region96
        $region95: #{dap_forward.1} parent=87 // pred_region
          %s3247 = sand.u32 %s383, 1
          %s3248 = scalar_lea.sflag [#allocation8], %s3247
          %s3249 = sand.u32 %s383, 1
          %s3250 = scalar_lea.vmem [#allocation7], %s3249
          %3251 = dma.done %s3248, 16
        $region96: #{dap_forward.1} parent=87 // pred_fallthru
          _
      $region88: #{dap_forward.1} parent=5 // pred_fallthru
        _
    $region6: #{dap_forward.1} parent=1 // loop_footer
      %s38 = sadd.s32 1, %s34
    $region7: #{dap_forward.1} parent=1 // loop_footer_branch
      %33 = sbr.rel target = $region3
    $region8: #{dap_forward.1} parent=1 // loop_exit
      _
    %3252 = vsyncpa [#allocation8], 1
    %s3253 = scalar_lea.sflag [#allocation8], 1
    %3254 = vsyncpa %s3253, 1

</llo_original>
